<compile_context>
chip_gen: v7x
topology: tpu7x:2x2x1
jax: 0.10.0
libtpu: 0.0.40
codegen_flags: <defaults>
</compile_context>

<pallas_src>
import functools

import jax
import jax.numpy as jnp
from jax import lax
from jax.experimental import pallas as pl
from jax.experimental.pallas import tpu as pltpu


def _round_up(a, b):
    return ((a + b - 1) // b) * b


def _pick_vmem_limit():
    """Per-generation VMEM limit: ~3/4 of physical, capped at 100 MiB."""
    try:
        cap = pltpu.get_tpu_info().vmem_capacity_bytes
    except Exception:
        cap = 64 * 1024 * 1024
    return max(32 * 1024 * 1024, min(int(cap) * 3 // 4, 100 * 1024 * 1024))


def gine_kernel(xg_ref, xr_ref, ee_ref, src_ref, dst_ref,
                w1_ref, b1_ref, w2_ref, b2_ref,
                out_ref, acc_ref, colid_ref, rowid_ref):
    j = pl.program_id(0)                       # edge tile (reduction axis)
    te = ee_ref.shape[0]
    n_pad = xg_ref.shape[0]

    @pl.when(j == 0)
    def _init():
        # Residual folded into the accumulator init:  acc = x  (f32).
        acc_ref[...] = xr_ref[...]
        # Loop-invariant node-id iotas, cached once (VALU -> vld shift on later steps).
        colid_ref[...] = lax.broadcasted_iota(jnp.int32, (te, n_pad), 1)
        rowid_ref[...] = lax.broadcasted_iota(jnp.int32, (n_pad, te), 0)

    # ---------------- edge stage (bf16 MXU operands, f32 accumulation) ----------------
    # Gather x[src[e]]: 0/1 matrix built in-registers (exact in bf16).
    src = src_ref[...]                                                  # [te, 1] i32
    g_src = (colid_ref[...] == src).astype(jnp.bfloat16)                # [te, n_pad]
    x_src = jnp.dot(g_src, xg_ref[...],
                    preferred_element_type=jnp.float32)                 # [te, Din] f32

    # edge embedding tile was precomputed in the wrapper (lin_edge hoisted out).
    msg = jnp.maximum(x_src + ee_ref[...], 0.0).astype(jnp.bfloat16)    # [te, Din]

    # Scatter-sum over all nodes (padded edges carry dst = n_pad -> match nothing).
    dst = dst_ref[...]                                                  # [1, te] i32
    g_dst_t = (rowid_ref[...] == dst).astype(jnp.bfloat16)              # [n_pad, te]
    acc_ref[...] += jnp.dot(g_dst_t, msg,
                            preferred_element_type=jnp.float32)         # [n_pad, Din]

    # ---------------- node stage: GIN MLP, runs ONCE at the last edge tile ------------
    @pl.when(j == pl.num_programs(0) - 1)
    def _finalize():
        h = acc_ref[...].astype(jnp.bfloat16)                           # (1+eps)*x + agg
        h1 = jnp.maximum(
            jnp.dot(h, w1_ref[...], preferred_element_type=jnp.float32)
            + b1_ref[...], 0.0)                                         # [n_pad, Dout]
        out = jnp.dot(h1.astype(jnp.bfloat16), w2_ref[...],
                      preferred_element_type=jnp.float32) + b2_ref[...] # [n_pad, dp]
        out_ref[...] = out.astype(out_ref.dtype)


@functools.partial(jax.jit, static_argnames=("te",))
def gine_conv_forward(x, edge_index, edge_attr, params, *, te=512):
    """x: [N, Din] f32, edge_index: [2, E] int, edge_attr: [E, De] f32."""
    assert te % 128 == 0
    N, Din = x.shape
    E, De = edge_attr.shape
    Dout = params["w1"].shape[1]

    n_pad = _round_up(N, 128)          # lane dim of the in-register one-hots: keep 128-aligned
    e_pad = _round_up(E, te)
    dp = _round_up(Dout, 128)          # lane-dense (unmasked-store) output width
    eb = e_pad // te

    src = edge_index[0].astype(jnp.int32)
    dst = edge_index[1].astype(jnp.int32)

    # Node features: bf16 copy for the MXU gather, f32 copy for the residual / acc init.
    x_f32 = jnp.zeros((n_pad, Din), jnp.float32).at[:N].set(x.astype(jnp.float32))
    x_bf16 = x_f32.astype(jnp.bfloat16)

    # lin_edge hoisted: one large XLA matmul.  Padded edges get a zero embedding,
    # src=0 (gather x[0]) and dst=n_pad (scatter nowhere) -> contribute nothing.
    e_emb = (edge_attr.astype(jnp.float32) @ params["we"].astype(jnp.float32)
             + params["be"].astype(jnp.float32))
    ee_pad = jnp.zeros((e_pad, Din), jnp.float32).at[:E].set(e_emb)

    src_pad = jnp.zeros((e_pad, 1), jnp.int32).at[:E, 0].set(src)
    dst_pad = jnp.full((1, e_pad), n_pad, jnp.int32).at[0, :E].set(dst)

    # Node-stage MLP weights: W1 output kept at Dout (no wasted K on the 2nd matmul),
    # only W2's output padded to dp for the lane-dense store.  bf16 weights, f32 biases.
    w1 = params["w1"].astype(jnp.bfloat16)                                   # [Din, Dout]
    b1 = params["b1"].astype(jnp.float32)[None, :]                           # [1, Dout]
    w2_pad = (jnp.zeros((Dout, dp), jnp.float32)
              .at[:, :Dout].set(params["w2"].astype(jnp.float32))
              .astype(jnp.bfloat16))                                         # [Dout, dp]
    b2_pad = jnp.zeros((1, dp), jnp.float32).at[0, :Dout].set(params["b2"])  # [1, dp]

    full = lambda shape: pl.BlockSpec(shape, lambda j: (0, 0))

    flops = (eb * (2 * te * n_pad * Din + 2 * n_pad * te * Din)
             + 2 * n_pad * Din * Dout + 2 * n_pad * Dout * dp)
    bytes_accessed = (x_bf16.nbytes + x_f32.nbytes + ee_pad.nbytes
                      + src_pad.nbytes + dst_pad.nbytes
                      + w1.nbytes + b1.nbytes + w2_pad.nbytes + b2_pad.nbytes
                      + n_pad * dp * 4)

    out = pl.pallas_call(
        gine_kernel,
        out_shape=jax.ShapeDtypeStruct((n_pad, dp), jnp.float32),
        grid_spec=pltpu.PrefetchScalarGridSpec(
            num_scalar_prefetch=0,
            grid=(eb,),
            in_specs=[
                full((n_pad, Din)),                          # x (bf16 gather copy, resident)
                full((n_pad, Din)),                          # x (f32 residual, resident)
                pl.BlockSpec((te, Din), lambda j: (j, 0)),   # precomputed edge embeddings
                pl.BlockSpec((te, 1), lambda j: (j, 0)),     # src indices
                pl.BlockSpec((1, te), lambda j: (0, j)),     # dst indices
                full((Din, Dout)),                           # W1
                full((1, Dout)),                             # b1
                full((Dout, dp)),                            # W2 (lane-padded output)
                full((1, dp)),                               # b2
            ],
            out_specs=pl.BlockSpec((n_pad, dp), lambda j: (0, 0)),
            scratch_shapes=[
                pltpu.VMEM((n_pad, Din), jnp.float32),       # accumulator (x + agg)
                pltpu.VMEM((te, n_pad), jnp.int32),          # cached gather iota
                pltpu.VMEM((n_pad, te), jnp.int32),          # cached scatter iota
            ],
        ),
        compiler_params=pltpu.CompilerParams(
            dimension_semantics=("arbitrary",),
            vmem_limit_bytes=_pick_vmem_limit()),
        cost_estimate=pl.CostEstimate(
            flops=flops, transcendentals=0, bytes_accessed=bytes_accessed),
    )(x_bf16, x_f32, ee_pad, src_pad, dst_pad, w1, b1, w2_pad, b2_pad)

    return out[:N, :Dout]


def reference_forward(x, edge_index, edge_attr, params):
    """Plain-JAX f32 reference of PyG GINEConv(gin_nn, edge_dim=De), eps=0."""
    src, dst = edge_index[0], edge_index[1]
    e_emb = edge_attr @ params["we"] + params["be"]
    msg = jnp.maximum(x[src] + e_emb, 0.0)
    agg = jax.ops.segment_sum(msg, dst, num_segments=x.shape[0])
    h = x + agg
    h1 = jnp.maximum(h @ params["w1"] + params["b1"], 0.0)
    return h1 @ params["w2"] + params["b2"]


if __name__ == "__main__":
    # Small deterministic synthetic graph (exercises multiple edge tiles: e_pad/te = 3).
    N, E = 300, 1200
    DIN, DOUT, DE = 32, 32, 16

    key = jax.random.PRNGKey(0)
    kx, ke, ki, kw1, kw2, kwe, kb = jax.random.split(key, 7)

    x = jax.random.normal(kx, (N, DIN), dtype=jnp.float32)
    edge_attr = jax.random.normal(ke, (E, DE), dtype=jnp.float32)
    edge_index = jax.random.randint(ki, (2, E), 0, N, dtype=jnp.int32)

    kb1, kb2, kbe = jax.random.split(kb, 3)
    params = {
        "we": jax.random.normal(kwe, (DE, DIN), dtype=jnp.float32) * 0.1,
        "be": jax.random.normal(kbe, (DIN,), dtype=jnp.float32) * 0.1,
        "w1": jax.random.normal(kw1, (DIN, DOUT), dtype=jnp.float32) * 0.1,
        "b1": jax.random.normal(kb1, (DOUT,), dtype=jnp.float32) * 0.1,
        "w2": jax.random.normal(kw2, (DOUT, DOUT), dtype=jnp.float32) * 0.1,
        "b2": jax.random.normal(kb2, (DOUT,), dtype=jnp.float32) * 0.1,
    }

    out = gine_conv_forward(x, edge_index, edge_attr, params)
    out = jax.block_until_ready(out)

    ref = reference_forward(x, edge_index, edge_attr, params)
    assert out.shape == (N, DOUT) and out.dtype == jnp.float32
    max_err = jnp.max(jnp.abs(out - ref))
    # bf16 edge-stage + bf16 MLP operands (f32 accumulation) => ~1e-2 relative error vs f32 ref.
    assert jnp.allclose(out, ref, atol=1e-1, rtol=5e-2), \
        f"mismatch vs. reference, max abs err = {max_err}"

    print("KERNEL_OK")
</pallas_src>

<mosaic_0001>
module attributes {stable_mosaic.version = 11 : i64} {
  func.func @gine_kernel(%arg0: i32, %arg1: memref<384x32xbf16, #tpu.memory_space<vmem>>, %arg2: memref<384x32xf32, #tpu.memory_space<vmem>>, %arg3: memref<512x32xf32, #tpu.memory_space<vmem>>, %arg4: memref<512x1xi32, #tpu.memory_space<vmem>>, %arg5: memref<1x512xi32, #tpu.memory_space<vmem>>, %arg6: memref<32x32xbf16, #tpu.memory_space<vmem>>, %arg7: memref<1x32xf32, #tpu.memory_space<vmem>>, %arg8: memref<32x128xbf16, #tpu.memory_space<vmem>>, %arg9: memref<1x128xf32, #tpu.memory_space<vmem>>, %arg10: memref<384x128xf32, #tpu.memory_space<vmem>>, %arg11: memref<384x32xf32, #tpu.memory_space<vmem>>, %arg12: memref<512x384xi32, #tpu.memory_space<vmem>>, %arg13: memref<384x512xi32, #tpu.memory_space<vmem>>) attributes {dimension_semantics = [#tpu.dimension_semantics<arbitrary>], iteration_bounds = array<i64: 3>, scalar_prefetch = 0 : i64, scratch_operands = 3 : i64, tpu.core_type = #tpu.core_type<tc>, window_params = [{pipeline_mode = #tpu.pipeline_mode<synchronous>, transform_indices = @transform_0, window_bounds = array<i64: 384, 32>}, {pipeline_mode = #tpu.pipeline_mode<synchronous>, transform_indices = @transform_1, window_bounds = array<i64: 384, 32>}, {transform_indices = @transform_2, window_bounds = array<i64: 512, 32>}, {transform_indices = @transform_3, window_bounds = array<i64: 512, 1>}, {transform_indices = @transform_4, window_bounds = array<i64: 1, 512>}, {pipeline_mode = #tpu.pipeline_mode<synchronous>, transform_indices = @transform_5, window_bounds = array<i64: 32, 32>}, {pipeline_mode = #tpu.pipeline_mode<synchronous>, transform_indices = @transform_6, window_bounds = array<i64: 1, 32>}, {pipeline_mode = #tpu.pipeline_mode<synchronous>, transform_indices = @transform_7, window_bounds = array<i64: 32, 128>}, {pipeline_mode = #tpu.pipeline_mode<synchronous>, transform_indices = @transform_8, window_bounds = array<i64: 1, 128>}, {pipeline_mode = #tpu.pipeline_mode<synchronous>, transform_indices = @transform_9, window_bounds = array<i64: 384, 128>}]} {
    %c0_i32 = arith.constant 0 : i32
    %0 = arith.cmpi eq, %arg0, %c0_i32 : i32
    %1 = arith.extui %0 : i1 to i32
    %c0_i32_0 = arith.constant 0 : i32
    %2 = arith.cmpi ne, %1, %c0_i32_0 : i32
    scf.if %2 {
      %c0_19 = arith.constant 0 : index
      %c0_20 = arith.constant 0 : index
      %31 = vector.load %arg2[%c0_19, %c0_20] : memref<384x32xf32, #tpu.memory_space<vmem>>, vector<384x32xf32>
      %c0_21 = arith.constant 0 : index
      %c0_22 = arith.constant 0 : index
      %32 = vector.load %arg11[%c0_21, %c0_22] : memref<384x32xf32, #tpu.memory_space<vmem>>, vector<384x32xf32>
      tpu.vector_store %arg11[%c0_21, %c0_22], %31 {strides = array<i32>} : memref<384x32xf32, #tpu.memory_space<vmem>>, vector<384x32xf32>,
      %33 = tpu.iota {dimensions = array<i32: 1>} : vector<512x384xi32>
      %c0_23 = arith.constant 0 : index
      %c0_24 = arith.constant 0 : index
      %34 = vector.load %arg12[%c0_23, %c0_24] : memref<512x384xi32, #tpu.memory_space<vmem>>, vector<512x384xi32>
      tpu.vector_store %arg12[%c0_23, %c0_24], %33 {strides = array<i32>} : memref<512x384xi32, #tpu.memory_space<vmem>>, vector<512x384xi32>,
      %35 = tpu.iota {dimensions = array<i32: 0>} : vector<384x512xi32>
      %c0_25 = arith.constant 0 : index
      %c0_26 = arith.constant 0 : index
      %36 = vector.load %arg13[%c0_25, %c0_26] : memref<384x512xi32, #tpu.memory_space<vmem>>, vector<384x512xi32>
      tpu.vector_store %arg13[%c0_25, %c0_26], %35 {strides = array<i32>} : memref<384x512xi32, #tpu.memory_space<vmem>>, vector<384x512xi32>,
    } else {
    }
    %c0 = arith.constant 0 : index
    %c0_1 = arith.constant 0 : index
    %3 = vector.load %arg4[%c0, %c0_1] : memref<512x1xi32, #tpu.memory_space<vmem>>, vector<512x1xi32>
    %c0_2 = arith.constant 0 : index
    %c0_3 = arith.constant 0 : index
    %4 = vector.load %arg12[%c0_2, %c0_3] : memref<512x384xi32, #tpu.memory_space<vmem>>, vector<512x384xi32>
    %5 = vector.broadcast %3 : vector<512x1xi32> to vector<512x384xi32>
    %6 = arith.cmpi eq, %4, %5 : vector<512x384xi32>
    %7 = arith.extui %6 : vector<512x384xi1> to vector<512x384xi32>
    %8 = arith.sitofp %7 : vector<512x384xi32> to vector<512x384xf32>
    %9 = arith.truncf %8 : vector<512x384xf32> to vector<512x384xbf16>
    %c0_4 = arith.constant 0 : index
    %c0_5 = arith.constant 0 : index
    %10 = vector.load %arg1[%c0_4, %c0_5] : memref<384x32xbf16, #tpu.memory_space<vmem>>, vector<384x32xbf16>
    %cst = arith.constant dense<0.000000e+00> : vector<512x32xf32>
    %11 = tpu.matmul %9, %10, %cst {dimension_numbers = #tpu.dot_dimension_numbers<[1], [0], [0], [1], [0, 0, 1, 1], [], []>} : vector<512x384xbf16>, vector<384x32xbf16>, vector<512x32xf32> -> vector<512x32xf32>
    %c0_6 = arith.constant 0 : index
    %c0_7 = arith.constant 0 : index
    %12 = vector.load %arg3[%c0_6, %c0_7] : memref<512x32xf32, #tpu.memory_space<vmem>>, vector<512x32xf32>
    %13 = arith.addf %11, %12 : vector<512x32xf32>
    %cst_8 = arith.constant 0.000000e+00 : f32
    %14 = vector.broadcast %cst_8 : f32 to vector<512x32xf32>
    %15 = arith.maximumf %13, %14 : vector<512x32xf32>
    %16 = arith.truncf %15 : vector<512x32xf32> to vector<512x32xbf16>
    %c0_9 = arith.constant 0 : index
    %c0_10 = arith.constant 0 : index
    %17 = vector.load %arg5[%c0_9, %c0_10] : memref<1x512xi32, #tpu.memory_space<vmem>>, vector<1x512xi32>
    %c0_11 = arith.constant 0 : index
    %c0_12 = arith.constant 0 : index
    %18 = vector.load %arg13[%c0_11, %c0_12] : memref<384x512xi32, #tpu.memory_space<vmem>>, vector<384x512xi32>
    %19 = vector.broadcast %17 : vector<1x512xi32> to vector<384x512xi32>
    %20 = arith.cmpi eq, %18, %19 : vector<384x512xi32>
    %21 = arith.extui %20 : vector<384x512xi1> to vector<384x512xi32>
    %22 = arith.sitofp %21 : vector<384x512xi32> to vector<384x512xf32>
    %23 = arith.truncf %22 : vector<384x512xf32> to vector<384x512xbf16>
    %c0_13 = arith.constant 0 : index
    %c0_14 = arith.constant 0 : index
    %24 = vector.load %arg11[%c0_13, %c0_14] : memref<384x32xf32, #tpu.memory_space<vmem>>, vector<384x32xf32>
    %cst_15 = arith.constant dense<0.000000e+00> : vector<384x32xf32>
    %25 = tpu.matmul %23, %16, %cst_15 {dimension_numbers = #tpu.dot_dimension_numbers<[1], [0], [0], [1], [0, 0, 1, 1], [], []>} : vector<384x512xbf16>, vector<512x32xbf16>, vector<384x32xf32> -> vector<384x32xf32>
    %26 = arith.addf %24, %25 : vector<384x32xf32>
    %c0_16 = arith.constant 0 : index
    %c0_17 = arith.constant 0 : index
    %27 = vector.load %arg11[%c0_16, %c0_17] : memref<384x32xf32, #tpu.memory_space<vmem>>, vector<384x32xf32>
    tpu.vector_store %arg11[%c0_16, %c0_17], %26 {strides = array<i32>} : memref<384x32xf32, #tpu.memory_space<vmem>>, vector<384x32xf32>,
    %c2_i32 = arith.constant 2 : i32
    %28 = arith.cmpi eq, %arg0, %c2_i32 : i32
    %29 = arith.extui %28 : i1 to i32
    %c0_i32_18 = arith.constant 0 : i32
    %30 = arith.cmpi ne, %29, %c0_i32_18 : i32
    scf.if %30 {
      %c0_19 = arith.constant 0 : index
      %c0_20 = arith.constant 0 : index
      %31 = vector.load %arg11[%c0_19, %c0_20] : memref<384x32xf32, #tpu.memory_space<vmem>>, vector<384x32xf32>
      %32 = arith.truncf %31 : vector<384x32xf32> to vector<384x32xbf16>
      %c0_21 = arith.constant 0 : index
      %c0_22 = arith.constant 0 : index
      %33 = vector.load %arg6[%c0_21, %c0_22] : memref<32x32xbf16, #tpu.memory_space<vmem>>, vector<32x32xbf16>
      %cst_23 = arith.constant dense<0.000000e+00> : vector<384x32xf32>
      %34 = tpu.matmul %32, %33, %cst_23 {dimension_numbers = #tpu.dot_dimension_numbers<[1], [0], [0], [1], [0, 0, 1, 1], [], []>} : vector<384x32xbf16>, vector<32x32xbf16>, vector<384x32xf32> -> vector<384x32xf32>
      %c0_24 = arith.constant 0 : index
      %c0_25 = arith.constant 0 : index
      %35 = vector.load %arg7[%c0_24, %c0_25] : memref<1x32xf32, #tpu.memory_space<vmem>>, vector<1x32xf32>
      %36 = vector.broadcast %35 : vector<1x32xf32> to vector<384x32xf32>
      %37 = arith.addf %34, %36 : vector<384x32xf32>
      %cst_26 = arith.constant 0.000000e+00 : f32
      %38 = vector.broadcast %cst_26 : f32 to vector<384x32xf32>
      %39 = arith.maximumf %37, %38 : vector<384x32xf32>
      %40 = arith.truncf %39 : vector<384x32xf32> to vector<384x32xbf16>
      %c0_27 = arith.constant 0 : index
      %c0_28 = arith.constant 0 : index
      %41 = vector.load %arg8[%c0_27, %c0_28] : memref<32x128xbf16, #tpu.memory_space<vmem>>, vector<32x128xbf16>
      %cst_29 = arith.constant dense<0.000000e+00> : vector<384x128xf32>
      %42 = tpu.matmul %40, %41, %cst_29 {dimension_numbers = #tpu.dot_dimension_numbers<[1], [0], [0], [1], [0, 0, 1, 1], [], []>} : vector<384x32xbf16>, vector<32x128xbf16>, vector<384x128xf32> -> vector<384x128xf32>
      %c0_30 = arith.constant 0 : index
      %c0_31 = arith.constant 0 : index
      %43 = vector.load %arg9[%c0_30, %c0_31] : memref<1x128xf32, #tpu.memory_space<vmem>>, vector<1x128xf32>
      %44 = vector.broadcast %43 : vector<1x128xf32> to vector<384x128xf32>
      %45 = arith.addf %42, %44 : vector<384x128xf32>
      %c0_32 = arith.constant 0 : index
      %c0_33 = arith.constant 0 : index
      %46 = vector.load %arg10[%c0_32, %c0_33] : memref<384x128xf32, #tpu.memory_space<vmem>>, vector<384x128xf32>
      tpu.vector_store %arg10[%c0_32, %c0_33], %45 {strides = array<i32>} : memref<384x128xf32, #tpu.memory_space<vmem>>, vector<384x128xf32>,
    } else {
    }
    return
  }
  func.func @transform_0(%arg0: i32) -> (i32, i32) {
    %c0_i32 = arith.constant 0 : i32
    %c0_i32_0 = arith.constant 0 : i32
    %c0_i32_1 = arith.constant 0 : i32
    return %c0_i32, %c0_i32_0 : i32, i32
  }
  func.func @transform_1(%arg0: i32) -> (i32, i32) {
    %c0_i32 = arith.constant 0 : i32
    %c0_i32_0 = arith.constant 0 : i32
    %c0_i32_1 = arith.constant 0 : i32
    return %c0_i32, %c0_i32_0 : i32, i32
  }
  func.func @transform_2(%arg0: i32) -> (i32, i32) {
    %c0_i32 = arith.constant 0 : i32
    %c0_i32_0 = arith.constant 0 : i32
    return %arg0, %c0_i32 : i32, i32
  }
  func.func @transform_3(%arg0: i32) -> (i32, i32) {
    %c0_i32 = arith.constant 0 : i32
    %c0_i32_0 = arith.constant 0 : i32
    return %arg0, %c0_i32 : i32, i32
  }
  func.func @transform_4(%arg0: i32) -> (i32, i32) {
    %c0_i32 = arith.constant 0 : i32
    %c0_i32_0 = arith.constant 0 : i32
    return %c0_i32, %arg0 : i32, i32
  }
  func.func @transform_5(%arg0: i32) -> (i32, i32) {
    %c0_i32 = arith.constant 0 : i32
    %c0_i32_0 = arith.constant 0 : i32
    %c0_i32_1 = arith.constant 0 : i32
    return %c0_i32, %c0_i32_0 : i32, i32
  }
  func.func @transform_6(%arg0: i32) -> (i32, i32) {
    %c0_i32 = arith.constant 0 : i32
    %c0_i32_0 = arith.constant 0 : i32
    %c0_i32_1 = arith.constant 0 : i32
    return %c0_i32, %c0_i32_0 : i32, i32
  }
  func.func @transform_7(%arg0: i32) -> (i32, i32) {
    %c0_i32 = arith.constant 0 : i32
    %c0_i32_0 = arith.constant 0 : i32
    %c0_i32_1 = arith.constant 0 : i32
    return %c0_i32, %c0_i32_0 : i32, i32
  }
  func.func @transform_8(%arg0: i32) -> (i32, i32) {
    %c0_i32 = arith.constant 0 : i32
    %c0_i32_0 = arith.constant 0 : i32
    %c0_i32_1 = arith.constant 0 : i32
    return %c0_i32, %c0_i32_0 : i32, i32
  }
  func.func @transform_9(%arg0: i32) -> (i32, i32) {
    %c0_i32 = arith.constant 0 : i32
    %c0_i32_0 = arith.constant 0 : i32
    %c0_i32_1 = arith.constant 0 : i32
    return %c0_i32, %c0_i32_0 : i32, i32
  }
}

</mosaic_0001>

<llo_original>
// kernel: gine_conv_forward.1
$region0: #{gine_conv_forward.1}
  #allocation0 [shape = 'u32[]', space=smem, size = 0x4, offset = 0x4, fixed_abs, tag = 'smem constant byte address 0x4 - core index']
  #allocation1 [shape = 'u32[144,128]{1,0:T(1,128)}', space=vmem, size = 0x12000, scoped, tag = 'internal scratch']
  #allocation2 [shape = 'f32[384,32]{1,0:T(8,128)}', space=vmem, size = 0x30000, scoped, tag = 'scratch operand']
  #allocation3 [shape = 's32[512,384]{1,0:T(8,128)}', space=vmem, size = 0xc0000, scoped, tag = 'scratch operand']
  #allocation4 [shape = 's32[384,512]{1,0:T(8,128)}', space=vmem, size = 0xc0000, scoped, tag = 'scratch operand']
  %s0 = inlined_call_operand.vmem [shape: bf16[384,32], index: 0, kind: input, shape index: {}]
  %s1 = inlined_call_operand.vmem [shape: f32[384,32], index: 1, kind: input, shape index: {}]
  %s2 = inlined_call_operand.vmem [shape: f32[1536,32], index: 2, kind: input, shape index: {}]
  %s3 = inlined_call_operand.vmem [shape: s32[1536,1], index: 3, kind: input, shape index: {}]
  %s4 = inlined_call_operand.vmem [shape: s32[1,1536], index: 4, kind: input, shape index: {}]
  %s5 = inlined_call_operand.vmem [shape: bf16[32,32], index: 5, kind: input, shape index: {}]
  %s6 = inlined_call_operand.vmem [shape: f32[1,32], index: 6, kind: input, shape index: {}]
  %s7 = inlined_call_operand.vmem [shape: bf16[32,128], index: 7, kind: input, shape index: {}]
  %s8 = inlined_call_operand.vmem [shape: f32[1,128], index: 8, kind: input, shape index: {}]
  %s9 = inlined_call_operand.vmem [shape: f32[384,128], index: 9, kind: output, shape index: {}]
  %s10 = sld [smem:[#allocation0]]
  $region77: #{gine_conv_forward.1} parent=0
    _
  %s12 = ssub.s32 1, %s10
  %s13 = scalar_select 0, %s12, %s10
  loop: start=0, step=1, limit=5
  $region2: #{gine_conv_forward.1} parent=0 // loop_pre_header
    _
  $region3: #{gine_conv_forward.1} parent=0 // loop_header
    %s15 = sphi 0, %s19
    %p16 = scmp.ge.s32.totalorder %s15, 5
    %s23 = sphi 0, %s23
    %s25 = sphi 0, %s23
    %s26 = sphi 0, %s25
    %s40 = sphi 0, %s26
    %s44 = sphi 0, %s44
    %s46 = sphi 0, %s44
    %s47 = sphi 0, %s46
    %s61 = sphi 0, %s47
    %s67 = sphi 0, %s69
    %s70 = sphi 0, %s67
    %s71 = sphi 0, %s70
    %s87 = sphi 0, %s71
    %s93 = sphi 0, %s95
    %s96 = sphi 0, %s93
    %s97 = sphi 0, %s96
    %s113 = sphi 0, %s97
    %s119 = sphi 0, %s121
    %s122 = sphi 0, %s119
    %s123 = sphi 0, %s122
    %s139 = sphi 0, %s123
    %s143 = sphi 0, %s143
    %s145 = sphi 0, %s143
    %s146 = sphi 0, %s145
    %s160 = sphi 0, %s146
    %s164 = sphi 0, %s164
    %s166 = sphi 0, %s164
    %s167 = sphi 0, %s166
    %s181 = sphi 0, %s167
    %s185 = sphi 0, %s185
    %s187 = sphi 0, %s185
    %s188 = sphi 0, %s187
    %s202 = sphi 0, %s188
    %s206 = sphi 0, %s206
    %s208 = sphi 0, %s206
    %s209 = sphi 0, %s208
    %s223 = sphi 0, %s209
    %s227 = sphi 0, %s227
    %s229 = sphi 0, %s227
    %s230 = sphi 0, %s229
    %s244 = sphi 0, %s230
  $region4: #{gine_conv_forward.1} parent=0 // loop_header_branch
    %18 = sbr.rel (%p16) target = $region8
  $region5: #{gine_conv_forward.1} parent=0 // loop_body
    %s20 = ssub.s32 %s15, 1
    %s21 = ssub.s32 %s15, 2
    %s22 = sadd.s32 %s15, 1
    %s24 = sadd.s32 %s23, 1
    %p27 = scmp.eq.s32.totalorder %s15, 2
    %p28 = scmp.ne.s32.totalorder %s23, %s25
    %p29 = scmp.eq.s32.totalorder %s15, 0
    %p30 = por %p28, %p29
    %p31 = scmp.ne.s32.totalorder %s23, %s25
    %p32 = scmp.eq.s32.totalorder %s20, 2
    %p33 = por %p31, %p32
    %p34 = scmp.ne.s32.totalorder %s25, %s26
    %p35 = scmp.eq.s32.totalorder %s20, 0
    %p36 = por %p34, %p35
    %p37 = scmp.ne.s32.totalorder %s25, %s26
    %p38 = scmp.eq.s32.totalorder %s21, 2
    %p39 = por %p37, %p38
    %p41 = scmp.ne.s32.totalorder %s26, %s40
    %p42 = scmp.eq.s32.totalorder %s21, 0
    %p43 = por %p41, %p42
    %s45 = sadd.s32 %s44, 1
    %p48 = scmp.eq.s32.totalorder %s15, 2
    %p49 = scmp.ne.s32.totalorder %s44, %s46
    %p50 = scmp.eq.s32.totalorder %s15, 0
    %p51 = por %p49, %p50
    %p52 = scmp.ne.s32.totalorder %s44, %s46
    %p53 = scmp.eq.s32.totalorder %s20, 2
    %p54 = por %p52, %p53
    %p55 = scmp.ne.s32.totalorder %s46, %s47
    %p56 = scmp.eq.s32.totalorder %s20, 0
    %p57 = por %p55, %p56
    %p58 = scmp.ne.s32.totalorder %s46, %s47
    %p59 = scmp.eq.s32.totalorder %s21, 2
    %p60 = por %p58, %p59
    %p62 = scmp.ne.s32.totalorder %s47, %s61
    %p63 = scmp.eq.s32.totalorder %s21, 0
    %p64 = por %p62, %p63
    %s65 = ssub.s32 %s15, %s22
    %p66 = scmp.eq.s32.totalorder %s65, 0
    %s68 = sadd.s32 %s67, 1
    %s69 = scalar_select %p66, %s67, %s68
    %p72 = pneg %p66
    %p73 = scmp.eq.s32.totalorder %s15, 2
    %p74 = por %p72, %p73
    %p75 = scmp.ne.s32.totalorder %s67, %s70
    %p76 = scmp.eq.s32.totalorder %s15, 0
    %p77 = por %p75, %p76
    %p78 = scmp.ne.s32.totalorder %s67, %s70
    %p79 = scmp.eq.s32.totalorder %s20, 2
    %p80 = por %p78, %p79
    %p81 = scmp.ne.s32.totalorder %s70, %s71
    %p82 = scmp.eq.s32.totalorder %s20, 0
    %p83 = por %p81, %p82
    %p84 = scmp.ne.s32.totalorder %s70, %s71
    %p85 = scmp.eq.s32.totalorder %s21, 2
    %p86 = por %p84, %p85
    %p88 = scmp.ne.s32.totalorder %s71, %s87
    %p89 = scmp.eq.s32.totalorder %s21, 0
    %p90 = por %p88, %p89
    %s91 = ssub.s32 %s15, %s22
    %p92 = scmp.eq.s32.totalorder %s91, 0
    %s94 = sadd.s32 %s93, 1
    %s95 = scalar_select %p92, %s93, %s94
    %p98 = pneg %p92
    %p99 = scmp.eq.s32.totalorder %s15, 2
    %p100 = por %p98, %p99
    %p101 = scmp.ne.s32.totalorder %s93, %s96
    %p102 = scmp.eq.s32.totalorder %s15, 0
    %p103 = por %p101, %p102
    %p104 = scmp.ne.s32.totalorder %s93, %s96
    %p105 = scmp.eq.s32.totalorder %s20, 2
    %p106 = por %p104, %p105
    %p107 = scmp.ne.s32.totalorder %s96, %s97
    %p108 = scmp.eq.s32.totalorder %s20, 0
    %p109 = por %p107, %p108
    %p110 = scmp.ne.s32.totalorder %s96, %s97
    %p111 = scmp.eq.s32.totalorder %s21, 2
    %p112 = por %p110, %p111
    %p114 = scmp.ne.s32.totalorder %s97, %s113
    %p115 = scmp.eq.s32.totalorder %s21, 0
    %p116 = por %p114, %p115
    %s117 = ssub.s32 %s15, %s22
    %p118 = scmp.eq.s32.totalorder %s117, 0
    %s120 = sadd.s32 %s119, 1
    %s121 = scalar_select %p118, %s119, %s120
    %p124 = pneg %p118
    %p125 = scmp.eq.s32.totalorder %s15, 2
    %p126 = por %p124, %p125
    %p127 = scmp.ne.s32.totalorder %s119, %s122
    %p128 = scmp.eq.s32.totalorder %s15, 0
    %p129 = por %p127, %p128
    %p130 = scmp.ne.s32.totalorder %s119, %s122
    %p131 = scmp.eq.s32.totalorder %s20, 2
    %p132 = por %p130, %p131
    %p133 = scmp.ne.s32.totalorder %s122, %s123
    %p134 = scmp.eq.s32.totalorder %s20, 0
    %p135 = por %p133, %p134
    %p136 = scmp.ne.s32.totalorder %s122, %s123
    %p137 = scmp.eq.s32.totalorder %s21, 2
    %p138 = por %p136, %p137
    %p140 = scmp.ne.s32.totalorder %s123, %s139
    %p141 = scmp.eq.s32.totalorder %s21, 0
    %p142 = por %p140, %p141
    %s144 = sadd.s32 %s143, 1
    %p147 = scmp.eq.s32.totalorder %s15, 2
    %p148 = scmp.ne.s32.totalorder %s143, %s145
    %p149 = scmp.eq.s32.totalorder %s15, 0
    %p150 = por %p148, %p149
    %p151 = scmp.ne.s32.totalorder %s143, %s145
    %p152 = scmp.eq.s32.totalorder %s20, 2
    %p153 = por %p151, %p152
    %p154 = scmp.ne.s32.totalorder %s145, %s146
    %p155 = scmp.eq.s32.totalorder %s20, 0
    %p156 = por %p154, %p155
    %p157 = scmp.ne.s32.totalorder %s145, %s146
    %p158 = scmp.eq.s32.totalorder %s21, 2
    %p159 = por %p157, %p158
    %p161 = scmp.ne.s32.totalorder %s146, %s160
    %p162 = scmp.eq.s32.totalorder %s21, 0
    %p163 = por %p161, %p162
    %s165 = sadd.s32 %s164, 1
    %p168 = scmp.eq.s32.totalorder %s15, 2
    %p169 = scmp.ne.s32.totalorder %s164, %s166
    %p170 = scmp.eq.s32.totalorder %s15, 0
    %p171 = por %p169, %p170
    %p172 = scmp.ne.s32.totalorder %s164, %s166
    %p173 = scmp.eq.s32.totalorder %s20, 2
    %p174 = por %p172, %p173
    %p175 = scmp.ne.s32.totalorder %s166, %s167
    %p176 = scmp.eq.s32.totalorder %s20, 0
    %p177 = por %p175, %p176
    %p178 = scmp.ne.s32.totalorder %s166, %s167
    %p179 = scmp.eq.s32.totalorder %s21, 2
    %p180 = por %p178, %p179
    %p182 = scmp.ne.s32.totalorder %s167, %s181
    %p183 = scmp.eq.s32.totalorder %s21, 0
    %p184 = por %p182, %p183
    %s186 = sadd.s32 %s185, 1
    %p189 = scmp.eq.s32.totalorder %s15, 2
    %p190 = scmp.ne.s32.totalorder %s185, %s187
    %p191 = scmp.eq.s32.totalorder %s15, 0
    %p192 = por %p190, %p191
    %p193 = scmp.ne.s32.totalorder %s185, %s187
    %p194 = scmp.eq.s32.totalorder %s20, 2
    %p195 = por %p193, %p194
    %p196 = scmp.ne.s32.totalorder %s187, %s188
    %p197 = scmp.eq.s32.totalorder %s20, 0
    %p198 = por %p196, %p197
    %p199 = scmp.ne.s32.totalorder %s187, %s188
    %p200 = scmp.eq.s32.totalorder %s21, 2
    %p201 = por %p199, %p200
    %p203 = scmp.ne.s32.totalorder %s188, %s202
    %p204 = scmp.eq.s32.totalorder %s21, 0
    %p205 = por %p203, %p204
    %s207 = sadd.s32 %s206, 1
    %p210 = scmp.eq.s32.totalorder %s15, 2
    %p211 = scmp.ne.s32.totalorder %s206, %s208
    %p212 = scmp.eq.s32.totalorder %s15, 0
    %p213 = por %p211, %p212
    %p214 = scmp.ne.s32.totalorder %s206, %s208
    %p215 = scmp.eq.s32.totalorder %s20, 2
    %p216 = por %p214, %p215
    %p217 = scmp.ne.s32.totalorder %s208, %s209
    %p218 = scmp.eq.s32.totalorder %s20, 0
    %p219 = por %p217, %p218
    %p220 = scmp.ne.s32.totalorder %s208, %s209
    %p221 = scmp.eq.s32.totalorder %s21, 2
    %p222 = por %p220, %p221
    %p224 = scmp.ne.s32.totalorder %s209, %s223
    %p225 = scmp.eq.s32.totalorder %s21, 0
    %p226 = por %p224, %p225
    %s228 = sadd.s32 %s227, 1
    %p231 = scmp.eq.s32.totalorder %s15, 2
    %p232 = scmp.ne.s32.totalorder %s227, %s229
    %p233 = scmp.eq.s32.totalorder %s15, 0
    %p234 = por %p232, %p233
    %p235 = scmp.ne.s32.totalorder %s227, %s229
    %p236 = scmp.eq.s32.totalorder %s20, 2
    %p237 = por %p235, %p236
    %p238 = scmp.ne.s32.totalorder %s229, %s230
    %p239 = scmp.eq.s32.totalorder %s20, 0
    %p240 = por %p238, %p239
    %p241 = scmp.ne.s32.totalorder %s229, %s230
    %p242 = scmp.eq.s32.totalorder %s21, 2
    %p243 = por %p241, %p242
    %p245 = scmp.ne.s32.totalorder %s230, %s244
    %p246 = scmp.eq.s32.totalorder %s21, 0
    %p247 = por %p245, %p246
    %p248 = scmp.le.s32.totalorder 1, %s15
    %p249 = scmp.lt.s32.totalorder %s15, 4
    %p250 = pnand %p248, %p249
    %p251 = pneg %p250
    // Predicated region
    $region9: #{gine_conv_forward.1} parent=5 // pred_check
      _
    $region10: #{gine_conv_forward.1} parent=5 // pred_check_branch
      %253 = sbr.rel (%p250) target = $region12
    $region11: #{gine_conv_forward.1} parent=5 // pred_region
      %s254 = ssub.s32 %s15, 1
      // Predicated region
      $region13: #{gine_conv_forward.1} parent=11 // pred_check
        %p255 = pneg %p36
      $region14: #{gine_conv_forward.1} parent=11 // pred_check_branch
        %257 = sbr.rel (%p255) target = $region16
      $region15: #{gine_conv_forward.1} parent=11 // pred_region
        _
      $region16: #{gine_conv_forward.1} parent=11 // pred_fallthru
        _
      // Predicated region
      $region17: #{gine_conv_forward.1} parent=11 // pred_check
        %p258 = pneg %p57
      $region18: #{gine_conv_forward.1} parent=11 // pred_check_branch
        %260 = sbr.rel (%p258) target = $region20
      $region19: #{gine_conv_forward.1} parent=11 // pred_region
        _
      $region20: #{gine_conv_forward.1} parent=11 // pred_fallthru
        _
      // Predicated region
      $region21: #{gine_conv_forward.1} parent=11 // pred_check
        %p261 = pneg %p156
      $region22: #{gine_conv_forward.1} parent=11 // pred_check_branch
        %263 = sbr.rel (%p261) target = $region24
      $region23: #{gine_conv_forward.1} parent=11 // pred_region
        _
      $region24: #{gine_conv_forward.1} parent=11 // pred_fallthru
        _
      // Predicated region
      $region25: #{gine_conv_forward.1} parent=11 // pred_check
        %p264 = pneg %p177
      $region26: #{gine_conv_forward.1} parent=11 // pred_check_branch
        %266 = sbr.rel (%p264) target = $region28
      $region27: #{gine_conv_forward.1} parent=11 // pred_region
        _
      $region28: #{gine_conv_forward.1} parent=11 // pred_fallthru
        _
      // Predicated region
      $region29: #{gine_conv_forward.1} parent=11 // pred_check
        %p267 = pneg %p198
      $region30: #{gine_conv_forward.1} parent=11 // pred_check_branch
        %269 = sbr.rel (%p267) target = $region32
      $region31: #{gine_conv_forward.1} parent=11 // pred_region
        _
      $region32: #{gine_conv_forward.1} parent=11 // pred_fallthru
        _
      // Predicated region
      $region33: #{gine_conv_forward.1} parent=11 // pred_check
        %p270 = pneg %p219
      $region34: #{gine_conv_forward.1} parent=11 // pred_check_branch
        %272 = sbr.rel (%p270) target = $region36
      $region35: #{gine_conv_forward.1} parent=11 // pred_region
        _
      $region36: #{gine_conv_forward.1} parent=11 // pred_fallthru
        _
    $region12: #{gine_conv_forward.1} parent=5 // pred_fallthru
      _
    %p273 = scmp.lt.s32.totalorder %s15, 3
    // Predicated region
    $region37: #{gine_conv_forward.1} parent=5 // pred_check
      %p274 = pneg %p273
    $region38: #{gine_conv_forward.1} parent=5 // pred_check_branch
      %276 = sbr.rel (%p274) target = $region40
    $region39: #{gine_conv_forward.1} parent=5 // pred_region
      // Predicated region
      $region41: #{gine_conv_forward.1} parent=39 // pred_check
        %p277 = pneg %p77
      $region42: #{gine_conv_forward.1} parent=39 // pred_check_branch
        %279 = sbr.rel (%p277) target = $region44
      $region43: #{gine_conv_forward.1} parent=39 // pred_region
        %s280 = smul.u32 64, %s15
        %p281 = scmp.lt.s32.totalorder %s280, 191
        %s282 = scalar_select %p281, %s280, 191
        %s283 = smul.addr %s282, 8
        %s284 = scalar_lea.vmem %s2, %s283
        %s285 = smul.u32 64, %s15
      $region44: #{gine_conv_forward.1} parent=39 // pred_fallthru
        _
      // Predicated region
      $region45: #{gine_conv_forward.1} parent=39 // pred_check
        %p286 = pneg %p103
      $region46: #{gine_conv_forward.1} parent=39 // pred_check_branch
        %288 = sbr.rel (%p286) target = $region48
      $region47: #{gine_conv_forward.1} parent=39 // pred_region
        %s289 = smul.u32 64, %s15
        %p290 = scmp.lt.s32.totalorder %s289, 191
        %s291 = scalar_select %p290, %s289, 191
        %s292 = smul.addr %s291, 8
        %s293 = scalar_lea.vmem %s3, %s292
        %s294 = smul.u32 64, %s15
      $region48: #{gine_conv_forward.1} parent=39 // pred_fallthru
        _
      // Predicated region
      $region49: #{gine_conv_forward.1} parent=39 // pred_check
        %p295 = pneg %p129
      $region50: #{gine_conv_forward.1} parent=39 // pred_check_branch
        %297 = sbr.rel (%p295) target = $region52
      $region51: #{gine_conv_forward.1} parent=39 // pred_region
        %s298 = smul.u32 4, %s15
        %p299 = scmp.lt.s32.totalorder %s298, 11
        %s300 = scalar_select %p299, %s298, 11
        %s301 = scalar_lea.vmem %s4, %s300
        %s302 = smul.u32 4, %s15
      $region52: #{gine_conv_forward.1} parent=39 // pred_fallthru
        _
    $region40: #{gine_conv_forward.1} parent=5 // pred_fallthru
      _
    %p303 = scmp.le.s32.totalorder 1, %s15
    %p304 = scmp.lt.s32.totalorder %s15, 4
    %p305 = pnand %p303, %p304
    %p306 = pneg %p305
    // Predicated region
    $region53: #{gine_conv_forward.1} parent=5 // pred_check
      _
    $region54: #{gine_conv_forward.1} parent=5 // pred_check_branch
      %308 = sbr.rel (%p305) target = $region56
    $region55: #{gine_conv_forward.1} parent=5 // pred_region
      %s309 = ssub.s32 %s15, 1
      %p310 = pneg %p36
      %p311 = pneg %p33
      %p312 = pneg %p57
      %p313 = pneg %p54
      %s314 = smul.u32 64, %s20
      %p315 = scmp.lt.s32.totalorder %s314, 191
      %s316 = scalar_select %p315, %s314, 191
      %s317 = smul.addr %s316, 8
      %s318 = scalar_lea.vmem %s2, %s317
      %p319 = pneg %p83
      %p320 = pneg %p80
      %s321 = smul.u32 64, %s20
      %p322 = scmp.lt.s32.totalorder %s321, 191
      %s323 = scalar_select %p322, %s321, 191
      %s324 = smul.addr %s323, 8
      %s325 = scalar_lea.vmem %s3, %s324
      %p326 = pneg %p109
      %p327 = pneg %p106
      %s328 = smul.u32 4, %s20
      %p329 = scmp.lt.s32.totalorder %s328, 11
      %s330 = scalar_select %p329, %s328, 11
      %s331 = scalar_lea.vmem %s4, %s330
      %p332 = pneg %p135
      %p333 = pneg %p132
      %p334 = pneg %p156
      %p335 = pneg %p153
      %p336 = pneg %p177
      %p337 = pneg %p174
      %p338 = pneg %p198
      %p339 = pneg %p195
      %p340 = pneg %p219
      %p341 = pneg %p216
      %p342 = pneg %p240
      %p343 = pneg %p237
      %s344 = smul.u32 64, %s20
      %p345 = scmp.lt.s32.totalorder %s344, 191
      %s346 = scalar_select %p345, %s344, 191
      %s347 = smul.addr %s346, 8
      %s348 = scalar_lea.vmem %s2, %s347
      %s349 = smul.u32 64, %s20
      %s350 = smul.u32 64, %s20
      %p351 = scmp.lt.s32.totalorder %s350, 191
      %s352 = scalar_select %p351, %s350, 191
      %s353 = smul.addr %s352, 8
      %s354 = scalar_lea.vmem %s3, %s353
      %s355 = smul.u32 64, %s20
      %s356 = smul.u32 4, %s20
      %p357 = scmp.lt.s32.totalorder %s356, 11
      %s358 = scalar_select %p357, %s356, 11
      %s359 = scalar_lea.vmem %s4, %s358
      %s360 = smul.u32 4, %s20
      %p362 = scmp.eq.s32.totalorder %s20, 0
      // Predicated region
      $region57: #{gine_conv_forward.1} parent=55 // pred_check
        %p363 = pneg %p362
      $region58: #{gine_conv_forward.1} parent=55 // pred_check_branch
        %365 = sbr.rel (%p363) target = $region60
      $region59: #{gine_conv_forward.1} parent=55 // pred_region
        %v366 = vld [vmem:[%s1] sm:$0xff]
        %v367 = vld [vmem:[%s1 + $0x8] sm:$0xff]
        %v368 = vld [vmem:[%s1 + $0x10] sm:$0xff]
        %v369 = vld [vmem:[%s1 + $0x18] sm:$0xff]
        %v370 = vld [vmem:[%s1 + $0x20] sm:$0xff]
        %v371 = vld [vmem:[%s1 + $0x28] sm:$0xff]
        %v372 = vld [vmem:[%s1 + $0x30] sm:$0xff]
        %v373 = vld [vmem:[%s1 + $0x38] sm:$0xff]
        %v374 = vld [vmem:[%s1 + $0x40] sm:$0xff]
        %v375 = vld [vmem:[%s1 + $0x48] sm:$0xff]
        %v376 = vld [vmem:[%s1 + $0x50] sm:$0xff]
        %v377 = vld [vmem:[%s1 + $0x58] sm:$0xff]
        %v378 = vld [vmem:[%s1 + $0x60] sm:$0xff]
        %v379 = vld [vmem:[%s1 + $0x68] sm:$0xff]
        %v380 = vld [vmem:[%s1 + $0x70] sm:$0xff]
        %v381 = vld [vmem:[%s1 + $0x78] sm:$0xff]
        %v382 = vld [vmem:[%s1 + $0x80] sm:$0xff]
        %v383 = vld [vmem:[%s1 + $0x88] sm:$0xff]
        %v384 = vld [vmem:[%s1 + $0x90] sm:$0xff]
        %v385 = vld [vmem:[%s1 + $0x98] sm:$0xff]
        %v386 = vld [vmem:[%s1 + $0xa0] sm:$0xff]
        %v387 = vld [vmem:[%s1 + $0xa8] sm:$0xff]
        %v388 = vld [vmem:[%s1 + $0xb0] sm:$0xff]
        %v389 = vld [vmem:[%s1 + $0xb8] sm:$0xff]
        %v390 = vld [vmem:[%s1 + $0xc0] sm:$0xff]
        %v391 = vld [vmem:[%s1 + $0xc8] sm:$0xff]
        %v392 = vld [vmem:[%s1 + $0xd0] sm:$0xff]
        %v393 = vld [vmem:[%s1 + $0xd8] sm:$0xff]
        %v394 = vld [vmem:[%s1 + $0xe0] sm:$0xff]
        %v395 = vld [vmem:[%s1 + $0xe8] sm:$0xff]
        %v396 = vld [vmem:[%s1 + $0xf0] sm:$0xff]
        %v397 = vld [vmem:[%s1 + $0xf8] sm:$0xff]
        %v398 = vld [vmem:[%s1 + $0x100] sm:$0xff]
        %v399 = vld [vmem:[%s1 + $0x108] sm:$0xff]
        %v400 = vld [vmem:[%s1 + $0x110] sm:$0xff]
        %v401 = vld [vmem:[%s1 + $0x118] sm:$0xff]
        %v402 = vld [vmem:[%s1 + $0x120] sm:$0xff]
        %v403 = vld [vmem:[%s1 + $0x128] sm:$0xff]
        %v404 = vld [vmem:[%s1 + $0x130] sm:$0xff]
        %v405 = vld [vmem:[%s1 + $0x138] sm:$0xff]
        %v406 = vld [vmem:[%s1 + $0x140] sm:$0xff]
        %v407 = vld [vmem:[%s1 + $0x148] sm:$0xff]
        %v408 = vld [vmem:[%s1 + $0x150] sm:$0xff]
        %v409 = vld [vmem:[%s1 + $0x158] sm:$0xff]
        %v410 = vld [vmem:[%s1 + $0x160] sm:$0xff]
        %v411 = vld [vmem:[%s1 + $0x168] sm:$0xff]
        %v412 = vld [vmem:[%s1 + $0x170] sm:$0xff]
        %v413 = vld [vmem:[%s1 + $0x178] sm:$0xff]
        %vm414 = vcmask 261120
        %415 = vst.msk [vmem:[#allocation2] sm:$0xff] %vm414, %v366
        %416 = vst.msk [vmem:[#allocation2 + $0x8] sm:$0xff] %vm414, %v367
        %417 = vst.msk [vmem:[#allocation2 + $0x10] sm:$0xff] %vm414, %v368
        %418 = vst.msk [vmem:[#allocation2 + $0x18] sm:$0xff] %vm414, %v369
        %419 = vst.msk [vmem:[#allocation2 + $0x20] sm:$0xff] %vm414, %v370
        %420 = vst.msk [vmem:[#allocation2 + $0x28] sm:$0xff] %vm414, %v371
        %421 = vst.msk [vmem:[#allocation2 + $0x30] sm:$0xff] %vm414, %v372
        %422 = vst.msk [vmem:[#allocation2 + $0x38] sm:$0xff] %vm414, %v373
        %423 = vst.msk [vmem:[#allocation2 + $0x40] sm:$0xff] %vm414, %v374
        %424 = vst.msk [vmem:[#allocation2 + $0x48] sm:$0xff] %vm414, %v375
        %425 = vst.msk [vmem:[#allocation2 + $0x50] sm:$0xff] %vm414, %v376
        %426 = vst.msk [vmem:[#allocation2 + $0x58] sm:$0xff] %vm414, %v377
        %427 = vst.msk [vmem:[#allocation2 + $0x60] sm:$0xff] %vm414, %v378
        %428 = vst.msk [vmem:[#allocation2 + $0x68] sm:$0xff] %vm414, %v379
        %429 = vst.msk [vmem:[#allocation2 + $0x70] sm:$0xff] %vm414, %v380
        %430 = vst.msk [vmem:[#allocation2 + $0x78] sm:$0xff] %vm414, %v381
        %431 = vst.msk [vmem:[#allocation2 + $0x80] sm:$0xff] %vm414, %v382
        %432 = vst.msk [vmem:[#allocation2 + $0x88] sm:$0xff] %vm414, %v383
        %433 = vst.msk [vmem:[#allocation2 + $0x90] sm:$0xff] %vm414, %v384
        %434 = vst.msk [vmem:[#allocation2 + $0x98] sm:$0xff] %vm414, %v385
        %435 = vst.msk [vmem:[#allocation2 + $0xa0] sm:$0xff] %vm414, %v386
        %436 = vst.msk [vmem:[#allocation2 + $0xa8] sm:$0xff] %vm414, %v387
        %437 = vst.msk [vmem:[#allocation2 + $0xb0] sm:$0xff] %vm414, %v388
        %438 = vst.msk [vmem:[#allocation2 + $0xb8] sm:$0xff] %vm414, %v389
        %439 = vst.msk [vmem:[#allocation2 + $0xc0] sm:$0xff] %vm414, %v390
        %440 = vst.msk [vmem:[#allocation2 + $0xc8] sm:$0xff] %vm414, %v391
        %441 = vst.msk [vmem:[#allocation2 + $0xd0] sm:$0xff] %vm414, %v392
        %442 = vst.msk [vmem:[#allocation2 + $0xd8] sm:$0xff] %vm414, %v393
        %443 = vst.msk [vmem:[#allocation2 + $0xe0] sm:$0xff] %vm414, %v394
        %444 = vst.msk [vmem:[#allocation2 + $0xe8] sm:$0xff] %vm414, %v395
        %445 = vst.msk [vmem:[#allocation2 + $0xf0] sm:$0xff] %vm414, %v396
        %446 = vst.msk [vmem:[#allocation2 + $0xf8] sm:$0xff] %vm414, %v397
        %447 = vst.msk [vmem:[#allocation2 + $0x100] sm:$0xff] %vm414, %v398
        %448 = vst.msk [vmem:[#allocation2 + $0x108] sm:$0xff] %vm414, %v399
        %449 = vst.msk [vmem:[#allocation2 + $0x110] sm:$0xff] %vm414, %v400
        %450 = vst.msk [vmem:[#allocation2 + $0x118] sm:$0xff] %vm414, %v401
        %451 = vst.msk [vmem:[#allocation2 + $0x120] sm:$0xff] %vm414, %v402
        %452 = vst.msk [vmem:[#allocation2 + $0x128] sm:$0xff] %vm414, %v403
        %453 = vst.msk [vmem:[#allocation2 + $0x130] sm:$0xff] %vm414, %v404
        %454 = vst.msk [vmem:[#allocation2 + $0x138] sm:$0xff] %vm414, %v405
        %455 = vst.msk [vmem:[#allocation2 + $0x140] sm:$0xff] %vm414, %v406
        %456 = vst.msk [vmem:[#allocation2 + $0x148] sm:$0xff] %vm414, %v407
        %457 = vst.msk [vmem:[#allocation2 + $0x150] sm:$0xff] %vm414, %v408
        %458 = vst.msk [vmem:[#allocation2 + $0x158] sm:$0xff] %vm414, %v409
        %459 = vst.msk [vmem:[#allocation2 + $0x160] sm:$0xff] %vm414, %v410
        %460 = vst.msk [vmem:[#allocation2 + $0x168] sm:$0xff] %vm414, %v411
        %461 = vst.msk [vmem:[#allocation2 + $0x170] sm:$0xff] %vm414, %v412
        %462 = vst.msk [vmem:[#allocation2 + $0x178] sm:$0xff] %vm414, %v413
        %v463 = vlaneseq
        %v464 = vand.u32 %v463, 127
        %v465 = vadd.s32 %v464, 128
        %v466 = vadd.s32 %v464, 256
        %467 = vst [vmem:[#allocation3] sm:$0xff] %v464
        %468 = vst [vmem:[#allocation3 + $0x8] sm:$0xff] %v465
        %469 = vst [vmem:[#allocation3 + $0x10] sm:$0xff] %v466
        %470 = vst [vmem:[#allocation3 + $0x18] sm:$0xff] %v464
        %471 = vst [vmem:[#allocation3 + $0x20] sm:$0xff] %v465
        %472 = vst [vmem:[#allocation3 + $0x28] sm:$0xff] %v466
        %473 = vst [vmem:[#allocation3 + $0x30] sm:$0xff] %v464
        %474 = vst [vmem:[#allocation3 + $0x38] sm:$0xff] %v465
        %475 = vst [vmem:[#allocation3 + $0x40] sm:$0xff] %v466
        %476 = vst [vmem:[#allocation3 + $0x48] sm:$0xff] %v464
        %477 = vst [vmem:[#allocation3 + $0x50] sm:$0xff] %v465
        %478 = vst [vmem:[#allocation3 + $0x58] sm:$0xff] %v466
        %479 = vst [vmem:[#allocation3 + $0x60] sm:$0xff] %v464
        %480 = vst [vmem:[#allocation3 + $0x68] sm:$0xff] %v465
        %481 = vst [vmem:[#allocation3 + $0x70] sm:$0xff] %v466
        %482 = vst [vmem:[#allocation3 + $0x78] sm:$0xff] %v464
        %483 = vst [vmem:[#allocation3 + $0x80] sm:$0xff] %v465
        %484 = vst [vmem:[#allocation3 + $0x88] sm:$0xff] %v466
        %485 = vst [vmem:[#allocation3 + $0x90] sm:$0xff] %v464
        %486 = vst [vmem:[#allocation3 + $0x98] sm:$0xff] %v465
        %487 = vst [vmem:[#allocation3 + $0xa0] sm:$0xff] %v466
        %488 = vst [vmem:[#allocation3 + $0xa8] sm:$0xff] %v464
        %489 = vst [vmem:[#allocation3 + $0xb0] sm:$0xff] %v465
        %490 = vst [vmem:[#allocation3 + $0xb8] sm:$0xff] %v466
        %491 = vst [vmem:[#allocation3 + $0xc0] sm:$0xff] %v464
        %492 = vst [vmem:[#allocation3 + $0xc8] sm:$0xff] %v465
        %493 = vst [vmem:[#allocation3 + $0xd0] sm:$0xff] %v466
        %494 = vst [vmem:[#allocation3 + $0xd8] sm:$0xff] %v464
        %495 = vst [vmem:[#allocation3 + $0xe0] sm:$0xff] %v465
        %496 = vst [vmem:[#allocation3 + $0xe8] sm:$0xff] %v466
        %497 = vst [vmem:[#allocation3 + $0xf0] sm:$0xff] %v464
        %498 = vst [vmem:[#allocation3 + $0xf8] sm:$0xff] %v465
        %499 = vst [vmem:[#allocation3 + $0x100] sm:$0xff] %v466
        %500 = vst [vmem:[#allocation3 + $0x108] sm:$0xff] %v464
        %501 = vst [vmem:[#allocation3 + $0x110] sm:$0xff] %v465
        %502 = vst [vmem:[#allocation3 + $0x118] sm:$0xff] %v466
        %503 = vst [vmem:[#allocation3 + $0x120] sm:$0xff] %v464
        %504 = vst [vmem:[#allocation3 + $0x128] sm:$0xff] %v465
        %505 = vst [vmem:[#allocation3 + $0x130] sm:$0xff] %v466
        %506 = vst [vmem:[#allocation3 + $0x138] sm:$0xff] %v464
        %507 = vst [vmem:[#allocation3 + $0x140] sm:$0xff] %v465
        %508 = vst [vmem:[#allocation3 + $0x148] sm:$0xff] %v466
        %509 = vst [vmem:[#allocation3 + $0x150] sm:$0xff] %v464
        %510 = vst [vmem:[#allocation3 + $0x158] sm:$0xff] %v465
        %511 = vst [vmem:[#allocation3 + $0x160] sm:$0xff] %v466
        %512 = vst [vmem:[#allocation3 + $0x168] sm:$0xff] %v464
        %513 = vst [vmem:[#allocation3 + $0x170] sm:$0xff] %v465
        %514 = vst [vmem:[#allocation3 + $0x178] sm:$0xff] %v466
        %515 = vst [vmem:[#allocation3 + $0x180] sm:$0xff] %v464
        %516 = vst [vmem:[#allocation3 + $0x188] sm:$0xff] %v465
        %517 = vst [vmem:[#allocation3 + $0x190] sm:$0xff] %v466
        %518 = vst [vmem:[#allocation3 + $0x198] sm:$0xff] %v464
        %519 = vst [vmem:[#allocation3 + $0x1a0] sm:$0xff] %v465
        %520 = vst [vmem:[#allocation3 + $0x1a8] sm:$0xff] %v466
        %521 = vst [vmem:[#allocation3 + $0x1b0] sm:$0xff] %v464
        %522 = vst [vmem:[#allocation3 + $0x1b8] sm:$0xff] %v465
        %523 = vst [vmem:[#allocation3 + $0x1c0] sm:$0xff] %v466
        %524 = vst [vmem:[#allocation3 + $0x1c8] sm:$0xff] %v464
        %525 = vst [vmem:[#allocation3 + $0x1d0] sm:$0xff] %v465
        %526 = vst [vmem:[#allocation3 + $0x1d8] sm:$0xff] %v466
        %527 = vst [vmem:[#allocation3 + $0x1e0] sm:$0xff] %v464
        %528 = vst [vmem:[#allocation3 + $0x1e8] sm:$0xff] %v465
        %529 = vst [vmem:[#allocation3 + $0x1f0] sm:$0xff] %v466
        %530 = vst [vmem:[#allocation3 + $0x1f8] sm:$0xff] %v464
        %531 = vst [vmem:[#allocation3 + $0x200] sm:$0xff] %v465
        %532 = vst [vmem:[#allocation3 + $0x208] sm:$0xff] %v466
        %533 = vst [vmem:[#allocation3 + $0x210] sm:$0xff] %v464
        %534 = vst [vmem:[#allocation3 + $0x218] sm:$0xff] %v465
        %535 = vst [vmem:[#allocation3 + $0x220] sm:$0xff] %v466
        %536 = vst [vmem:[#allocation3 + $0x228] sm:$0xff] %v464
        %537 = vst [vmem:[#allocation3 + $0x230] sm:$0xff] %v465
        %538 = vst [vmem:[#allocation3 + $0x238] sm:$0xff] %v466
        %539 = vst [vmem:[#allocation3 + $0x240] sm:$0xff] %v464
        %540 = vst [vmem:[#allocation3 + $0x248] sm:$0xff] %v465
        %541 = vst [vmem:[#allocation3 + $0x250] sm:$0xff] %v466
        %542 = vst [vmem:[#allocation3 + $0x258] sm:$0xff] %v464
        %543 = vst [vmem:[#allocation3 + $0x260] sm:$0xff] %v465
        %544 = vst [vmem:[#allocation3 + $0x268] sm:$0xff] %v466
        %545 = vst [vmem:[#allocation3 + $0x270] sm:$0xff] %v464
        %546 = vst [vmem:[#allocation3 + $0x278] sm:$0xff] %v465
        %547 = vst [vmem:[#allocation3 + $0x280] sm:$0xff] %v466
        %548 = vst [vmem:[#allocation3 + $0x288] sm:$0xff] %v464
        %549 = vst [vmem:[#allocation3 + $0x290] sm:$0xff] %v465
        %550 = vst [vmem:[#allocation3 + $0x298] sm:$0xff] %v466
        %551 = vst [vmem:[#allocation3 + $0x2a0] sm:$0xff] %v464
        %552 = vst [vmem:[#allocation3 + $0x2a8] sm:$0xff] %v465
        %553 = vst [vmem:[#allocation3 + $0x2b0] sm:$0xff] %v466
        %554 = vst [vmem:[#allocation3 + $0x2b8] sm:$0xff] %v464
        %555 = vst [vmem:[#allocation3 + $0x2c0] sm:$0xff] %v465
        %556 = vst [vmem:[#allocation3 + $0x2c8] sm:$0xff] %v466
        %557 = vst [vmem:[#allocation3 + $0x2d0] sm:$0xff] %v464
        %558 = vst [vmem:[#allocation3 + $0x2d8] sm:$0xff] %v465
        %559 = vst [vmem:[#allocation3 + $0x2e0] sm:$0xff] %v466
        %560 = vst [vmem:[#allocation3 + $0x2e8] sm:$0xff] %v464
        %561 = vst [vmem:[#allocation3 + $0x2f0] sm:$0xff] %v465
        %562 = vst [vmem:[#allocation3 + $0x2f8] sm:$0xff] %v466
        %563 = vst [vmem:[#allocation3 + $0x300] sm:$0xff] %v464
        %564 = vst [vmem:[#allocation3 + $0x308] sm:$0xff] %v465
        %565 = vst [vmem:[#allocation3 + $0x310] sm:$0xff] %v466
        %566 = vst [vmem:[#allocation3 + $0x318] sm:$0xff] %v464
        %567 = vst [vmem:[#allocation3 + $0x320] sm:$0xff] %v465
        %568 = vst [vmem:[#allocation3 + $0x328] sm:$0xff] %v466
        %569 = vst [vmem:[#allocation3 + $0x330] sm:$0xff] %v464
        %570 = vst [vmem:[#allocation3 + $0x338] sm:$0xff] %v465
        %571 = vst [vmem:[#allocation3 + $0x340] sm:$0xff] %v466
        %572 = vst [vmem:[#allocation3 + $0x348] sm:$0xff] %v464
        %573 = vst [vmem:[#allocation3 + $0x350] sm:$0xff] %v465
        %574 = vst [vmem:[#allocation3 + $0x358] sm:$0xff] %v466
        %575 = vst [vmem:[#allocation3 + $0x360] sm:$0xff] %v464
        %576 = vst [vmem:[#allocation3 + $0x368] sm:$0xff] %v465
        %577 = vst [vmem:[#allocation3 + $0x370] sm:$0xff] %v466
        %578 = vst [vmem:[#allocation3 + $0x378] sm:$0xff] %v464
        %579 = vst [vmem:[#allocation3 + $0x380] sm:$0xff] %v465
        %580 = vst [vmem:[#allocation3 + $0x388] sm:$0xff] %v466
        %581 = vst [vmem:[#allocation3 + $0x390] sm:$0xff] %v464
        %582 = vst [vmem:[#allocation3 + $0x398] sm:$0xff] %v465
        %583 = vst [vmem:[#allocation3 + $0x3a0] sm:$0xff] %v466
        %584 = vst [vmem:[#allocation3 + $0x3a8] sm:$0xff] %v464
        %585 = vst [vmem:[#allocation3 + $0x3b0] sm:$0xff] %v465
        %586 = vst [vmem:[#allocation3 + $0x3b8] sm:$0xff] %v466
        %587 = vst [vmem:[#allocation3 + $0x3c0] sm:$0xff] %v464
        %588 = vst [vmem:[#allocation3 + $0x3c8] sm:$0xff] %v465
        %589 = vst [vmem:[#allocation3 + $0x3d0] sm:$0xff] %v466
        %590 = vst [vmem:[#allocation3 + $0x3d8] sm:$0xff] %v464
        %591 = vst [vmem:[#allocation3 + $0x3e0] sm:$0xff] %v465
        %592 = vst [vmem:[#allocation3 + $0x3e8] sm:$0xff] %v466
        %593 = vst [vmem:[#allocation3 + $0x3f0] sm:$0xff] %v464
        %594 = vst [vmem:[#allocation3 + $0x3f8] sm:$0xff] %v465
        %595 = vst [vmem:[#allocation3 + $0x400] sm:$0xff] %v466
        %596 = vst [vmem:[#allocation3 + $0x408] sm:$0xff] %v464
        %597 = vst [vmem:[#allocation3 + $0x410] sm:$0xff] %v465
        %598 = vst [vmem:[#allocation3 + $0x418] sm:$0xff] %v466
        %599 = vst [vmem:[#allocation3 + $0x420] sm:$0xff] %v464
        %600 = vst [vmem:[#allocation3 + $0x428] sm:$0xff] %v465
        %601 = vst [vmem:[#allocation3 + $0x430] sm:$0xff] %v466
        %602 = vst [vmem:[#allocation3 + $0x438] sm:$0xff] %v464
        %603 = vst [vmem:[#allocation3 + $0x440] sm:$0xff] %v465
        %604 = vst [vmem:[#allocation3 + $0x448] sm:$0xff] %v466
        %605 = vst [vmem:[#allocation3 + $0x450] sm:$0xff] %v464
        %606 = vst [vmem:[#allocation3 + $0x458] sm:$0xff] %v465
        %607 = vst [vmem:[#allocation3 + $0x460] sm:$0xff] %v466
        %608 = vst [vmem:[#allocation3 + $0x468] sm:$0xff] %v464
        %609 = vst [vmem:[#allocation3 + $0x470] sm:$0xff] %v465
        %610 = vst [vmem:[#allocation3 + $0x478] sm:$0xff] %v466
        %611 = vst [vmem:[#allocation3 + $0x480] sm:$0xff] %v464
        %612 = vst [vmem:[#allocation3 + $0x488] sm:$0xff] %v465
        %613 = vst [vmem:[#allocation3 + $0x490] sm:$0xff] %v466
        %614 = vst [vmem:[#allocation3 + $0x498] sm:$0xff] %v464
        %615 = vst [vmem:[#allocation3 + $0x4a0] sm:$0xff] %v465
        %616 = vst [vmem:[#allocation3 + $0x4a8] sm:$0xff] %v466
        %617 = vst [vmem:[#allocation3 + $0x4b0] sm:$0xff] %v464
        %618 = vst [vmem:[#allocation3 + $0x4b8] sm:$0xff] %v465
        %619 = vst [vmem:[#allocation3 + $0x4c0] sm:$0xff] %v466
        %620 = vst [vmem:[#allocation3 + $0x4c8] sm:$0xff] %v464
        %621 = vst [vmem:[#allocation3 + $0x4d0] sm:$0xff] %v465
        %622 = vst [vmem:[#allocation3 + $0x4d8] sm:$0xff] %v466
        %623 = vst [vmem:[#allocation3 + $0x4e0] sm:$0xff] %v464
        %624 = vst [vmem:[#allocation3 + $0x4e8] sm:$0xff] %v465
        %625 = vst [vmem:[#allocation3 + $0x4f0] sm:$0xff] %v466
        %626 = vst [vmem:[#allocation3 + $0x4f8] sm:$0xff] %v464
        %627 = vst [vmem:[#allocation3 + $0x500] sm:$0xff] %v465
        %628 = vst [vmem:[#allocation3 + $0x508] sm:$0xff] %v466
        %629 = vst [vmem:[#allocation3 + $0x510] sm:$0xff] %v464
        %630 = vst [vmem:[#allocation3 + $0x518] sm:$0xff] %v465
        %631 = vst [vmem:[#allocation3 + $0x520] sm:$0xff] %v466
        %632 = vst [vmem:[#allocation3 + $0x528] sm:$0xff] %v464
        %633 = vst [vmem:[#allocation3 + $0x530] sm:$0xff] %v465
        %634 = vst [vmem:[#allocation3 + $0x538] sm:$0xff] %v466
        %635 = vst [vmem:[#allocation3 + $0x540] sm:$0xff] %v464
        %636 = vst [vmem:[#allocation3 + $0x548] sm:$0xff] %v465
        %637 = vst [vmem:[#allocation3 + $0x550] sm:$0xff] %v466
        %638 = vst [vmem:[#allocation3 + $0x558] sm:$0xff] %v464
        %639 = vst [vmem:[#allocation3 + $0x560] sm:$0xff] %v465
        %640 = vst [vmem:[#allocation3 + $0x568] sm:$0xff] %v466
        %641 = vst [vmem:[#allocation3 + $0x570] sm:$0xff] %v464
        %642 = vst [vmem:[#allocation3 + $0x578] sm:$0xff] %v465
        %643 = vst [vmem:[#allocation3 + $0x580] sm:$0xff] %v466
        %644 = vst [vmem:[#allocation3 + $0x588] sm:$0xff] %v464
        %645 = vst [vmem:[#allocation3 + $0x590] sm:$0xff] %v465
        %646 = vst [vmem:[#allocation3 + $0x598] sm:$0xff] %v466
        %647 = vst [vmem:[#allocation3 + $0x5a0] sm:$0xff] %v464
        %648 = vst [vmem:[#allocation3 + $0x5a8] sm:$0xff] %v465
        %649 = vst [vmem:[#allocation3 + $0x5b0] sm:$0xff] %v466
        %650 = vst [vmem:[#allocation3 + $0x5b8] sm:$0xff] %v464
        %651 = vst [vmem:[#allocation3 + $0x5c0] sm:$0xff] %v465
        %652 = vst [vmem:[#allocation3 + $0x5c8] sm:$0xff] %v466
        %653 = vst [vmem:[#allocation3 + $0x5d0] sm:$0xff] %v464
        %654 = vst [vmem:[#allocation3 + $0x5d8] sm:$0xff] %v465
        %655 = vst [vmem:[#allocation3 + $0x5e0] sm:$0xff] %v466
        %656 = vst [vmem:[#allocation3 + $0x5e8] sm:$0xff] %v464
        %657 = vst [vmem:[#allocation3 + $0x5f0] sm:$0xff] %v465
        %658 = vst [vmem:[#allocation3 + $0x5f8] sm:$0xff] %v466
        %v659 = vlaneseq
        %v660 = vshrl.u32 %v659, 7
        %v661 = vadd.s32 %v660, 8
        %v662 = vadd.s32 %v660, 16
        %v663 = vadd.s32 %v660, 24
        %v664 = vadd.s32 %v660, 32
        %v665 = vadd.s32 %v660, 40
        %v666 = vadd.s32 %v660, 48
        %v667 = vadd.s32 %v660, 56
        %v668 = vadd.s32 %v660, 64
        %v669 = vadd.s32 %v660, 72
        %v670 = vadd.s32 %v660, 80
        %v671 = vadd.s32 %v660, 88
        %v672 = vadd.s32 %v660, 96
        %v673 = vadd.s32 %v660, 104
        %v674 = vadd.s32 %v660, 112
        %v675 = vadd.s32 %v660, 120
        %v676 = vadd.s32 %v660, 128
        %v677 = vadd.s32 %v660, 136
        %v678 = vadd.s32 %v660, 144
        %v679 = vadd.s32 %v660, 152
        %v680 = vadd.s32 %v660, 160
        %v681 = vadd.s32 %v660, 168
        %v682 = vadd.s32 %v660, 176
        %v683 = vadd.s32 %v660, 184
        %v684 = vadd.s32 %v660, 192
        %v685 = vadd.s32 %v660, 200
        %v686 = vadd.s32 %v660, 208
        %v687 = vadd.s32 %v660, 216
        %v688 = vadd.s32 %v660, 224
        %v689 = vadd.s32 %v660, 232
        %v690 = vadd.s32 %v660, 240
        %v691 = vadd.s32 %v660, 248
        %v692 = vadd.s32 %v660, 256
        %v693 = vadd.s32 %v660, 264
        %v694 = vadd.s32 %v660, 272
        %v695 = vadd.s32 %v660, 280
        %v696 = vadd.s32 %v660, 288
        %v697 = vadd.s32 %v660, 296
        %v698 = vadd.s32 %v660, 304
        %v699 = vadd.s32 %v660, 312
        %v700 = vadd.s32 %v660, 320
        %v701 = vadd.s32 %v660, 328
        %v702 = vadd.s32 %v660, 336
        %v703 = vadd.s32 %v660, 344
        %v704 = vadd.s32 %v660, 352
        %v705 = vadd.s32 %v660, 360
        %v706 = vadd.s32 %v660, 368
        %v707 = vadd.s32 %v660, 376
        %708 = vst [vmem:[#allocation4] sm:$0xff] %v660
        %709 = vst [vmem:[#allocation4 + $0x8] sm:$0xff] %v660
        %710 = vst [vmem:[#allocation4 + $0x10] sm:$0xff] %v660
        %711 = vst [vmem:[#allocation4 + $0x18] sm:$0xff] %v660
        %712 = vst [vmem:[#allocation4 + $0x20] sm:$0xff] %v661
        %713 = vst [vmem:[#allocation4 + $0x28] sm:$0xff] %v661
        %714 = vst [vmem:[#allocation4 + $0x30] sm:$0xff] %v661
        %715 = vst [vmem:[#allocation4 + $0x38] sm:$0xff] %v661
        %716 = vst [vmem:[#allocation4 + $0x40] sm:$0xff] %v662
        %717 = vst [vmem:[#allocation4 + $0x48] sm:$0xff] %v662
        %718 = vst [vmem:[#allocation4 + $0x50] sm:$0xff] %v662
        %719 = vst [vmem:[#allocation4 + $0x58] sm:$0xff] %v662
        %720 = vst [vmem:[#allocation4 + $0x60] sm:$0xff] %v663
        %721 = vst [vmem:[#allocation4 + $0x68] sm:$0xff] %v663
        %722 = vst [vmem:[#allocation4 + $0x70] sm:$0xff] %v663
        %723 = vst [vmem:[#allocation4 + $0x78] sm:$0xff] %v663
        %724 = vst [vmem:[#allocation4 + $0x80] sm:$0xff] %v664
        %725 = vst [vmem:[#allocation4 + $0x88] sm:$0xff] %v664
        %726 = vst [vmem:[#allocation4 + $0x90] sm:$0xff] %v664
        %727 = vst [vmem:[#allocation4 + $0x98] sm:$0xff] %v664
        %728 = vst [vmem:[#allocation4 + $0xa0] sm:$0xff] %v665
        %729 = vst [vmem:[#allocation4 + $0xa8] sm:$0xff] %v665
        %730 = vst [vmem:[#allocation4 + $0xb0] sm:$0xff] %v665
        %731 = vst [vmem:[#allocation4 + $0xb8] sm:$0xff] %v665
        %732 = vst [vmem:[#allocation4 + $0xc0] sm:$0xff] %v666
        %733 = vst [vmem:[#allocation4 + $0xc8] sm:$0xff] %v666
        %734 = vst [vmem:[#allocation4 + $0xd0] sm:$0xff] %v666
        %735 = vst [vmem:[#allocation4 + $0xd8] sm:$0xff] %v666
        %736 = vst [vmem:[#allocation4 + $0xe0] sm:$0xff] %v667
        %737 = vst [vmem:[#allocation4 + $0xe8] sm:$0xff] %v667
        %738 = vst [vmem:[#allocation4 + $0xf0] sm:$0xff] %v667
        %739 = vst [vmem:[#allocation4 + $0xf8] sm:$0xff] %v667
        %740 = vst [vmem:[#allocation4 + $0x100] sm:$0xff] %v668
        %741 = vst [vmem:[#allocation4 + $0x108] sm:$0xff] %v668
        %742 = vst [vmem:[#allocation4 + $0x110] sm:$0xff] %v668
        %743 = vst [vmem:[#allocation4 + $0x118] sm:$0xff] %v668
        %744 = vst [vmem:[#allocation4 + $0x120] sm:$0xff] %v669
        %745 = vst [vmem:[#allocation4 + $0x128] sm:$0xff] %v669
        %746 = vst [vmem:[#allocation4 + $0x130] sm:$0xff] %v669
        %747 = vst [vmem:[#allocation4 + $0x138] sm:$0xff] %v669
        %748 = vst [vmem:[#allocation4 + $0x140] sm:$0xff] %v670
        %749 = vst [vmem:[#allocation4 + $0x148] sm:$0xff] %v670
        %750 = vst [vmem:[#allocation4 + $0x150] sm:$0xff] %v670
        %751 = vst [vmem:[#allocation4 + $0x158] sm:$0xff] %v670
        %752 = vst [vmem:[#allocation4 + $0x160] sm:$0xff] %v671
        %753 = vst [vmem:[#allocation4 + $0x168] sm:$0xff] %v671
        %754 = vst [vmem:[#allocation4 + $0x170] sm:$0xff] %v671
        %755 = vst [vmem:[#allocation4 + $0x178] sm:$0xff] %v671
        %756 = vst [vmem:[#allocation4 + $0x180] sm:$0xff] %v672
        %757 = vst [vmem:[#allocation4 + $0x188] sm:$0xff] %v672
        %758 = vst [vmem:[#allocation4 + $0x190] sm:$0xff] %v672
        %759 = vst [vmem:[#allocation4 + $0x198] sm:$0xff] %v672
        %760 = vst [vmem:[#allocation4 + $0x1a0] sm:$0xff] %v673
        %761 = vst [vmem:[#allocation4 + $0x1a8] sm:$0xff] %v673
        %762 = vst [vmem:[#allocation4 + $0x1b0] sm:$0xff] %v673
        %763 = vst [vmem:[#allocation4 + $0x1b8] sm:$0xff] %v673
        %764 = vst [vmem:[#allocation4 + $0x1c0] sm:$0xff] %v674
        %765 = vst [vmem:[#allocation4 + $0x1c8] sm:$0xff] %v674
        %766 = vst [vmem:[#allocation4 + $0x1d0] sm:$0xff] %v674
        %767 = vst [vmem:[#allocation4 + $0x1d8] sm:$0xff] %v674
        %768 = vst [vmem:[#allocation4 + $0x1e0] sm:$0xff] %v675
        %769 = vst [vmem:[#allocation4 + $0x1e8] sm:$0xff] %v675
        %770 = vst [vmem:[#allocation4 + $0x1f0] sm:$0xff] %v675
        %771 = vst [vmem:[#allocation4 + $0x1f8] sm:$0xff] %v675
        %772 = vst [vmem:[#allocation4 + $0x200] sm:$0xff] %v676
        %773 = vst [vmem:[#allocation4 + $0x208] sm:$0xff] %v676
        %774 = vst [vmem:[#allocation4 + $0x210] sm:$0xff] %v676
        %775 = vst [vmem:[#allocation4 + $0x218] sm:$0xff] %v676
        %776 = vst [vmem:[#allocation4 + $0x220] sm:$0xff] %v677
        %777 = vst [vmem:[#allocation4 + $0x228] sm:$0xff] %v677
        %778 = vst [vmem:[#allocation4 + $0x230] sm:$0xff] %v677
        %779 = vst [vmem:[#allocation4 + $0x238] sm:$0xff] %v677
        %780 = vst [vmem:[#allocation4 + $0x240] sm:$0xff] %v678
        %781 = vst [vmem:[#allocation4 + $0x248] sm:$0xff] %v678
        %782 = vst [vmem:[#allocation4 + $0x250] sm:$0xff] %v678
        %783 = vst [vmem:[#allocation4 + $0x258] sm:$0xff] %v678
        %784 = vst [vmem:[#allocation4 + $0x260] sm:$0xff] %v679
        %785 = vst [vmem:[#allocation4 + $0x268] sm:$0xff] %v679
        %786 = vst [vmem:[#allocation4 + $0x270] sm:$0xff] %v679
        %787 = vst [vmem:[#allocation4 + $0x278] sm:$0xff] %v679
        %788 = vst [vmem:[#allocation4 + $0x280] sm:$0xff] %v680
        %789 = vst [vmem:[#allocation4 + $0x288] sm:$0xff] %v680
        %790 = vst [vmem:[#allocation4 + $0x290] sm:$0xff] %v680
        %791 = vst [vmem:[#allocation4 + $0x298] sm:$0xff] %v680
        %792 = vst [vmem:[#allocation4 + $0x2a0] sm:$0xff] %v681
        %793 = vst [vmem:[#allocation4 + $0x2a8] sm:$0xff] %v681
        %794 = vst [vmem:[#allocation4 + $0x2b0] sm:$0xff] %v681
        %795 = vst [vmem:[#allocation4 + $0x2b8] sm:$0xff] %v681
        %796 = vst [vmem:[#allocation4 + $0x2c0] sm:$0xff] %v682
        %797 = vst [vmem:[#allocation4 + $0x2c8] sm:$0xff] %v682
        %798 = vst [vmem:[#allocation4 + $0x2d0] sm:$0xff] %v682
        %799 = vst [vmem:[#allocation4 + $0x2d8] sm:$0xff] %v682
        %800 = vst [vmem:[#allocation4 + $0x2e0] sm:$0xff] %v683
        %801 = vst [vmem:[#allocation4 + $0x2e8] sm:$0xff] %v683
        %802 = vst [vmem:[#allocation4 + $0x2f0] sm:$0xff] %v683
        %803 = vst [vmem:[#allocation4 + $0x2f8] sm:$0xff] %v683
        %804 = vst [vmem:[#allocation4 + $0x300] sm:$0xff] %v684
        %805 = vst [vmem:[#allocation4 + $0x308] sm:$0xff] %v684
        %806 = vst [vmem:[#allocation4 + $0x310] sm:$0xff] %v684
        %807 = vst [vmem:[#allocation4 + $0x318] sm:$0xff] %v684
        %808 = vst [vmem:[#allocation4 + $0x320] sm:$0xff] %v685
        %809 = vst [vmem:[#allocation4 + $0x328] sm:$0xff] %v685
        %810 = vst [vmem:[#allocation4 + $0x330] sm:$0xff] %v685
        %811 = vst [vmem:[#allocation4 + $0x338] sm:$0xff] %v685
        %812 = vst [vmem:[#allocation4 + $0x340] sm:$0xff] %v686
        %813 = vst [vmem:[#allocation4 + $0x348] sm:$0xff] %v686
        %814 = vst [vmem:[#allocation4 + $0x350] sm:$0xff] %v686
        %815 = vst [vmem:[#allocation4 + $0x358] sm:$0xff] %v686
        %816 = vst [vmem:[#allocation4 + $0x360] sm:$0xff] %v687
        %817 = vst [vmem:[#allocation4 + $0x368] sm:$0xff] %v687
        %818 = vst [vmem:[#allocation4 + $0x370] sm:$0xff] %v687
        %819 = vst [vmem:[#allocation4 + $0x378] sm:$0xff] %v687
        %820 = vst [vmem:[#allocation4 + $0x380] sm:$0xff] %v688
        %821 = vst [vmem:[#allocation4 + $0x388] sm:$0xff] %v688
        %822 = vst [vmem:[#allocation4 + $0x390] sm:$0xff] %v688
        %823 = vst [vmem:[#allocation4 + $0x398] sm:$0xff] %v688
        %824 = vst [vmem:[#allocation4 + $0x3a0] sm:$0xff] %v689
        %825 = vst [vmem:[#allocation4 + $0x3a8] sm:$0xff] %v689
        %826 = vst [vmem:[#allocation4 + $0x3b0] sm:$0xff] %v689
        %827 = vst [vmem:[#allocation4 + $0x3b8] sm:$0xff] %v689
        %828 = vst [vmem:[#allocation4 + $0x3c0] sm:$0xff] %v690
        %829 = vst [vmem:[#allocation4 + $0x3c8] sm:$0xff] %v690
        %830 = vst [vmem:[#allocation4 + $0x3d0] sm:$0xff] %v690
        %831 = vst [vmem:[#allocation4 + $0x3d8] sm:$0xff] %v690
        %832 = vst [vmem:[#allocation4 + $0x3e0] sm:$0xff] %v691
        %833 = vst [vmem:[#allocation4 + $0x3e8] sm:$0xff] %v691
        %834 = vst [vmem:[#allocation4 + $0x3f0] sm:$0xff] %v691
        %835 = vst [vmem:[#allocation4 + $0x3f8] sm:$0xff] %v691
        %836 = vst [vmem:[#allocation4 + $0x400] sm:$0xff] %v692
        %837 = vst [vmem:[#allocation4 + $0x408] sm:$0xff] %v692
        %838 = vst [vmem:[#allocation4 + $0x410] sm:$0xff] %v692
        %839 = vst [vmem:[#allocation4 + $0x418] sm:$0xff] %v692
        %840 = vst [vmem:[#allocation4 + $0x420] sm:$0xff] %v693
        %841 = vst [vmem:[#allocation4 + $0x428] sm:$0xff] %v693
        %842 = vst [vmem:[#allocation4 + $0x430] sm:$0xff] %v693
        %843 = vst [vmem:[#allocation4 + $0x438] sm:$0xff] %v693
        %844 = vst [vmem:[#allocation4 + $0x440] sm:$0xff] %v694
        %845 = vst [vmem:[#allocation4 + $0x448] sm:$0xff] %v694
        %846 = vst [vmem:[#allocation4 + $0x450] sm:$0xff] %v694
        %847 = vst [vmem:[#allocation4 + $0x458] sm:$0xff] %v694
        %848 = vst [vmem:[#allocation4 + $0x460] sm:$0xff] %v695
        %849 = vst [vmem:[#allocation4 + $0x468] sm:$0xff] %v695
        %850 = vst [vmem:[#allocation4 + $0x470] sm:$0xff] %v695
        %851 = vst [vmem:[#allocation4 + $0x478] sm:$0xff] %v695
        %852 = vst [vmem:[#allocation4 + $0x480] sm:$0xff] %v696
        %853 = vst [vmem:[#allocation4 + $0x488] sm:$0xff] %v696
        %854 = vst [vmem:[#allocation4 + $0x490] sm:$0xff] %v696
        %855 = vst [vmem:[#allocation4 + $0x498] sm:$0xff] %v696
        %856 = vst [vmem:[#allocation4 + $0x4a0] sm:$0xff] %v697
        %857 = vst [vmem:[#allocation4 + $0x4a8] sm:$0xff] %v697
        %858 = vst [vmem:[#allocation4 + $0x4b0] sm:$0xff] %v697
        %859 = vst [vmem:[#allocation4 + $0x4b8] sm:$0xff] %v697
        %860 = vst [vmem:[#allocation4 + $0x4c0] sm:$0xff] %v698
        %861 = vst [vmem:[#allocation4 + $0x4c8] sm:$0xff] %v698
        %862 = vst [vmem:[#allocation4 + $0x4d0] sm:$0xff] %v698
        %863 = vst [vmem:[#allocation4 + $0x4d8] sm:$0xff] %v698
        %864 = vst [vmem:[#allocation4 + $0x4e0] sm:$0xff] %v699
        %865 = vst [vmem:[#allocation4 + $0x4e8] sm:$0xff] %v699
        %866 = vst [vmem:[#allocation4 + $0x4f0] sm:$0xff] %v699
        %867 = vst [vmem:[#allocation4 + $0x4f8] sm:$0xff] %v699
        %868 = vst [vmem:[#allocation4 + $0x500] sm:$0xff] %v700
        %869 = vst [vmem:[#allocation4 + $0x508] sm:$0xff] %v700
        %870 = vst [vmem:[#allocation4 + $0x510] sm:$0xff] %v700
        %871 = vst [vmem:[#allocation4 + $0x518] sm:$0xff] %v700
        %872 = vst [vmem:[#allocation4 + $0x520] sm:$0xff] %v701
        %873 = vst [vmem:[#allocation4 + $0x528] sm:$0xff] %v701
        %874 = vst [vmem:[#allocation4 + $0x530] sm:$0xff] %v701
        %875 = vst [vmem:[#allocation4 + $0x538] sm:$0xff] %v701
        %876 = vst [vmem:[#allocation4 + $0x540] sm:$0xff] %v702
        %877 = vst [vmem:[#allocation4 + $0x548] sm:$0xff] %v702
        %878 = vst [vmem:[#allocation4 + $0x550] sm:$0xff] %v702
        %879 = vst [vmem:[#allocation4 + $0x558] sm:$0xff] %v702
        %880 = vst [vmem:[#allocation4 + $0x560] sm:$0xff] %v703
        %881 = vst [vmem:[#allocation4 + $0x568] sm:$0xff] %v703
        %882 = vst [vmem:[#allocation4 + $0x570] sm:$0xff] %v703
        %883 = vst [vmem:[#allocation4 + $0x578] sm:$0xff] %v703
        %884 = vst [vmem:[#allocation4 + $0x580] sm:$0xff] %v704
        %885 = vst [vmem:[#allocation4 + $0x588] sm:$0xff] %v704
        %886 = vst [vmem:[#allocation4 + $0x590] sm:$0xff] %v704
        %887 = vst [vmem:[#allocation4 + $0x598] sm:$0xff] %v704
        %888 = vst [vmem:[#allocation4 + $0x5a0] sm:$0xff] %v705
        %889 = vst [vmem:[#allocation4 + $0x5a8] sm:$0xff] %v705
        %890 = vst [vmem:[#allocation4 + $0x5b0] sm:$0xff] %v705
        %891 = vst [vmem:[#allocation4 + $0x5b8] sm:$0xff] %v705
        %892 = vst [vmem:[#allocation4 + $0x5c0] sm:$0xff] %v706
        %893 = vst [vmem:[#allocation4 + $0x5c8] sm:$0xff] %v706
        %894 = vst [vmem:[#allocation4 + $0x5d0] sm:$0xff] %v706
        %895 = vst [vmem:[#allocation4 + $0x5d8] sm:$0xff] %v706
        %896 = vst [vmem:[#allocation4 + $0x5e0] sm:$0xff] %v707
        %897 = vst [vmem:[#allocation4 + $0x5e8] sm:$0xff] %v707
        %898 = vst [vmem:[#allocation4 + $0x5f0] sm:$0xff] %v707
        %899 = vst [vmem:[#allocation4 + $0x5f8] sm:$0xff] %v707
      $region60: #{gine_conv_forward.1} parent=55 // pred_fallthru
        _
      %v900 = vld [vmem:[%s354] sm:$0xff]
      %v901 = vld [vmem:[%s354 + $0x8] sm:$0xff]
      %v902 = vld [vmem:[%s354 + $0x10] sm:$0xff]
      %v903 = vld [vmem:[%s354 + $0x18] sm:$0xff]
      %v904 = vld [vmem:[%s354 + $0x20] sm:$0xff]
      %v905 = vld [vmem:[%s354 + $0x28] sm:$0xff]
      %v906 = vld [vmem:[%s354 + $0x30] sm:$0xff]
      %v907 = vld [vmem:[%s354 + $0x38] sm:$0xff]
      %v908 = vld [vmem:[%s354 + $0x40] sm:$0xff]
      %v909 = vld [vmem:[%s354 + $0x48] sm:$0xff]
      %v910 = vld [vmem:[%s354 + $0x50] sm:$0xff]
      %v911 = vld [vmem:[%s354 + $0x58] sm:$0xff]
      %v912 = vld [vmem:[%s354 + $0x60] sm:$0xff]
      %v913 = vld [vmem:[%s354 + $0x68] sm:$0xff]
      %v914 = vld [vmem:[%s354 + $0x70] sm:$0xff]
      %v915 = vld [vmem:[%s354 + $0x78] sm:$0xff]
      %v916 = vld [vmem:[%s354 + $0x80] sm:$0xff]
      %v917 = vld [vmem:[%s354 + $0x88] sm:$0xff]
      %v918 = vld [vmem:[%s354 + $0x90] sm:$0xff]
      %v919 = vld [vmem:[%s354 + $0x98] sm:$0xff]
      %v920 = vld [vmem:[%s354 + $0xa0] sm:$0xff]
      %v921 = vld [vmem:[%s354 + $0xa8] sm:$0xff]
      %v922 = vld [vmem:[%s354 + $0xb0] sm:$0xff]
      %v923 = vld [vmem:[%s354 + $0xb8] sm:$0xff]
      %v924 = vld [vmem:[%s354 + $0xc0] sm:$0xff]
      %v925 = vld [vmem:[%s354 + $0xc8] sm:$0xff]
      %v926 = vld [vmem:[%s354 + $0xd0] sm:$0xff]
      %v927 = vld [vmem:[%s354 + $0xd8] sm:$0xff]
      %v928 = vld [vmem:[%s354 + $0xe0] sm:$0xff]
      %v929 = vld [vmem:[%s354 + $0xe8] sm:$0xff]
      %v930 = vld [vmem:[%s354 + $0xf0] sm:$0xff]
      %v931 = vld [vmem:[%s354 + $0xf8] sm:$0xff]
      %v932 = vld [vmem:[%s354 + $0x100] sm:$0xff]
      %v933 = vld [vmem:[%s354 + $0x108] sm:$0xff]
      %v934 = vld [vmem:[%s354 + $0x110] sm:$0xff]
      %v935 = vld [vmem:[%s354 + $0x118] sm:$0xff]
      %v936 = vld [vmem:[%s354 + $0x120] sm:$0xff]
      %v937 = vld [vmem:[%s354 + $0x128] sm:$0xff]
      %v938 = vld [vmem:[%s354 + $0x130] sm:$0xff]
      %v939 = vld [vmem:[%s354 + $0x138] sm:$0xff]
      %v940 = vld [vmem:[%s354 + $0x140] sm:$0xff]
      %v941 = vld [vmem:[%s354 + $0x148] sm:$0xff]
      %v942 = vld [vmem:[%s354 + $0x150] sm:$0xff]
      %v943 = vld [vmem:[%s354 + $0x158] sm:$0xff]
      %v944 = vld [vmem:[%s354 + $0x160] sm:$0xff]
      %v945 = vld [vmem:[%s354 + $0x168] sm:$0xff]
      %v946 = vld [vmem:[%s354 + $0x170] sm:$0xff]
      %v947 = vld [vmem:[%s354 + $0x178] sm:$0xff]
      %v948 = vld [vmem:[%s354 + $0x180] sm:$0xff]
      %v949 = vld [vmem:[%s354 + $0x188] sm:$0xff]
      %v950 = vld [vmem:[%s354 + $0x190] sm:$0xff]
      %v951 = vld [vmem:[%s354 + $0x198] sm:$0xff]
      %v952 = vld [vmem:[%s354 + $0x1a0] sm:$0xff]
      %v953 = vld [vmem:[%s354 + $0x1a8] sm:$0xff]
      %v954 = vld [vmem:[%s354 + $0x1b0] sm:$0xff]
      %v955 = vld [vmem:[%s354 + $0x1b8] sm:$0xff]
      %v956 = vld [vmem:[%s354 + $0x1c0] sm:$0xff]
      %v957 = vld [vmem:[%s354 + $0x1c8] sm:$0xff]
      %v958 = vld [vmem:[%s354 + $0x1d0] sm:$0xff]
      %v959 = vld [vmem:[%s354 + $0x1d8] sm:$0xff]
      %v960 = vld [vmem:[%s354 + $0x1e0] sm:$0xff]
      %v961 = vld [vmem:[%s354 + $0x1e8] sm:$0xff]
      %v962 = vld [vmem:[%s354 + $0x1f0] sm:$0xff]
      %v963 = vld [vmem:[%s354 + $0x1f8] sm:$0xff]
      %v964 = vld [vmem:[#allocation3] sm:$0xff]
      %v965 = vld [vmem:[#allocation3 + $0x8] sm:$0xff]
      %v966 = vld [vmem:[#allocation3 + $0x10] sm:$0xff]
      %v967 = vld [vmem:[#allocation3 + $0x18] sm:$0xff]
      %v968 = vld [vmem:[#allocation3 + $0x20] sm:$0xff]
      %v969 = vld [vmem:[#allocation3 + $0x28] sm:$0xff]
      %v970 = vld [vmem:[#allocation3 + $0x30] sm:$0xff]
      %v971 = vld [vmem:[#allocation3 + $0x38] sm:$0xff]
      %v972 = vld [vmem:[#allocation3 + $0x40] sm:$0xff]
      %v973 = vld [vmem:[#allocation3 + $0x48] sm:$0xff]
      %v974 = vld [vmem:[#allocation3 + $0x50] sm:$0xff]
      %v975 = vld [vmem:[#allocation3 + $0x58] sm:$0xff]
      %v976 = vld [vmem:[#allocation3 + $0x60] sm:$0xff]
      %v977 = vld [vmem:[#allocation3 + $0x68] sm:$0xff]
      %v978 = vld [vmem:[#allocation3 + $0x70] sm:$0xff]
      %v979 = vld [vmem:[#allocation3 + $0x78] sm:$0xff]
      %v980 = vld [vmem:[#allocation3 + $0x80] sm:$0xff]
      %v981 = vld [vmem:[#allocation3 + $0x88] sm:$0xff]
      %v982 = vld [vmem:[#allocation3 + $0x90] sm:$0xff]
      %v983 = vld [vmem:[#allocation3 + $0x98] sm:$0xff]
      %v984 = vld [vmem:[#allocation3 + $0xa0] sm:$0xff]
      %v985 = vld [vmem:[#allocation3 + $0xa8] sm:$0xff]
      %v986 = vld [vmem:[#allocation3 + $0xb0] sm:$0xff]
      %v987 = vld [vmem:[#allocation3 + $0xb8] sm:$0xff]
      %v988 = vld [vmem:[#allocation3 + $0xc0] sm:$0xff]
      %v989 = vld [vmem:[#allocation3 + $0xc8] sm:$0xff]
      %v990 = vld [vmem:[#allocation3 + $0xd0] sm:$0xff]
      %v991 = vld [vmem:[#allocation3 + $0xd8] sm:$0xff]
      %v992 = vld [vmem:[#allocation3 + $0xe0] sm:$0xff]
      %v993 = vld [vmem:[#allocation3 + $0xe8] sm:$0xff]
      %v994 = vld [vmem:[#allocation3 + $0xf0] sm:$0xff]
      %v995 = vld [vmem:[#allocation3 + $0xf8] sm:$0xff]
      %v996 = vld [vmem:[#allocation3 + $0x100] sm:$0xff]
      %v997 = vld [vmem:[#allocation3 + $0x108] sm:$0xff]
      %v998 = vld [vmem:[#allocation3 + $0x110] sm:$0xff]
      %v999 = vld [vmem:[#allocation3 + $0x118] sm:$0xff]
      %v1000 = vld [vmem:[#allocation3 + $0x120] sm:$0xff]
      %v1001 = vld [vmem:[#allocation3 + $0x128] sm:$0xff]
      %v1002 = vld [vmem:[#allocation3 + $0x130] sm:$0xff]
      %v1003 = vld [vmem:[#allocation3 + $0x138] sm:$0xff]
      %v1004 = vld [vmem:[#allocation3 + $0x140] sm:$0xff]
      %v1005 = vld [vmem:[#allocation3 + $0x148] sm:$0xff]
      %v1006 = vld [vmem:[#allocation3 + $0x150] sm:$0xff]
      %v1007 = vld [vmem:[#allocation3 + $0x158] sm:$0xff]
      %v1008 = vld [vmem:[#allocation3 + $0x160] sm:$0xff]
      %v1009 = vld [vmem:[#allocation3 + $0x168] sm:$0xff]
      %v1010 = vld [vmem:[#allocation3 + $0x170] sm:$0xff]
      %v1011 = vld [vmem:[#allocation3 + $0x178] sm:$0xff]
      %v1012 = vld [vmem:[#allocation3 + $0x180] sm:$0xff]
      %v1013 = vld [vmem:[#allocation3 + $0x188] sm:$0xff]
      %v1014 = vld [vmem:[#allocation3 + $0x190] sm:$0xff]
      %v1015 = vld [vmem:[#allocation3 + $0x198] sm:$0xff]
      %v1016 = vld [vmem:[#allocation3 + $0x1a0] sm:$0xff]
      %v1017 = vld [vmem:[#allocation3 + $0x1a8] sm:$0xff]
      %v1018 = vld [vmem:[#allocation3 + $0x1b0] sm:$0xff]
      %v1019 = vld [vmem:[#allocation3 + $0x1b8] sm:$0xff]
      %v1020 = vld [vmem:[#allocation3 + $0x1c0] sm:$0xff]
      %v1021 = vld [vmem:[#allocation3 + $0x1c8] sm:$0xff]
      %v1022 = vld [vmem:[#allocation3 + $0x1d0] sm:$0xff]
      %v1023 = vld [vmem:[#allocation3 + $0x1d8] sm:$0xff]
      %v1024 = vld [vmem:[#allocation3 + $0x1e0] sm:$0xff]
      %v1025 = vld [vmem:[#allocation3 + $0x1e8] sm:$0xff]
      %v1026 = vld [vmem:[#allocation3 + $0x1f0] sm:$0xff]
      %v1027 = vld [vmem:[#allocation3 + $0x1f8] sm:$0xff]
      %v1028 = vld [vmem:[#allocation3 + $0x200] sm:$0xff]
      %v1029 = vld [vmem:[#allocation3 + $0x208] sm:$0xff]
      %v1030 = vld [vmem:[#allocation3 + $0x210] sm:$0xff]
      %v1031 = vld [vmem:[#allocation3 + $0x218] sm:$0xff]
      %v1032 = vld [vmem:[#allocation3 + $0x220] sm:$0xff]
      %v1033 = vld [vmem:[#allocation3 + $0x228] sm:$0xff]
      %v1034 = vld [vmem:[#allocation3 + $0x230] sm:$0xff]
      %v1035 = vld [vmem:[#allocation3 + $0x238] sm:$0xff]
      %v1036 = vld [vmem:[#allocation3 + $0x240] sm:$0xff]
      %v1037 = vld [vmem:[#allocation3 + $0x248] sm:$0xff]
      %v1038 = vld [vmem:[#allocation3 + $0x250] sm:$0xff]
      %v1039 = vld [vmem:[#allocation3 + $0x258] sm:$0xff]
      %v1040 = vld [vmem:[#allocation3 + $0x260] sm:$0xff]
      %v1041 = vld [vmem:[#allocation3 + $0x268] sm:$0xff]
      %v1042 = vld [vmem:[#allocation3 + $0x270] sm:$0xff]
      %v1043 = vld [vmem:[#allocation3 + $0x278] sm:$0xff]
      %v1044 = vld [vmem:[#allocation3 + $0x280] sm:$0xff]
      %v1045 = vld [vmem:[#allocation3 + $0x288] sm:$0xff]
      %v1046 = vld [vmem:[#allocation3 + $0x290] sm:$0xff]
      %v1047 = vld [vmem:[#allocation3 + $0x298] sm:$0xff]
      %v1048 = vld [vmem:[#allocation3 + $0x2a0] sm:$0xff]
      %v1049 = vld [vmem:[#allocation3 + $0x2a8] sm:$0xff]
      %v1050 = vld [vmem:[#allocation3 + $0x2b0] sm:$0xff]
      %v1051 = vld [vmem:[#allocation3 + $0x2b8] sm:$0xff]
      %v1052 = vld [vmem:[#allocation3 + $0x2c0] sm:$0xff]
      %v1053 = vld [vmem:[#allocation3 + $0x2c8] sm:$0xff]
      %v1054 = vld [vmem:[#allocation3 + $0x2d0] sm:$0xff]
      %v1055 = vld [vmem:[#allocation3 + $0x2d8] sm:$0xff]
      %v1056 = vld [vmem:[#allocation3 + $0x2e0] sm:$0xff]
      %v1057 = vld [vmem:[#allocation3 + $0x2e8] sm:$0xff]
      %v1058 = vld [vmem:[#allocation3 + $0x2f0] sm:$0xff]
      %v1059 = vld [vmem:[#allocation3 + $0x2f8] sm:$0xff]
      %v1060 = vld [vmem:[#allocation3 + $0x300] sm:$0xff]
      %v1061 = vld [vmem:[#allocation3 + $0x308] sm:$0xff]
      %v1062 = vld [vmem:[#allocation3 + $0x310] sm:$0xff]
      %v1063 = vld [vmem:[#allocation3 + $0x318] sm:$0xff]
      %v1064 = vld [vmem:[#allocation3 + $0x320] sm:$0xff]
      %v1065 = vld [vmem:[#allocation3 + $0x328] sm:$0xff]
      %v1066 = vld [vmem:[#allocation3 + $0x330] sm:$0xff]
      %v1067 = vld [vmem:[#allocation3 + $0x338] sm:$0xff]
      %v1068 = vld [vmem:[#allocation3 + $0x340] sm:$0xff]
      %v1069 = vld [vmem:[#allocation3 + $0x348] sm:$0xff]
      %v1070 = vld [vmem:[#allocation3 + $0x350] sm:$0xff]
      %v1071 = vld [vmem:[#allocation3 + $0x358] sm:$0xff]
      %v1072 = vld [vmem:[#allocation3 + $0x360] sm:$0xff]
      %v1073 = vld [vmem:[#allocation3 + $0x368] sm:$0xff]
      %v1074 = vld [vmem:[#allocation3 + $0x370] sm:$0xff]
      %v1075 = vld [vmem:[#allocation3 + $0x378] sm:$0xff]
      %v1076 = vld [vmem:[#allocation3 + $0x380] sm:$0xff]
      %v1077 = vld [vmem:[#allocation3 + $0x388] sm:$0xff]
      %v1078 = vld [vmem:[#allocation3 + $0x390] sm:$0xff]
      %v1079 = vld [vmem:[#allocation3 + $0x398] sm:$0xff]
      %v1080 = vld [vmem:[#allocation3 + $0x3a0] sm:$0xff]
      %v1081 = vld [vmem:[#allocation3 + $0x3a8] sm:$0xff]
      %v1082 = vld [vmem:[#allocation3 + $0x3b0] sm:$0xff]
      %v1083 = vld [vmem:[#allocation3 + $0x3b8] sm:$0xff]
      %v1084 = vld [vmem:[#allocation3 + $0x3c0] sm:$0xff]
      %v1085 = vld [vmem:[#allocation3 + $0x3c8] sm:$0xff]
      %v1086 = vld [vmem:[#allocation3 + $0x3d0] sm:$0xff]
      %v1087 = vld [vmem:[#allocation3 + $0x3d8] sm:$0xff]
      %v1088 = vld [vmem:[#allocation3 + $0x3e0] sm:$0xff]
      %v1089 = vld [vmem:[#allocation3 + $0x3e8] sm:$0xff]
      %v1090 = vld [vmem:[#allocation3 + $0x3f0] sm:$0xff]
      %v1091 = vld [vmem:[#allocation3 + $0x3f8] sm:$0xff]
      %v1092 = vld [vmem:[#allocation3 + $0x400] sm:$0xff]
      %v1093 = vld [vmem:[#allocation3 + $0x408] sm:$0xff]
      %v1094 = vld [vmem:[#allocation3 + $0x410] sm:$0xff]
      %v1095 = vld [vmem:[#allocation3 + $0x418] sm:$0xff]
      %v1096 = vld [vmem:[#allocation3 + $0x420] sm:$0xff]
      %v1097 = vld [vmem:[#allocation3 + $0x428] sm:$0xff]
      %v1098 = vld [vmem:[#allocation3 + $0x430] sm:$0xff]
      %v1099 = vld [vmem:[#allocation3 + $0x438] sm:$0xff]
      %v1100 = vld [vmem:[#allocation3 + $0x440] sm:$0xff]
      %v1101 = vld [vmem:[#allocation3 + $0x448] sm:$0xff]
      %v1102 = vld [vmem:[#allocation3 + $0x450] sm:$0xff]
      %v1103 = vld [vmem:[#allocation3 + $0x458] sm:$0xff]
      %v1104 = vld [vmem:[#allocation3 + $0x460] sm:$0xff]
      %v1105 = vld [vmem:[#allocation3 + $0x468] sm:$0xff]
      %v1106 = vld [vmem:[#allocation3 + $0x470] sm:$0xff]
      %v1107 = vld [vmem:[#allocation3 + $0x478] sm:$0xff]
      %v1108 = vld [vmem:[#allocation3 + $0x480] sm:$0xff]
      %v1109 = vld [vmem:[#allocation3 + $0x488] sm:$0xff]
      %v1110 = vld [vmem:[#allocation3 + $0x490] sm:$0xff]
      %v1111 = vld [vmem:[#allocation3 + $0x498] sm:$0xff]
      %v1112 = vld [vmem:[#allocation3 + $0x4a0] sm:$0xff]
      %v1113 = vld [vmem:[#allocation3 + $0x4a8] sm:$0xff]
      %v1114 = vld [vmem:[#allocation3 + $0x4b0] sm:$0xff]
      %v1115 = vld [vmem:[#allocation3 + $0x4b8] sm:$0xff]
      %v1116 = vld [vmem:[#allocation3 + $0x4c0] sm:$0xff]
      %v1117 = vld [vmem:[#allocation3 + $0x4c8] sm:$0xff]
      %v1118 = vld [vmem:[#allocation3 + $0x4d0] sm:$0xff]
      %v1119 = vld [vmem:[#allocation3 + $0x4d8] sm:$0xff]
      %v1120 = vld [vmem:[#allocation3 + $0x4e0] sm:$0xff]
      %v1121 = vld [vmem:[#allocation3 + $0x4e8] sm:$0xff]
      %v1122 = vld [vmem:[#allocation3 + $0x4f0] sm:$0xff]
      %v1123 = vld [vmem:[#allocation3 + $0x4f8] sm:$0xff]
      %v1124 = vld [vmem:[#allocation3 + $0x500] sm:$0xff]
      %v1125 = vld [vmem:[#allocation3 + $0x508] sm:$0xff]
      %v1126 = vld [vmem:[#allocation3 + $0x510] sm:$0xff]
      %v1127 = vld [vmem:[#allocation3 + $0x518] sm:$0xff]
      %v1128 = vld [vmem:[#allocation3 + $0x520] sm:$0xff]
      %v1129 = vld [vmem:[#allocation3 + $0x528] sm:$0xff]
      %v1130 = vld [vmem:[#allocation3 + $0x530] sm:$0xff]
      %v1131 = vld [vmem:[#allocation3 + $0x538] sm:$0xff]
      %v1132 = vld [vmem:[#allocation3 + $0x540] sm:$0xff]
      %v1133 = vld [vmem:[#allocation3 + $0x548] sm:$0xff]
      %v1134 = vld [vmem:[#allocation3 + $0x550] sm:$0xff]
      %v1135 = vld [vmem:[#allocation3 + $0x558] sm:$0xff]
      %v1136 = vld [vmem:[#allocation3 + $0x560] sm:$0xff]
      %v1137 = vld [vmem:[#allocation3 + $0x568] sm:$0xff]
      %v1138 = vld [vmem:[#allocation3 + $0x570] sm:$0xff]
      %v1139 = vld [vmem:[#allocation3 + $0x578] sm:$0xff]
      %v1140 = vld [vmem:[#allocation3 + $0x580] sm:$0xff]
      %v1141 = vld [vmem:[#allocation3 + $0x588] sm:$0xff]
      %v1142 = vld [vmem:[#allocation3 + $0x590] sm:$0xff]
      %v1143 = vld [vmem:[#allocation3 + $0x598] sm:$0xff]
      %v1144 = vld [vmem:[#allocation3 + $0x5a0] sm:$0xff]
      %v1145 = vld [vmem:[#allocation3 + $0x5a8] sm:$0xff]
      %v1146 = vld [vmem:[#allocation3 + $0x5b0] sm:$0xff]
      %v1147 = vld [vmem:[#allocation3 + $0x5b8] sm:$0xff]
      %v1148 = vld [vmem:[#allocation3 + $0x5c0] sm:$0xff]
      %v1149 = vld [vmem:[#allocation3 + $0x5c8] sm:$0xff]
      %v1150 = vld [vmem:[#allocation3 + $0x5d0] sm:$0xff]
      %v1151 = vld [vmem:[#allocation3 + $0x5d8] sm:$0xff]
      %v1152 = vld [vmem:[#allocation3 + $0x5e0] sm:$0xff]
      %v1153 = vld [vmem:[#allocation3 + $0x5e8] sm:$0xff]
      %v1154 = vld [vmem:[#allocation3 + $0x5f0] sm:$0xff]
      %v1155 = vld [vmem:[#allocation3 + $0x5f8] sm:$0xff]
      %1156 = vset.pattern.permute.xlu0 0
      %1157 = vperm.xlu0 %1156, %v900
      %v1158 = vpop.permute.xlu0 %1157
      %1159 = vset.pattern.permute.xlu0 0
      %1160 = vperm.xlu0 %1159, %v901
      %v1161 = vpop.permute.xlu0 %1160
      %1162 = vset.pattern.permute.xlu0 0
      %1163 = vperm.xlu0 %1162, %v902
      %v1164 = vpop.permute.xlu0 %1163
      %1165 = vset.pattern.permute.xlu0 0
      %1166 = vperm.xlu0 %1165, %v903
      %v1167 = vpop.permute.xlu0 %1166
      %1168 = vset.pattern.permute.xlu0 0
      %1169 = vperm.xlu0 %1168, %v904
      %v1170 = vpop.permute.xlu0 %1169
      %1171 = vset.pattern.permute.xlu0 0
      %1172 = vperm.xlu0 %1171, %v905
      %v1173 = vpop.permute.xlu0 %1172
      %1174 = vset.pattern.permute.xlu0 0
      %1175 = vperm.xlu0 %1174, %v906
      %v1176 = vpop.permute.xlu0 %1175
      %1177 = vset.pattern.permute.xlu0 0
      %1178 = vperm.xlu0 %1177, %v907
      %v1179 = vpop.permute.xlu0 %1178
      %1180 = vset.pattern.permute.xlu0 0
      %1181 = vperm.xlu0 %1180, %v908
      %v1182 = vpop.permute.xlu0 %1181
      %1183 = vset.pattern.permute.xlu0 0
      %1184 = vperm.xlu0 %1183, %v909
      %v1185 = vpop.permute.xlu0 %1184
      %1186 = vset.pattern.permute.xlu0 0
      %1187 = vperm.xlu0 %1186, %v910
      %v1188 = vpop.permute.xlu0 %1187
      %1189 = vset.pattern.permute.xlu0 0
      %1190 = vperm.xlu0 %1189, %v911
      %v1191 = vpop.permute.xlu0 %1190
      %1192 = vset.pattern.permute.xlu0 0
      %1193 = vperm.xlu0 %1192, %v912
      %v1194 = vpop.permute.xlu0 %1193
      %1195 = vset.pattern.permute.xlu0 0
      %1196 = vperm.xlu0 %1195, %v913
      %v1197 = vpop.permute.xlu0 %1196
      %1198 = vset.pattern.permute.xlu0 0
      %1199 = vperm.xlu0 %1198, %v914
      %v1200 = vpop.permute.xlu0 %1199
      %1201 = vset.pattern.permute.xlu0 0
      %1202 = vperm.xlu0 %1201, %v915
      %v1203 = vpop.permute.xlu0 %1202
      %1204 = vset.pattern.permute.xlu0 0
      %1205 = vperm.xlu0 %1204, %v916
      %v1206 = vpop.permute.xlu0 %1205
      %1207 = vset.pattern.permute.xlu0 0
      %1208 = vperm.xlu0 %1207, %v917
      %v1209 = vpop.permute.xlu0 %1208
      %1210 = vset.pattern.permute.xlu0 0
      %1211 = vperm.xlu0 %1210, %v918
      %v1212 = vpop.permute.xlu0 %1211
      %1213 = vset.pattern.permute.xlu0 0
      %1214 = vperm.xlu0 %1213, %v919
      %v1215 = vpop.permute.xlu0 %1214
      %1216 = vset.pattern.permute.xlu0 0
      %1217 = vperm.xlu0 %1216, %v920
      %v1218 = vpop.permute.xlu0 %1217
      %1219 = vset.pattern.permute.xlu0 0
      %1220 = vperm.xlu0 %1219, %v921
      %v1221 = vpop.permute.xlu0 %1220
      %1222 = vset.pattern.permute.xlu0 0
      %1223 = vperm.xlu0 %1222, %v922
      %v1224 = vpop.permute.xlu0 %1223
      %1225 = vset.pattern.permute.xlu0 0
      %1226 = vperm.xlu0 %1225, %v923
      %v1227 = vpop.permute.xlu0 %1226
      %1228 = vset.pattern.permute.xlu0 0
      %1229 = vperm.xlu0 %1228, %v924
      %v1230 = vpop.permute.xlu0 %1229
      %1231 = vset.pattern.permute.xlu0 0
      %1232 = vperm.xlu0 %1231, %v925
      %v1233 = vpop.permute.xlu0 %1232
      %1234 = vset.pattern.permute.xlu0 0
      %1235 = vperm.xlu0 %1234, %v926
      %v1236 = vpop.permute.xlu0 %1235
      %1237 = vset.pattern.permute.xlu0 0
      %1238 = vperm.xlu0 %1237, %v927
      %v1239 = vpop.permute.xlu0 %1238
      %1240 = vset.pattern.permute.xlu0 0
      %1241 = vperm.xlu0 %1240, %v928
      %v1242 = vpop.permute.xlu0 %1241
      %1243 = vset.pattern.permute.xlu0 0
      %1244 = vperm.xlu0 %1243, %v929
      %v1245 = vpop.permute.xlu0 %1244
      %1246 = vset.pattern.permute.xlu0 0
      %1247 = vperm.xlu0 %1246, %v930
      %v1248 = vpop.permute.xlu0 %1247
      %1249 = vset.pattern.permute.xlu0 0
      %1250 = vperm.xlu0 %1249, %v931
      %v1251 = vpop.permute.xlu0 %1250
      %1252 = vset.pattern.permute.xlu0 0
      %1253 = vperm.xlu0 %1252, %v932
      %v1254 = vpop.permute.xlu0 %1253
      %1255 = vset.pattern.permute.xlu0 0
      %1256 = vperm.xlu0 %1255, %v933
      %v1257 = vpop.permute.xlu0 %1256
      %1258 = vset.pattern.permute.xlu0 0
      %1259 = vperm.xlu0 %1258, %v934
      %v1260 = vpop.permute.xlu0 %1259
      %1261 = vset.pattern.permute.xlu0 0
      %1262 = vperm.xlu0 %1261, %v935
      %v1263 = vpop.permute.xlu0 %1262
      %1264 = vset.pattern.permute.xlu0 0
      %1265 = vperm.xlu0 %1264, %v936
      %v1266 = vpop.permute.xlu0 %1265
      %1267 = vset.pattern.permute.xlu0 0
      %1268 = vperm.xlu0 %1267, %v937
      %v1269 = vpop.permute.xlu0 %1268
      %1270 = vset.pattern.permute.xlu0 0
      %1271 = vperm.xlu0 %1270, %v938
      %v1272 = vpop.permute.xlu0 %1271
      %1273 = vset.pattern.permute.xlu0 0
      %1274 = vperm.xlu0 %1273, %v939
      %v1275 = vpop.permute.xlu0 %1274
      %1276 = vset.pattern.permute.xlu0 0
      %1277 = vperm.xlu0 %1276, %v940
      %v1278 = vpop.permute.xlu0 %1277
      %1279 = vset.pattern.permute.xlu0 0
      %1280 = vperm.xlu0 %1279, %v941
      %v1281 = vpop.permute.xlu0 %1280
      %1282 = vset.pattern.permute.xlu0 0
      %1283 = vperm.xlu0 %1282, %v942
      %v1284 = vpop.permute.xlu0 %1283
      %1285 = vset.pattern.permute.xlu0 0
      %1286 = vperm.xlu0 %1285, %v943
      %v1287 = vpop.permute.xlu0 %1286
      %1288 = vset.pattern.permute.xlu0 0
      %1289 = vperm.xlu0 %1288, %v944
      %v1290 = vpop.permute.xlu0 %1289
      %1291 = vset.pattern.permute.xlu0 0
      %1292 = vperm.xlu0 %1291, %v945
      %v1293 = vpop.permute.xlu0 %1292
      %1294 = vset.pattern.permute.xlu0 0
      %1295 = vperm.xlu0 %1294, %v946
      %v1296 = vpop.permute.xlu0 %1295
      %1297 = vset.pattern.permute.xlu0 0
      %1298 = vperm.xlu0 %1297, %v947
      %v1299 = vpop.permute.xlu0 %1298
      %1300 = vset.pattern.permute.xlu0 0
      %1301 = vperm.xlu0 %1300, %v948
      %v1302 = vpop.permute.xlu0 %1301
      %1303 = vset.pattern.permute.xlu0 0
      %1304 = vperm.xlu0 %1303, %v949
      %v1305 = vpop.permute.xlu0 %1304
      %1306 = vset.pattern.permute.xlu0 0
      %1307 = vperm.xlu0 %1306, %v950
      %v1308 = vpop.permute.xlu0 %1307
      %1309 = vset.pattern.permute.xlu0 0
      %1310 = vperm.xlu0 %1309, %v951
      %v1311 = vpop.permute.xlu0 %1310
      %1312 = vset.pattern.permute.xlu0 0
      %1313 = vperm.xlu0 %1312, %v952
      %v1314 = vpop.permute.xlu0 %1313
      %1315 = vset.pattern.permute.xlu0 0
      %1316 = vperm.xlu0 %1315, %v953
      %v1317 = vpop.permute.xlu0 %1316
      %1318 = vset.pattern.permute.xlu0 0
      %1319 = vperm.xlu0 %1318, %v954
      %v1320 = vpop.permute.xlu0 %1319
      %1321 = vset.pattern.permute.xlu0 0
      %1322 = vperm.xlu0 %1321, %v955
      %v1323 = vpop.permute.xlu0 %1322
      %1324 = vset.pattern.permute.xlu0 0
      %1325 = vperm.xlu0 %1324, %v956
      %v1326 = vpop.permute.xlu0 %1325
      %1327 = vset.pattern.permute.xlu0 0
      %1328 = vperm.xlu0 %1327, %v957
      %v1329 = vpop.permute.xlu0 %1328
      %1330 = vset.pattern.permute.xlu0 0
      %1331 = vperm.xlu0 %1330, %v958
      %v1332 = vpop.permute.xlu0 %1331
      %1333 = vset.pattern.permute.xlu0 0
      %1334 = vperm.xlu0 %1333, %v959
      %v1335 = vpop.permute.xlu0 %1334
      %1336 = vset.pattern.permute.xlu0 0
      %1337 = vperm.xlu0 %1336, %v960
      %v1338 = vpop.permute.xlu0 %1337
      %1339 = vset.pattern.permute.xlu0 0
      %1340 = vperm.xlu0 %1339, %v961
      %v1341 = vpop.permute.xlu0 %1340
      %1342 = vset.pattern.permute.xlu0 0
      %1343 = vperm.xlu0 %1342, %v962
      %v1344 = vpop.permute.xlu0 %1343
      %1345 = vset.pattern.permute.xlu0 0
      %1346 = vperm.xlu0 %1345, %v963
      %v1347 = vpop.permute.xlu0 %1346
      %vm1348 = vcmp.eq.s32.totalorder %v964, %v1158
      %vm1349 = vcmp.eq.s32.totalorder %v965, %v1158
      %vm1350 = vcmp.eq.s32.totalorder %v966, %v1158
      %vm1351 = vcmp.eq.s32.totalorder %v967, %v1161
      %vm1352 = vcmp.eq.s32.totalorder %v968, %v1161
      %vm1353 = vcmp.eq.s32.totalorder %v969, %v1161
      %vm1354 = vcmp.eq.s32.totalorder %v970, %v1164
      %vm1355 = vcmp.eq.s32.totalorder %v971, %v1164
      %vm1356 = vcmp.eq.s32.totalorder %v972, %v1164
      %vm1357 = vcmp.eq.s32.totalorder %v973, %v1167
      %vm1358 = vcmp.eq.s32.totalorder %v974, %v1167
      %vm1359 = vcmp.eq.s32.totalorder %v975, %v1167
      %vm1360 = vcmp.eq.s32.totalorder %v976, %v1170
      %vm1361 = vcmp.eq.s32.totalorder %v977, %v1170
      %vm1362 = vcmp.eq.s32.totalorder %v978, %v1170
      %vm1363 = vcmp.eq.s32.totalorder %v979, %v1173
      %vm1364 = vcmp.eq.s32.totalorder %v980, %v1173
      %vm1365 = vcmp.eq.s32.totalorder %v981, %v1173
      %vm1366 = vcmp.eq.s32.totalorder %v982, %v1176
      %vm1367 = vcmp.eq.s32.totalorder %v983, %v1176
      %vm1368 = vcmp.eq.s32.totalorder %v984, %v1176
      %vm1369 = vcmp.eq.s32.totalorder %v985, %v1179
      %vm1370 = vcmp.eq.s32.totalorder %v986, %v1179
      %vm1371 = vcmp.eq.s32.totalorder %v987, %v1179
      %vm1372 = vcmp.eq.s32.totalorder %v988, %v1182
      %vm1373 = vcmp.eq.s32.totalorder %v989, %v1182
      %vm1374 = vcmp.eq.s32.totalorder %v990, %v1182
      %vm1375 = vcmp.eq.s32.totalorder %v991, %v1185
      %vm1376 = vcmp.eq.s32.totalorder %v992, %v1185
      %vm1377 = vcmp.eq.s32.totalorder %v993, %v1185
      %vm1378 = vcmp.eq.s32.totalorder %v994, %v1188
      %vm1379 = vcmp.eq.s32.totalorder %v995, %v1188
      %vm1380 = vcmp.eq.s32.totalorder %v996, %v1188
      %vm1381 = vcmp.eq.s32.totalorder %v997, %v1191
      %vm1382 = vcmp.eq.s32.totalorder %v998, %v1191
      %vm1383 = vcmp.eq.s32.totalorder %v999, %v1191
      %vm1384 = vcmp.eq.s32.totalorder %v1000, %v1194
      %vm1385 = vcmp.eq.s32.totalorder %v1001, %v1194
      %vm1386 = vcmp.eq.s32.totalorder %v1002, %v1194
      %vm1387 = vcmp.eq.s32.totalorder %v1003, %v1197
      %vm1388 = vcmp.eq.s32.totalorder %v1004, %v1197
      %vm1389 = vcmp.eq.s32.totalorder %v1005, %v1197
      %vm1390 = vcmp.eq.s32.totalorder %v1006, %v1200
      %vm1391 = vcmp.eq.s32.totalorder %v1007, %v1200
      %vm1392 = vcmp.eq.s32.totalorder %v1008, %v1200
      %vm1393 = vcmp.eq.s32.totalorder %v1009, %v1203
      %vm1394 = vcmp.eq.s32.totalorder %v1010, %v1203
      %vm1395 = vcmp.eq.s32.totalorder %v1011, %v1203
      %vm1396 = vcmp.eq.s32.totalorder %v1012, %v1206
      %vm1397 = vcmp.eq.s32.totalorder %v1013, %v1206
      %vm1398 = vcmp.eq.s32.totalorder %v1014, %v1206
      %vm1399 = vcmp.eq.s32.totalorder %v1015, %v1209
      %vm1400 = vcmp.eq.s32.totalorder %v1016, %v1209
      %vm1401 = vcmp.eq.s32.totalorder %v1017, %v1209
      %vm1402 = vcmp.eq.s32.totalorder %v1018, %v1212
      %vm1403 = vcmp.eq.s32.totalorder %v1019, %v1212
      %vm1404 = vcmp.eq.s32.totalorder %v1020, %v1212
      %vm1405 = vcmp.eq.s32.totalorder %v1021, %v1215
      %vm1406 = vcmp.eq.s32.totalorder %v1022, %v1215
      %vm1407 = vcmp.eq.s32.totalorder %v1023, %v1215
      %vm1408 = vcmp.eq.s32.totalorder %v1024, %v1218
      %vm1409 = vcmp.eq.s32.totalorder %v1025, %v1218
      %vm1410 = vcmp.eq.s32.totalorder %v1026, %v1218
      %vm1411 = vcmp.eq.s32.totalorder %v1027, %v1221
      %vm1412 = vcmp.eq.s32.totalorder %v1028, %v1221
      %vm1413 = vcmp.eq.s32.totalorder %v1029, %v1221
      %vm1414 = vcmp.eq.s32.totalorder %v1030, %v1224
      %vm1415 = vcmp.eq.s32.totalorder %v1031, %v1224
      %vm1416 = vcmp.eq.s32.totalorder %v1032, %v1224
      %vm1417 = vcmp.eq.s32.totalorder %v1033, %v1227
      %vm1418 = vcmp.eq.s32.totalorder %v1034, %v1227
      %vm1419 = vcmp.eq.s32.totalorder %v1035, %v1227
      %vm1420 = vcmp.eq.s32.totalorder %v1036, %v1230
      %vm1421 = vcmp.eq.s32.totalorder %v1037, %v1230
      %vm1422 = vcmp.eq.s32.totalorder %v1038, %v1230
      %vm1423 = vcmp.eq.s32.totalorder %v1039, %v1233
      %vm1424 = vcmp.eq.s32.totalorder %v1040, %v1233
      %vm1425 = vcmp.eq.s32.totalorder %v1041, %v1233
      %vm1426 = vcmp.eq.s32.totalorder %v1042, %v1236
      %vm1427 = vcmp.eq.s32.totalorder %v1043, %v1236
      %vm1428 = vcmp.eq.s32.totalorder %v1044, %v1236
      %vm1429 = vcmp.eq.s32.totalorder %v1045, %v1239
      %vm1430 = vcmp.eq.s32.totalorder %v1046, %v1239
      %vm1431 = vcmp.eq.s32.totalorder %v1047, %v1239
      %vm1432 = vcmp.eq.s32.totalorder %v1048, %v1242
      %vm1433 = vcmp.eq.s32.totalorder %v1049, %v1242
      %vm1434 = vcmp.eq.s32.totalorder %v1050, %v1242
      %vm1435 = vcmp.eq.s32.totalorder %v1051, %v1245
      %vm1436 = vcmp.eq.s32.totalorder %v1052, %v1245
      %vm1437 = vcmp.eq.s32.totalorder %v1053, %v1245
      %vm1438 = vcmp.eq.s32.totalorder %v1054, %v1248
      %vm1439 = vcmp.eq.s32.totalorder %v1055, %v1248
      %vm1440 = vcmp.eq.s32.totalorder %v1056, %v1248
      %vm1441 = vcmp.eq.s32.totalorder %v1057, %v1251
      %vm1442 = vcmp.eq.s32.totalorder %v1058, %v1251
      %vm1443 = vcmp.eq.s32.totalorder %v1059, %v1251
      %vm1444 = vcmp.eq.s32.totalorder %v1060, %v1254
      %vm1445 = vcmp.eq.s32.totalorder %v1061, %v1254
      %vm1446 = vcmp.eq.s32.totalorder %v1062, %v1254
      %vm1447 = vcmp.eq.s32.totalorder %v1063, %v1257
      %vm1448 = vcmp.eq.s32.totalorder %v1064, %v1257
      %vm1449 = vcmp.eq.s32.totalorder %v1065, %v1257
      %vm1450 = vcmp.eq.s32.totalorder %v1066, %v1260
      %vm1451 = vcmp.eq.s32.totalorder %v1067, %v1260
      %vm1452 = vcmp.eq.s32.totalorder %v1068, %v1260
      %vm1453 = vcmp.eq.s32.totalorder %v1069, %v1263
      %vm1454 = vcmp.eq.s32.totalorder %v1070, %v1263
      %vm1455 = vcmp.eq.s32.totalorder %v1071, %v1263
      %vm1456 = vcmp.eq.s32.totalorder %v1072, %v1266
      %vm1457 = vcmp.eq.s32.totalorder %v1073, %v1266
      %vm1458 = vcmp.eq.s32.totalorder %v1074, %v1266
      %vm1459 = vcmp.eq.s32.totalorder %v1075, %v1269
      %vm1460 = vcmp.eq.s32.totalorder %v1076, %v1269
      %vm1461 = vcmp.eq.s32.totalorder %v1077, %v1269
      %vm1462 = vcmp.eq.s32.totalorder %v1078, %v1272
      %vm1463 = vcmp.eq.s32.totalorder %v1079, %v1272
      %vm1464 = vcmp.eq.s32.totalorder %v1080, %v1272
      %vm1465 = vcmp.eq.s32.totalorder %v1081, %v1275
      %vm1466 = vcmp.eq.s32.totalorder %v1082, %v1275
      %vm1467 = vcmp.eq.s32.totalorder %v1083, %v1275
      %vm1468 = vcmp.eq.s32.totalorder %v1084, %v1278
      %vm1469 = vcmp.eq.s32.totalorder %v1085, %v1278
      %vm1470 = vcmp.eq.s32.totalorder %v1086, %v1278
      %vm1471 = vcmp.eq.s32.totalorder %v1087, %v1281
      %vm1472 = vcmp.eq.s32.totalorder %v1088, %v1281
      %vm1473 = vcmp.eq.s32.totalorder %v1089, %v1281
      %vm1474 = vcmp.eq.s32.totalorder %v1090, %v1284
      %vm1475 = vcmp.eq.s32.totalorder %v1091, %v1284
      %vm1476 = vcmp.eq.s32.totalorder %v1092, %v1284
      %vm1477 = vcmp.eq.s32.totalorder %v1093, %v1287
      %vm1478 = vcmp.eq.s32.totalorder %v1094, %v1287
      %vm1479 = vcmp.eq.s32.totalorder %v1095, %v1287
      %vm1480 = vcmp.eq.s32.totalorder %v1096, %v1290
      %vm1481 = vcmp.eq.s32.totalorder %v1097, %v1290
      %vm1482 = vcmp.eq.s32.totalorder %v1098, %v1290
      %vm1483 = vcmp.eq.s32.totalorder %v1099, %v1293
      %vm1484 = vcmp.eq.s32.totalorder %v1100, %v1293
      %vm1485 = vcmp.eq.s32.totalorder %v1101, %v1293
      %vm1486 = vcmp.eq.s32.totalorder %v1102, %v1296
      %vm1487 = vcmp.eq.s32.totalorder %v1103, %v1296
      %vm1488 = vcmp.eq.s32.totalorder %v1104, %v1296
      %vm1489 = vcmp.eq.s32.totalorder %v1105, %v1299
      %vm1490 = vcmp.eq.s32.totalorder %v1106, %v1299
      %vm1491 = vcmp.eq.s32.totalorder %v1107, %v1299
      %vm1492 = vcmp.eq.s32.totalorder %v1108, %v1302
      %vm1493 = vcmp.eq.s32.totalorder %v1109, %v1302
      %vm1494 = vcmp.eq.s32.totalorder %v1110, %v1302
      %vm1495 = vcmp.eq.s32.totalorder %v1111, %v1305
      %vm1496 = vcmp.eq.s32.totalorder %v1112, %v1305
      %vm1497 = vcmp.eq.s32.totalorder %v1113, %v1305
      %vm1498 = vcmp.eq.s32.totalorder %v1114, %v1308
      %vm1499 = vcmp.eq.s32.totalorder %v1115, %v1308
      %vm1500 = vcmp.eq.s32.totalorder %v1116, %v1308
      %vm1501 = vcmp.eq.s32.totalorder %v1117, %v1311
      %vm1502 = vcmp.eq.s32.totalorder %v1118, %v1311
      %vm1503 = vcmp.eq.s32.totalorder %v1119, %v1311
      %vm1504 = vcmp.eq.s32.totalorder %v1120, %v1314
      %vm1505 = vcmp.eq.s32.totalorder %v1121, %v1314
      %vm1506 = vcmp.eq.s32.totalorder %v1122, %v1314
      %vm1507 = vcmp.eq.s32.totalorder %v1123, %v1317
      %vm1508 = vcmp.eq.s32.totalorder %v1124, %v1317
      %vm1509 = vcmp.eq.s32.totalorder %v1125, %v1317
      %vm1510 = vcmp.eq.s32.totalorder %v1126, %v1320
      %vm1511 = vcmp.eq.s32.totalorder %v1127, %v1320
      %vm1512 = vcmp.eq.s32.totalorder %v1128, %v1320
      %vm1513 = vcmp.eq.s32.totalorder %v1129, %v1323
      %vm1514 = vcmp.eq.s32.totalorder %v1130, %v1323
      %vm1515 = vcmp.eq.s32.totalorder %v1131, %v1323
      %vm1516 = vcmp.eq.s32.totalorder %v1132, %v1326
      %vm1517 = vcmp.eq.s32.totalorder %v1133, %v1326
      %vm1518 = vcmp.eq.s32.totalorder %v1134, %v1326
      %vm1519 = vcmp.eq.s32.totalorder %v1135, %v1329
      %vm1520 = vcmp.eq.s32.totalorder %v1136, %v1329
      %vm1521 = vcmp.eq.s32.totalorder %v1137, %v1329
      %vm1522 = vcmp.eq.s32.totalorder %v1138, %v1332
      %vm1523 = vcmp.eq.s32.totalorder %v1139, %v1332
      %vm1524 = vcmp.eq.s32.totalorder %v1140, %v1332
      %vm1525 = vcmp.eq.s32.totalorder %v1141, %v1335
      %vm1526 = vcmp.eq.s32.totalorder %v1142, %v1335
      %vm1527 = vcmp.eq.s32.totalorder %v1143, %v1335
      %vm1528 = vcmp.eq.s32.totalorder %v1144, %v1338
      %vm1529 = vcmp.eq.s32.totalorder %v1145, %v1338
      %vm1530 = vcmp.eq.s32.totalorder %v1146, %v1338
      %vm1531 = vcmp.eq.s32.totalorder %v1147, %v1341
      %vm1532 = vcmp.eq.s32.totalorder %v1148, %v1341
      %vm1533 = vcmp.eq.s32.totalorder %v1149, %v1341
      %vm1534 = vcmp.eq.s32.totalorder %v1150, %v1344
      %vm1535 = vcmp.eq.s32.totalorder %v1151, %v1344
      %vm1536 = vcmp.eq.s32.totalorder %v1152, %v1344
      %vm1537 = vcmp.eq.s32.totalorder %v1153, %v1347
      %vm1538 = vcmp.eq.s32.totalorder %v1154, %v1347
      %vm1539 = vcmp.eq.s32.totalorder %v1155, %v1347
      %v1540 = vsel %vm1348, 1, 0
      %v1541 = vsel %vm1349, 1, 0
      %v1542 = vsel %vm1350, 1, 0
      %v1543 = vsel %vm1351, 1, 0
      %v1544 = vsel %vm1352, 1, 0
      %v1545 = vsel %vm1353, 1, 0
      %v1546 = vsel %vm1354, 1, 0
      %v1547 = vsel %vm1355, 1, 0
      %v1548 = vsel %vm1356, 1, 0
      %v1549 = vsel %vm1357, 1, 0
      %v1550 = vsel %vm1358, 1, 0
      %v1551 = vsel %vm1359, 1, 0
      %v1552 = vsel %vm1360, 1, 0
      %v1553 = vsel %vm1361, 1, 0
      %v1554 = vsel %vm1362, 1, 0
      %v1555 = vsel %vm1363, 1, 0
      %v1556 = vsel %vm1364, 1, 0
      %v1557 = vsel %vm1365, 1, 0
      %v1558 = vsel %vm1366, 1, 0
      %v1559 = vsel %vm1367, 1, 0
      %v1560 = vsel %vm1368, 1, 0
      %v1561 = vsel %vm1369, 1, 0
      %v1562 = vsel %vm1370, 1, 0
      %v1563 = vsel %vm1371, 1, 0
      %v1564 = vsel %vm1372, 1, 0
      %v1565 = vsel %vm1373, 1, 0
      %v1566 = vsel %vm1374, 1, 0
      %v1567 = vsel %vm1375, 1, 0
      %v1568 = vsel %vm1376, 1, 0
      %v1569 = vsel %vm1377, 1, 0
      %v1570 = vsel %vm1378, 1, 0
      %v1571 = vsel %vm1379, 1, 0
      %v1572 = vsel %vm1380, 1, 0
      %v1573 = vsel %vm1381, 1, 0
      %v1574 = vsel %vm1382, 1, 0
      %v1575 = vsel %vm1383, 1, 0
      %v1576 = vsel %vm1384, 1, 0
      %v1577 = vsel %vm1385, 1, 0
      %v1578 = vsel %vm1386, 1, 0
      %v1579 = vsel %vm1387, 1, 0
      %v1580 = vsel %vm1388, 1, 0
      %v1581 = vsel %vm1389, 1, 0
      %v1582 = vsel %vm1390, 1, 0
      %v1583 = vsel %vm1391, 1, 0
      %v1584 = vsel %vm1392, 1, 0
      %v1585 = vsel %vm1393, 1, 0
      %v1586 = vsel %vm1394, 1, 0
      %v1587 = vsel %vm1395, 1, 0
      %v1588 = vsel %vm1396, 1, 0
      %v1589 = vsel %vm1397, 1, 0
      %v1590 = vsel %vm1398, 1, 0
      %v1591 = vsel %vm1399, 1, 0
      %v1592 = vsel %vm1400, 1, 0
      %v1593 = vsel %vm1401, 1, 0
      %v1594 = vsel %vm1402, 1, 0
      %v1595 = vsel %vm1403, 1, 0
      %v1596 = vsel %vm1404, 1, 0
      %v1597 = vsel %vm1405, 1, 0
      %v1598 = vsel %vm1406, 1, 0
      %v1599 = vsel %vm1407, 1, 0
      %v1600 = vsel %vm1408, 1, 0
      %v1601 = vsel %vm1409, 1, 0
      %v1602 = vsel %vm1410, 1, 0
      %v1603 = vsel %vm1411, 1, 0
      %v1604 = vsel %vm1412, 1, 0
      %v1605 = vsel %vm1413, 1, 0
      %v1606 = vsel %vm1414, 1, 0
      %v1607 = vsel %vm1415, 1, 0
      %v1608 = vsel %vm1416, 1, 0
      %v1609 = vsel %vm1417, 1, 0
      %v1610 = vsel %vm1418, 1, 0
      %v1611 = vsel %vm1419, 1, 0
      %v1612 = vsel %vm1420, 1, 0
      %v1613 = vsel %vm1421, 1, 0
      %v1614 = vsel %vm1422, 1, 0
      %v1615 = vsel %vm1423, 1, 0
      %v1616 = vsel %vm1424, 1, 0
      %v1617 = vsel %vm1425, 1, 0
      %v1618 = vsel %vm1426, 1, 0
      %v1619 = vsel %vm1427, 1, 0
      %v1620 = vsel %vm1428, 1, 0
      %v1621 = vsel %vm1429, 1, 0
      %v1622 = vsel %vm1430, 1, 0
      %v1623 = vsel %vm1431, 1, 0
      %v1624 = vsel %vm1432, 1, 0
      %v1625 = vsel %vm1433, 1, 0
      %v1626 = vsel %vm1434, 1, 0
      %v1627 = vsel %vm1435, 1, 0
      %v1628 = vsel %vm1436, 1, 0
      %v1629 = vsel %vm1437, 1, 0
      %v1630 = vsel %vm1438, 1, 0
      %v1631 = vsel %vm1439, 1, 0
      %v1632 = vsel %vm1440, 1, 0
      %v1633 = vsel %vm1441, 1, 0
      %v1634 = vsel %vm1442, 1, 0
      %v1635 = vsel %vm1443, 1, 0
      %v1636 = vsel %vm1444, 1, 0
      %v1637 = vsel %vm1445, 1, 0
      %v1638 = vsel %vm1446, 1, 0
      %v1639 = vsel %vm1447, 1, 0
      %v1640 = vsel %vm1448, 1, 0
      %v1641 = vsel %vm1449, 1, 0
      %v1642 = vsel %vm1450, 1, 0
      %v1643 = vsel %vm1451, 1, 0
      %v1644 = vsel %vm1452, 1, 0
      %v1645 = vsel %vm1453, 1, 0
      %v1646 = vsel %vm1454, 1, 0
      %v1647 = vsel %vm1455, 1, 0
      %v1648 = vsel %vm1456, 1, 0
      %v1649 = vsel %vm1457, 1, 0
      %v1650 = vsel %vm1458, 1, 0
      %v1651 = vsel %vm1459, 1, 0
      %v1652 = vsel %vm1460, 1, 0
      %v1653 = vsel %vm1461, 1, 0
      %v1654 = vsel %vm1462, 1, 0
      %v1655 = vsel %vm1463, 1, 0
      %v1656 = vsel %vm1464, 1, 0
      %v1657 = vsel %vm1465, 1, 0
      %v1658 = vsel %vm1466, 1, 0
      %v1659 = vsel %vm1467, 1, 0
      %v1660 = vsel %vm1468, 1, 0
      %v1661 = vsel %vm1469, 1, 0
      %v1662 = vsel %vm1470, 1, 0
      %v1663 = vsel %vm1471, 1, 0
      %v1664 = vsel %vm1472, 1, 0
      %v1665 = vsel %vm1473, 1, 0
      %v1666 = vsel %vm1474, 1, 0
      %v1667 = vsel %vm1475, 1, 0
      %v1668 = vsel %vm1476, 1, 0
      %v1669 = vsel %vm1477, 1, 0
      %v1670 = vsel %vm1478, 1, 0
      %v1671 = vsel %vm1479, 1, 0
      %v1672 = vsel %vm1480, 1, 0
      %v1673 = vsel %vm1481, 1, 0
      %v1674 = vsel %vm1482, 1, 0
      %v1675 = vsel %vm1483, 1, 0
      %v1676 = vsel %vm1484, 1, 0
      %v1677 = vsel %vm1485, 1, 0
      %v1678 = vsel %vm1486, 1, 0
      %v1679 = vsel %vm1487, 1, 0
      %v1680 = vsel %vm1488, 1, 0
      %v1681 = vsel %vm1489, 1, 0
      %v1682 = vsel %vm1490, 1, 0
      %v1683 = vsel %vm1491, 1, 0
      %v1684 = vsel %vm1492, 1, 0
      %v1685 = vsel %vm1493, 1, 0
      %v1686 = vsel %vm1494, 1, 0
      %v1687 = vsel %vm1495, 1, 0
      %v1688 = vsel %vm1496, 1, 0
      %v1689 = vsel %vm1497, 1, 0
      %v1690 = vsel %vm1498, 1, 0
      %v1691 = vsel %vm1499, 1, 0
      %v1692 = vsel %vm1500, 1, 0
      %v1693 = vsel %vm1501, 1, 0
      %v1694 = vsel %vm1502, 1, 0
      %v1695 = vsel %vm1503, 1, 0
      %v1696 = vsel %vm1504, 1, 0
      %v1697 = vsel %vm1505, 1, 0
      %v1698 = vsel %vm1506, 1, 0
      %v1699 = vsel %vm1507, 1, 0
      %v1700 = vsel %vm1508, 1, 0
      %v1701 = vsel %vm1509, 1, 0
      %v1702 = vsel %vm1510, 1, 0
      %v1703 = vsel %vm1511, 1, 0
      %v1704 = vsel %vm1512, 1, 0
      %v1705 = vsel %vm1513, 1, 0
      %v1706 = vsel %vm1514, 1, 0
      %v1707 = vsel %vm1515, 1, 0
      %v1708 = vsel %vm1516, 1, 0
      %v1709 = vsel %vm1517, 1, 0
      %v1710 = vsel %vm1518, 1, 0
      %v1711 = vsel %vm1519, 1, 0
      %v1712 = vsel %vm1520, 1, 0
      %v1713 = vsel %vm1521, 1, 0
      %v1714 = vsel %vm1522, 1, 0
      %v1715 = vsel %vm1523, 1, 0
      %v1716 = vsel %vm1524, 1, 0
      %v1717 = vsel %vm1525, 1, 0
      %v1718 = vsel %vm1526, 1, 0
      %v1719 = vsel %vm1527, 1, 0
      %v1720 = vsel %vm1528, 1, 0
      %v1721 = vsel %vm1529, 1, 0
      %v1722 = vsel %vm1530, 1, 0
      %v1723 = vsel %vm1531, 1, 0
      %v1724 = vsel %vm1532, 1, 0
      %v1725 = vsel %vm1533, 1, 0
      %v1726 = vsel %vm1534, 1, 0
      %v1727 = vsel %vm1535, 1, 0
      %v1728 = vsel %vm1536, 1, 0
      %v1729 = vsel %vm1537, 1, 0
      %v1730 = vsel %vm1538, 1, 0
      %v1731 = vsel %vm1539, 1, 0
      %v1732 = vcvt.s32.f32 %v1540
      %v1733 = vcvt.s32.f32 %v1541
      %v1734 = vcvt.s32.f32 %v1542
      %v1735 = vcvt.s32.f32 %v1543
      %v1736 = vcvt.s32.f32 %v1544
      %v1737 = vcvt.s32.f32 %v1545
      %v1738 = vcvt.s32.f32 %v1546
      %v1739 = vcvt.s32.f32 %v1547
      %v1740 = vcvt.s32.f32 %v1548
      %v1741 = vcvt.s32.f32 %v1549
      %v1742 = vcvt.s32.f32 %v1550
      %v1743 = vcvt.s32.f32 %v1551
      %v1744 = vcvt.s32.f32 %v1552
      %v1745 = vcvt.s32.f32 %v1553
      %v1746 = vcvt.s32.f32 %v1554
      %v1747 = vcvt.s32.f32 %v1555
      %v1748 = vcvt.s32.f32 %v1556
      %v1749 = vcvt.s32.f32 %v1557
      %v1750 = vcvt.s32.f32 %v1558
      %v1751 = vcvt.s32.f32 %v1559
      %v1752 = vcvt.s32.f32 %v1560
      %v1753 = vcvt.s32.f32 %v1561
      %v1754 = vcvt.s32.f32 %v1562
      %v1755 = vcvt.s32.f32 %v1563
      %v1756 = vcvt.s32.f32 %v1564
      %v1757 = vcvt.s32.f32 %v1565
      %v1758 = vcvt.s32.f32 %v1566
      %v1759 = vcvt.s32.f32 %v1567
      %v1760 = vcvt.s32.f32 %v1568
      %v1761 = vcvt.s32.f32 %v1569
      %v1762 = vcvt.s32.f32 %v1570
      %v1763 = vcvt.s32.f32 %v1571
      %v1764 = vcvt.s32.f32 %v1572
      %v1765 = vcvt.s32.f32 %v1573
      %v1766 = vcvt.s32.f32 %v1574
      %v1767 = vcvt.s32.f32 %v1575
      %v1768 = vcvt.s32.f32 %v1576
      %v1769 = vcvt.s32.f32 %v1577
      %v1770 = vcvt.s32.f32 %v1578
      %v1771 = vcvt.s32.f32 %v1579
      %v1772 = vcvt.s32.f32 %v1580
      %v1773 = vcvt.s32.f32 %v1581
      %v1774 = vcvt.s32.f32 %v1582
      %v1775 = vcvt.s32.f32 %v1583
      %v1776 = vcvt.s32.f32 %v1584
      %v1777 = vcvt.s32.f32 %v1585
      %v1778 = vcvt.s32.f32 %v1586
      %v1779 = vcvt.s32.f32 %v1587
      %v1780 = vcvt.s32.f32 %v1588
      %v1781 = vcvt.s32.f32 %v1589
      %v1782 = vcvt.s32.f32 %v1590
      %v1783 = vcvt.s32.f32 %v1591
      %v1784 = vcvt.s32.f32 %v1592
      %v1785 = vcvt.s32.f32 %v1593
      %v1786 = vcvt.s32.f32 %v1594
      %v1787 = vcvt.s32.f32 %v1595
      %v1788 = vcvt.s32.f32 %v1596
      %v1789 = vcvt.s32.f32 %v1597
      %v1790 = vcvt.s32.f32 %v1598
      %v1791 = vcvt.s32.f32 %v1599
      %v1792 = vcvt.s32.f32 %v1600
      %v1793 = vcvt.s32.f32 %v1601
      %v1794 = vcvt.s32.f32 %v1602
      %v1795 = vcvt.s32.f32 %v1603
      %v1796 = vcvt.s32.f32 %v1604
      %v1797 = vcvt.s32.f32 %v1605
      %v1798 = vcvt.s32.f32 %v1606
      %v1799 = vcvt.s32.f32 %v1607
      %v1800 = vcvt.s32.f32 %v1608
      %v1801 = vcvt.s32.f32 %v1609
      %v1802 = vcvt.s32.f32 %v1610
      %v1803 = vcvt.s32.f32 %v1611
      %v1804 = vcvt.s32.f32 %v1612
      %v1805 = vcvt.s32.f32 %v1613
      %v1806 = vcvt.s32.f32 %v1614
      %v1807 = vcvt.s32.f32 %v1615
      %v1808 = vcvt.s32.f32 %v1616
      %v1809 = vcvt.s32.f32 %v1617
      %v1810 = vcvt.s32.f32 %v1618
      %v1811 = vcvt.s32.f32 %v1619
      %v1812 = vcvt.s32.f32 %v1620
      %v1813 = vcvt.s32.f32 %v1621
      %v1814 = vcvt.s32.f32 %v1622
      %v1815 = vcvt.s32.f32 %v1623
      %v1816 = vcvt.s32.f32 %v1624
      %v1817 = vcvt.s32.f32 %v1625
      %v1818 = vcvt.s32.f32 %v1626
      %v1819 = vcvt.s32.f32 %v1627
      %v1820 = vcvt.s32.f32 %v1628
      %v1821 = vcvt.s32.f32 %v1629
      %v1822 = vcvt.s32.f32 %v1630
      %v1823 = vcvt.s32.f32 %v1631
      %v1824 = vcvt.s32.f32 %v1632
      %v1825 = vcvt.s32.f32 %v1633
      %v1826 = vcvt.s32.f32 %v1634
      %v1827 = vcvt.s32.f32 %v1635
      %v1828 = vcvt.s32.f32 %v1636
      %v1829 = vcvt.s32.f32 %v1637
      %v1830 = vcvt.s32.f32 %v1638
      %v1831 = vcvt.s32.f32 %v1639
      %v1832 = vcvt.s32.f32 %v1640
      %v1833 = vcvt.s32.f32 %v1641
      %v1834 = vcvt.s32.f32 %v1642
      %v1835 = vcvt.s32.f32 %v1643
      %v1836 = vcvt.s32.f32 %v1644
      %v1837 = vcvt.s32.f32 %v1645
      %v1838 = vcvt.s32.f32 %v1646
      %v1839 = vcvt.s32.f32 %v1647
      %v1840 = vcvt.s32.f32 %v1648
      %v1841 = vcvt.s32.f32 %v1649
      %v1842 = vcvt.s32.f32 %v1650
      %v1843 = vcvt.s32.f32 %v1651
      %v1844 = vcvt.s32.f32 %v1652
      %v1845 = vcvt.s32.f32 %v1653
      %v1846 = vcvt.s32.f32 %v1654
      %v1847 = vcvt.s32.f32 %v1655
      %v1848 = vcvt.s32.f32 %v1656
      %v1849 = vcvt.s32.f32 %v1657
      %v1850 = vcvt.s32.f32 %v1658
      %v1851 = vcvt.s32.f32 %v1659
      %v1852 = vcvt.s32.f32 %v1660
      %v1853 = vcvt.s32.f32 %v1661
      %v1854 = vcvt.s32.f32 %v1662
      %v1855 = vcvt.s32.f32 %v1663
      %v1856 = vcvt.s32.f32 %v1664
      %v1857 = vcvt.s32.f32 %v1665
      %v1858 = vcvt.s32.f32 %v1666
      %v1859 = vcvt.s32.f32 %v1667
      %v1860 = vcvt.s32.f32 %v1668
      %v1861 = vcvt.s32.f32 %v1669
      %v1862 = vcvt.s32.f32 %v1670
      %v1863 = vcvt.s32.f32 %v1671
      %v1864 = vcvt.s32.f32 %v1672
      %v1865 = vcvt.s32.f32 %v1673
      %v1866 = vcvt.s32.f32 %v1674
      %v1867 = vcvt.s32.f32 %v1675
      %v1868 = vcvt.s32.f32 %v1676
      %v1869 = vcvt.s32.f32 %v1677
      %v1870 = vcvt.s32.f32 %v1678
      %v1871 = vcvt.s32.f32 %v1679
      %v1872 = vcvt.s32.f32 %v1680
      %v1873 = vcvt.s32.f32 %v1681
      %v1874 = vcvt.s32.f32 %v1682
      %v1875 = vcvt.s32.f32 %v1683
      %v1876 = vcvt.s32.f32 %v1684
      %v1877 = vcvt.s32.f32 %v1685
      %v1878 = vcvt.s32.f32 %v1686
      %v1879 = vcvt.s32.f32 %v1687
      %v1880 = vcvt.s32.f32 %v1688
      %v1881 = vcvt.s32.f32 %v1689
      %v1882 = vcvt.s32.f32 %v1690
      %v1883 = vcvt.s32.f32 %v1691
      %v1884 = vcvt.s32.f32 %v1692
      %v1885 = vcvt.s32.f32 %v1693
      %v1886 = vcvt.s32.f32 %v1694
      %v1887 = vcvt.s32.f32 %v1695
      %v1888 = vcvt.s32.f32 %v1696
      %v1889 = vcvt.s32.f32 %v1697
      %v1890 = vcvt.s32.f32 %v1698
      %v1891 = vcvt.s32.f32 %v1699
      %v1892 = vcvt.s32.f32 %v1700
      %v1893 = vcvt.s32.f32 %v1701
      %v1894 = vcvt.s32.f32 %v1702
      %v1895 = vcvt.s32.f32 %v1703
      %v1896 = vcvt.s32.f32 %v1704
      %v1897 = vcvt.s32.f32 %v1705
      %v1898 = vcvt.s32.f32 %v1706
      %v1899 = vcvt.s32.f32 %v1707
      %v1900 = vcvt.s32.f32 %v1708
      %v1901 = vcvt.s32.f32 %v1709
      %v1902 = vcvt.s32.f32 %v1710
      %v1903 = vcvt.s32.f32 %v1711
      %v1904 = vcvt.s32.f32 %v1712
      %v1905 = vcvt.s32.f32 %v1713
      %v1906 = vcvt.s32.f32 %v1714
      %v1907 = vcvt.s32.f32 %v1715
      %v1908 = vcvt.s32.f32 %v1716
      %v1909 = vcvt.s32.f32 %v1717
      %v1910 = vcvt.s32.f32 %v1718
      %v1911 = vcvt.s32.f32 %v1719
      %v1912 = vcvt.s32.f32 %v1720
      %v1913 = vcvt.s32.f32 %v1721
      %v1914 = vcvt.s32.f32 %v1722
      %v1915 = vcvt.s32.f32 %v1723
      %v1916 = vcvt.s32.f32 %v1724
      %v1917 = vcvt.s32.f32 %v1725
      %v1918 = vcvt.s32.f32 %v1726
      %v1919 = vcvt.s32.f32 %v1727
      %v1920 = vcvt.s32.f32 %v1728
      %v1921 = vcvt.s32.f32 %v1729
      %v1922 = vcvt.s32.f32 %v1730
      %v1923 = vcvt.s32.f32 %v1731
      %v1924 = vpack.c.bf16 %v1735, %v1732
      %v1925 = vpack.c.bf16 %v1736, %v1733
      %v1926 = vpack.c.bf16 %v1737, %v1734
      %v1927 = vpack.c.bf16 %v1741, %v1738
      %v1928 = vpack.c.bf16 %v1742, %v1739
      %v1929 = vpack.c.bf16 %v1743, %v1740
      %v1930 = vpack.c.bf16 %v1747, %v1744
      %v1931 = vpack.c.bf16 %v1748, %v1745
      %v1932 = vpack.c.bf16 %v1749, %v1746
      %v1933 = vpack.c.bf16 %v1753, %v1750
      %v1934 = vpack.c.bf16 %v1754, %v1751
      %v1935 = vpack.c.bf16 %v1755, %v1752
      %v1936 = vpack.c.bf16 %v1759, %v1756
      %v1937 = vpack.c.bf16 %v1760, %v1757
      %v1938 = vpack.c.bf16 %v1761, %v1758
      %v1939 = vpack.c.bf16 %v1765, %v1762
      %v1940 = vpack.c.bf16 %v1766, %v1763
      %v1941 = vpack.c.bf16 %v1767, %v1764
      %v1942 = vpack.c.bf16 %v1771, %v1768
      %v1943 = vpack.c.bf16 %v1772, %v1769
      %v1944 = vpack.c.bf16 %v1773, %v1770
      %v1945 = vpack.c.bf16 %v1777, %v1774
      %v1946 = vpack.c.bf16 %v1778, %v1775
      %v1947 = vpack.c.bf16 %v1779, %v1776
      %v1948 = vpack.c.bf16 %v1783, %v1780
      %v1949 = vpack.c.bf16 %v1784, %v1781
      %v1950 = vpack.c.bf16 %v1785, %v1782
      %v1951 = vpack.c.bf16 %v1789, %v1786
      %v1952 = vpack.c.bf16 %v1790, %v1787
      %v1953 = vpack.c.bf16 %v1791, %v1788
      %v1954 = vpack.c.bf16 %v1795, %v1792
      %v1955 = vpack.c.bf16 %v1796, %v1793
      %v1956 = vpack.c.bf16 %v1797, %v1794
      %v1957 = vpack.c.bf16 %v1801, %v1798
      %v1958 = vpack.c.bf16 %v1802, %v1799
      %v1959 = vpack.c.bf16 %v1803, %v1800
      %v1960 = vpack.c.bf16 %v1807, %v1804
      %v1961 = vpack.c.bf16 %v1808, %v1805
      %v1962 = vpack.c.bf16 %v1809, %v1806
      %v1963 = vpack.c.bf16 %v1813, %v1810
      %v1964 = vpack.c.bf16 %v1814, %v1811
      %v1965 = vpack.c.bf16 %v1815, %v1812
      %v1966 = vpack.c.bf16 %v1819, %v1816
      %v1967 = vpack.c.bf16 %v1820, %v1817
      %v1968 = vpack.c.bf16 %v1821, %v1818
      %v1969 = vpack.c.bf16 %v1825, %v1822
      %v1970 = vpack.c.bf16 %v1826, %v1823
      %v1971 = vpack.c.bf16 %v1827, %v1824
      %v1972 = vpack.c.bf16 %v1831, %v1828
      %v1973 = vpack.c.bf16 %v1832, %v1829
      %v1974 = vpack.c.bf16 %v1833, %v1830
      %v1975 = vpack.c.bf16 %v1837, %v1834
      %v1976 = vpack.c.bf16 %v1838, %v1835
      %v1977 = vpack.c.bf16 %v1839, %v1836
      %v1978 = vpack.c.bf16 %v1843, %v1840
      %v1979 = vpack.c.bf16 %v1844, %v1841
      %v1980 = vpack.c.bf16 %v1845, %v1842
      %v1981 = vpack.c.bf16 %v1849, %v1846
      %v1982 = vpack.c.bf16 %v1850, %v1847
      %v1983 = vpack.c.bf16 %v1851, %v1848
      %v1984 = vpack.c.bf16 %v1855, %v1852
      %v1985 = vpack.c.bf16 %v1856, %v1853
      %v1986 = vpack.c.bf16 %v1857, %v1854
      %v1987 = vpack.c.bf16 %v1861, %v1858
      %v1988 = vpack.c.bf16 %v1862, %v1859
      %v1989 = vpack.c.bf16 %v1863, %v1860
      %v1990 = vpack.c.bf16 %v1867, %v1864
      %v1991 = vpack.c.bf16 %v1868, %v1865
      %v1992 = vpack.c.bf16 %v1869, %v1866
      %v1993 = vpack.c.bf16 %v1873, %v1870
      %v1994 = vpack.c.bf16 %v1874, %v1871
      %v1995 = vpack.c.bf16 %v1875, %v1872
      %v1996 = vpack.c.bf16 %v1879, %v1876
      %v1997 = vpack.c.bf16 %v1880, %v1877
      %v1998 = vpack.c.bf16 %v1881, %v1878
      %v1999 = vpack.c.bf16 %v1885, %v1882
      %v2000 = vpack.c.bf16 %v1886, %v1883
      %v2001 = vpack.c.bf16 %v1887, %v1884
      %v2002 = vpack.c.bf16 %v1891, %v1888
      %v2003 = vpack.c.bf16 %v1892, %v1889
      %v2004 = vpack.c.bf16 %v1893, %v1890
      %v2005 = vpack.c.bf16 %v1897, %v1894
      %v2006 = vpack.c.bf16 %v1898, %v1895
      %v2007 = vpack.c.bf16 %v1899, %v1896
      %v2008 = vpack.c.bf16 %v1903, %v1900
      %v2009 = vpack.c.bf16 %v1904, %v1901
      %v2010 = vpack.c.bf16 %v1905, %v1902
      %v2011 = vpack.c.bf16 %v1909, %v1906
      %v2012 = vpack.c.bf16 %v1910, %v1907
      %v2013 = vpack.c.bf16 %v1911, %v1908
      %v2014 = vpack.c.bf16 %v1915, %v1912
      %v2015 = vpack.c.bf16 %v1916, %v1913
      %v2016 = vpack.c.bf16 %v1917, %v1914
      %v2017 = vpack.c.bf16 %v1921, %v1918
      %v2018 = vpack.c.bf16 %v1922, %v1919
      %v2019 = vpack.c.bf16 %v1923, %v1920
      %v2020 = vld [vmem:[%s0] sm:$0xf]
      %v2021 = vld [vmem:[%s0 + $0x4] sm:$0xf]
      %v2022 = vld [vmem:[%s0 + $0x8] sm:$0xf]
      %v2023 = vld [vmem:[%s0 + $0xc] sm:$0xf]
      %v2024 = vld [vmem:[%s0 + $0x10] sm:$0xf]
      %v2025 = vld [vmem:[%s0 + $0x14] sm:$0xf]
      %v2026 = vld [vmem:[%s0 + $0x18] sm:$0xf]
      %v2027 = vld [vmem:[%s0 + $0x1c] sm:$0xf]
      %v2028 = vld [vmem:[%s0 + $0x20] sm:$0xf]
      %v2029 = vld [vmem:[%s0 + $0x24] sm:$0xf]
      %v2030 = vld [vmem:[%s0 + $0x28] sm:$0xf]
      %v2031 = vld [vmem:[%s0 + $0x2c] sm:$0xf]
      %v2032 = vld [vmem:[%s0 + $0x30] sm:$0xf]
      %v2033 = vld [vmem:[%s0 + $0x34] sm:$0xf]
      %v2034 = vld [vmem:[%s0 + $0x38] sm:$0xf]
      %v2035 = vld [vmem:[%s0 + $0x3c] sm:$0xf]
      %v2036 = vld [vmem:[%s0 + $0x40] sm:$0xf]
      %v2037 = vld [vmem:[%s0 + $0x44] sm:$0xf]
      %v2038 = vld [vmem:[%s0 + $0x48] sm:$0xf]
      %v2039 = vld [vmem:[%s0 + $0x4c] sm:$0xf]
      %v2040 = vld [vmem:[%s0 + $0x50] sm:$0xf]
      %v2041 = vld [vmem:[%s0 + $0x54] sm:$0xf]
      %v2042 = vld [vmem:[%s0 + $0x58] sm:$0xf]
      %v2043 = vld [vmem:[%s0 + $0x5c] sm:$0xf]
      %v2044 = vld [vmem:[%s0 + $0x60] sm:$0xf]
      %v2045 = vld [vmem:[%s0 + $0x64] sm:$0xf]
      %v2046 = vld [vmem:[%s0 + $0x68] sm:$0xf]
      %v2047 = vld [vmem:[%s0 + $0x6c] sm:$0xf]
      %v2048 = vld [vmem:[%s0 + $0x70] sm:$0xf]
      %v2049 = vld [vmem:[%s0 + $0x74] sm:$0xf]
      %v2050 = vld [vmem:[%s0 + $0x78] sm:$0xf]
      %v2051 = vld [vmem:[%s0 + $0x7c] sm:$0xf]
      %v2052 = vld [vmem:[%s0 + $0x80] sm:$0xf]
      %v2053 = vld [vmem:[%s0 + $0x84] sm:$0xf]
      %v2054 = vld [vmem:[%s0 + $0x88] sm:$0xf]
      %v2055 = vld [vmem:[%s0 + $0x8c] sm:$0xf]
      %v2056 = vld [vmem:[%s0 + $0x90] sm:$0xf]
      %v2057 = vld [vmem:[%s0 + $0x94] sm:$0xf]
      %v2058 = vld [vmem:[%s0 + $0x98] sm:$0xf]
      %v2059 = vld [vmem:[%s0 + $0x9c] sm:$0xf]
      %v2060 = vld [vmem:[%s0 + $0xa0] sm:$0xf]
      %v2061 = vld [vmem:[%s0 + $0xa4] sm:$0xf]
      %v2062 = vld [vmem:[%s0 + $0xa8] sm:$0xf]
      %v2063 = vld [vmem:[%s0 + $0xac] sm:$0xf]
      %v2064 = vld [vmem:[%s0 + $0xb0] sm:$0xf]
      %v2065 = vld [vmem:[%s0 + $0xb4] sm:$0xf]
      %v2066 = vld [vmem:[%s0 + $0xb8] sm:$0xf]
      %v2067 = vld [vmem:[%s0 + $0xbc] sm:$0xf]
      %v2068 = vld [vmem:[%s348] sm:$0xff]
      %v2069 = vld [vmem:[%s348 + $0x8] sm:$0xff]
      %v2070 = vld [vmem:[%s348 + $0x10] sm:$0xff]
      %v2071 = vld [vmem:[%s348 + $0x18] sm:$0xff]
      %v2072 = vld [vmem:[%s348 + $0x20] sm:$0xff]
      %v2073 = vld [vmem:[%s348 + $0x28] sm:$0xff]
      %v2074 = vld [vmem:[%s348 + $0x30] sm:$0xff]
      %v2075 = vld [vmem:[%s348 + $0x38] sm:$0xff]
      %v2076 = vld [vmem:[%s348 + $0x40] sm:$0xff]
      %v2077 = vld [vmem:[%s348 + $0x48] sm:$0xff]
      %v2078 = vld [vmem:[%s348 + $0x50] sm:$0xff]
      %v2079 = vld [vmem:[%s348 + $0x58] sm:$0xff]
      %v2080 = vld [vmem:[%s348 + $0x60] sm:$0xff]
      %v2081 = vld [vmem:[%s348 + $0x68] sm:$0xff]
      %v2082 = vld [vmem:[%s348 + $0x70] sm:$0xff]
      %v2083 = vld [vmem:[%s348 + $0x78] sm:$0xff]
      %v2084 = vld [vmem:[%s348 + $0x80] sm:$0xff]
      %v2085 = vld [vmem:[%s348 + $0x88] sm:$0xff]
      %v2086 = vld [vmem:[%s348 + $0x90] sm:$0xff]
      %v2087 = vld [vmem:[%s348 + $0x98] sm:$0xff]
      %v2088 = vld [vmem:[%s348 + $0xa0] sm:$0xff]
      %v2089 = vld [vmem:[%s348 + $0xa8] sm:$0xff]
      %v2090 = vld [vmem:[%s348 + $0xb0] sm:$0xff]
      %v2091 = vld [vmem:[%s348 + $0xb8] sm:$0xff]
      %v2092 = vld [vmem:[%s348 + $0xc0] sm:$0xff]
      %v2093 = vld [vmem:[%s348 + $0xc8] sm:$0xff]
      %v2094 = vld [vmem:[%s348 + $0xd0] sm:$0xff]
      %v2095 = vld [vmem:[%s348 + $0xd8] sm:$0xff]
      %v2096 = vld [vmem:[%s348 + $0xe0] sm:$0xff]
      %v2097 = vld [vmem:[%s348 + $0xe8] sm:$0xff]
      %v2098 = vld [vmem:[%s348 + $0xf0] sm:$0xff]
      %v2099 = vld [vmem:[%s348 + $0xf8] sm:$0xff]
      %v2100 = vld [vmem:[%s348 + $0x100] sm:$0xff]
      %v2101 = vld [vmem:[%s348 + $0x108] sm:$0xff]
      %v2102 = vld [vmem:[%s348 + $0x110] sm:$0xff]
      %v2103 = vld [vmem:[%s348 + $0x118] sm:$0xff]
      %v2104 = vld [vmem:[%s348 + $0x120] sm:$0xff]
      %v2105 = vld [vmem:[%s348 + $0x128] sm:$0xff]
      %v2106 = vld [vmem:[%s348 + $0x130] sm:$0xff]
      %v2107 = vld [vmem:[%s348 + $0x138] sm:$0xff]
      %v2108 = vld [vmem:[%s348 + $0x140] sm:$0xff]
      %v2109 = vld [vmem:[%s348 + $0x148] sm:$0xff]
      %v2110 = vld [vmem:[%s348 + $0x150] sm:$0xff]
      %v2111 = vld [vmem:[%s348 + $0x158] sm:$0xff]
      %v2112 = vld [vmem:[%s348 + $0x160] sm:$0xff]
      %v2113 = vld [vmem:[%s348 + $0x168] sm:$0xff]
      %v2114 = vld [vmem:[%s348 + $0x170] sm:$0xff]
      %v2115 = vld [vmem:[%s348 + $0x178] sm:$0xff]
      %v2116 = vld [vmem:[%s348 + $0x180] sm:$0xff]
      %v2117 = vld [vmem:[%s348 + $0x188] sm:$0xff]
      %v2118 = vld [vmem:[%s348 + $0x190] sm:$0xff]
      %v2119 = vld [vmem:[%s348 + $0x198] sm:$0xff]
      %v2120 = vld [vmem:[%s348 + $0x1a0] sm:$0xff]
      %v2121 = vld [vmem:[%s348 + $0x1a8] sm:$0xff]
      %v2122 = vld [vmem:[%s348 + $0x1b0] sm:$0xff]
      %v2123 = vld [vmem:[%s348 + $0x1b8] sm:$0xff]
      %v2124 = vld [vmem:[%s348 + $0x1c0] sm:$0xff]
      %v2125 = vld [vmem:[%s348 + $0x1c8] sm:$0xff]
      %v2126 = vld [vmem:[%s348 + $0x1d0] sm:$0xff]
      %v2127 = vld [vmem:[%s348 + $0x1d8] sm:$0xff]
      %v2128 = vld [vmem:[%s348 + $0x1e0] sm:$0xff]
      %v2129 = vld [vmem:[%s348 + $0x1e8] sm:$0xff]
      %v2130 = vld [vmem:[%s348 + $0x1f0] sm:$0xff]
      %v2131 = vld [vmem:[%s348 + $0x1f8] sm:$0xff]
      %v2180 = vunpack.c.l.b16 %v2020
      %v2181 = vunpack.c.l.b16 %v2021
      %v2182 = vunpack.c.l.b16 %v2022
      %v2183 = vunpack.c.l.b16 %v2023
      %v2184 = vunpack.c.l.b16 %v2024
      %v2185 = vunpack.c.l.b16 %v2025
      %v2186 = vunpack.c.l.b16 %v2026
      %v2187 = vunpack.c.l.b16 %v2027
      %v2188 = vunpack.c.l.b16 %v2028
      %v2189 = vunpack.c.l.b16 %v2029
      %v2190 = vunpack.c.l.b16 %v2030
      %v2191 = vunpack.c.l.b16 %v2031
      %v2192 = vunpack.c.l.b16 %v2032
      %v2193 = vunpack.c.l.b16 %v2033
      %v2194 = vunpack.c.l.b16 %v2034
      %v2195 = vunpack.c.l.b16 %v2035
      %v2196 = vunpack.c.l.b16 %v2036
      %v2197 = vunpack.c.l.b16 %v2037
      %v2198 = vunpack.c.l.b16 %v2038
      %v2199 = vunpack.c.l.b16 %v2039
      %v2200 = vunpack.c.l.b16 %v2040
      %v2201 = vunpack.c.l.b16 %v2041
      %v2202 = vunpack.c.l.b16 %v2042
      %v2203 = vunpack.c.l.b16 %v2043
      %v2204 = vunpack.c.l.b16 %v2044
      %v2205 = vunpack.c.l.b16 %v2045
      %v2206 = vunpack.c.l.b16 %v2046
      %v2207 = vunpack.c.l.b16 %v2047
      %v2208 = vunpack.c.l.b16 %v2048
      %v2209 = vunpack.c.l.b16 %v2049
      %v2210 = vunpack.c.l.b16 %v2050
      %v2211 = vunpack.c.l.b16 %v2051
      %v2212 = vunpack.c.l.b16 %v2052
      %v2213 = vunpack.c.l.b16 %v2053
      %v2214 = vunpack.c.l.b16 %v2054
      %v2215 = vunpack.c.l.b16 %v2055
      %v2216 = vunpack.c.l.b16 %v2056
      %v2217 = vunpack.c.l.b16 %v2057
      %v2218 = vunpack.c.l.b16 %v2058
      %v2219 = vunpack.c.l.b16 %v2059
      %v2220 = vunpack.c.l.b16 %v2060
      %v2221 = vunpack.c.l.b16 %v2061
      %v2222 = vunpack.c.l.b16 %v2062
      %v2223 = vunpack.c.l.b16 %v2063
      %v2224 = vunpack.c.l.b16 %v2064
      %v2225 = vunpack.c.l.b16 %v2065
      %v2226 = vunpack.c.l.b16 %v2066
      %v2227 = vunpack.c.l.b16 %v2067
      %v2228 = vpack.c.b16 %v2181, %v2180
      %v2229 = vpack.c.b16 %v2183, %v2182
      %v2230 = vpack.c.b16 %v2185, %v2184
      %v2231 = vpack.c.b16 %v2187, %v2186
      %v2232 = vpack.c.b16 %v2189, %v2188
      %v2233 = vpack.c.b16 %v2191, %v2190
      %v2234 = vpack.c.b16 %v2193, %v2192
      %v2235 = vpack.c.b16 %v2195, %v2194
      %v2236 = vpack.c.b16 %v2197, %v2196
      %v2237 = vpack.c.b16 %v2199, %v2198
      %v2238 = vpack.c.b16 %v2201, %v2200
      %v2239 = vpack.c.b16 %v2203, %v2202
      %v2240 = vpack.c.b16 %v2205, %v2204
      %v2241 = vpack.c.b16 %v2207, %v2206
      %v2242 = vpack.c.b16 %v2209, %v2208
      %v2243 = vpack.c.b16 %v2211, %v2210
      %v2244 = vpack.c.b16 %v2213, %v2212
      %v2245 = vpack.c.b16 %v2215, %v2214
      %v2246 = vpack.c.b16 %v2217, %v2216
      %v2247 = vpack.c.b16 %v2219, %v2218
      %v2248 = vpack.c.b16 %v2221, %v2220
      %v2249 = vpack.c.b16 %v2223, %v2222
      %v2250 = vpack.c.b16 %v2225, %v2224
      %v2251 = vpack.c.b16 %v2227, %v2226
      %2276 = vmatprep.subr.bf16.mxu0 0
      %2277 = vmatpush1.bf16.msra.mxu0 %v2228
      %2278 = vmatprep.subr.bf16.mxu0 0
      %2279 = vmatpush1.bf16.msra.mxu0 %v2229
      %2280 = vmatprep.subr.bf16.mxu0 0
      %2281 = vmatpush1.bf16.msra.mxu0 %v2230
      %2282 = vmatprep.subr.bf16.mxu0 0
      %2283 = vmatpush1.bf16.msra.mxu0 %v2231
      %2284 = vmatprep.subr.bf16.mxu0 0
      %2285 = vmatpush1.bf16.msra.mxu0 %v2232
      %2286 = vmatprep.subr.bf16.mxu0 0
      %2287 = vmatpush1.bf16.msra.mxu0 %v2233
      %2288 = vmatprep.subr.bf16.mxu0 0
      %2289 = vmatpush1.bf16.msra.mxu0 %v2234
      %2290 = vmatprep.subr.bf16.mxu0 0
      %2291 = vmatpush1.bf16.msra.mxu0 %v2235
      %2292 = vmatprep.subr.bf16.mxu0 0
      %2293 = vmatpush1.bf16.msra.mxu0 %v2236
      %2294 = vmatprep.subr.bf16.mxu0 0
      %2295 = vmatpush1.bf16.msra.mxu0 %v2237
      %2296 = vmatprep.subr.bf16.mxu0 0
      %2297 = vmatpush1.bf16.msra.mxu0 %v2238
      %2298 = vmatprep.subr.bf16.mxu0 0
      %2299 = vmatpush1.bf16.msra.mxu0 %v2239
      %2300 = vmatprep.subr.bf16.mxu0 0
      %2301 = vmatpush1.bf16.msra.mxu0 %v2240
      %2302 = vmatprep.subr.bf16.mxu0 0
      %2303 = vmatpush1.bf16.msra.mxu0 %v2241
      %2304 = vmatprep.subr.bf16.mxu0 0
      %2305 = vmatpush1.bf16.msra.mxu0 %v2242
      %2306 = vmatprep.subr.bf16.mxu0 0
      %2307 = vmatpush1.bf16.msra.mxu0 %v2243
      %2308 = vmatprep.mubr.bf16.mxu0 %v1925
      %2309 = vmatmul.mubr.bf16.gmra.mrb[0].mxu0 %v1924
      %v2310 = vpop.f32.mrb[0].mxu0
      %v2311 = vadd.f32 %v2068, %v2310
      %v2312 = vpop.f32.mrb[0].mxu0
      %v2313 = vpop.f32.mrb[0].mxu0
      %v2314 = vadd.f32 %v2069, %v2313
      %v2315 = vpop.f32.mrb[0].mxu0
      %2316 = vmatprep.mubr.bf16.mxu0 %v1928
      %2317 = vmatmul.mubr.bf16.gmra.mrb[0].mxu0 %v1927
      %v2318 = vpop.f32.mrb[0].mxu0
      %v2319 = vadd.f32 %v2070, %v2318
      %v2320 = vpop.f32.mrb[0].mxu0
      %v2321 = vpop.f32.mrb[0].mxu0
      %v2322 = vadd.f32 %v2071, %v2321
      %v2323 = vpop.f32.mrb[0].mxu0
      %2324 = vmatprep.mubr.bf16.mxu0 %v1931
      %2325 = vmatmul.mubr.bf16.gmra.mrb[0].mxu0 %v1930
      %v2326 = vpop.f32.mrb[0].mxu0
      %v2327 = vadd.f32 %v2072, %v2326
      %v2328 = vpop.f32.mrb[0].mxu0
      %v2329 = vpop.f32.mrb[0].mxu0
      %v2330 = vadd.f32 %v2073, %v2329
      %v2331 = vpop.f32.mrb[0].mxu0
      %2332 = vmatprep.mubr.bf16.mxu0 %v1934
      %2333 = vmatmul.mubr.bf16.gmra.mrb[0].mxu0 %v1933
      %v2334 = vpop.f32.mrb[0].mxu0
      %v2335 = vadd.f32 %v2074, %v2334
      %v2336 = vpop.f32.mrb[0].mxu0
      %v2337 = vpop.f32.mrb[0].mxu0
      %v2338 = vadd.f32 %v2075, %v2337
      %v2339 = vpop.f32.mrb[0].mxu0
      %2340 = vmatprep.mubr.bf16.mxu0 %v1937
      %2341 = vmatmul.mubr.bf16.gmra.mrb[0].mxu0 %v1936
      %v2342 = vpop.f32.mrb[0].mxu0
      %v2343 = vadd.f32 %v2076, %v2342
      %v2344 = vpop.f32.mrb[0].mxu0
      %v2345 = vpop.f32.mrb[0].mxu0
      %v2346 = vadd.f32 %v2077, %v2345
      %v2347 = vpop.f32.mrb[0].mxu0
      %2348 = vmatprep.mubr.bf16.mxu0 %v1940
      %2349 = vmatmul.mubr.bf16.gmra.mrb[0].mxu0 %v1939
      %v2350 = vpop.f32.mrb[0].mxu0
      %v2351 = vadd.f32 %v2078, %v2350
      %v2352 = vpop.f32.mrb[0].mxu0
      %v2353 = vpop.f32.mrb[0].mxu0
      %v2354 = vadd.f32 %v2079, %v2353
      %v2355 = vpop.f32.mrb[0].mxu0
      %2356 = vmatprep.mubr.bf16.mxu0 %v1943
      %2357 = vmatmul.mubr.bf16.gmra.mrb[0].mxu0 %v1942
      %v2358 = vpop.f32.mrb[0].mxu0
      %v2359 = vadd.f32 %v2080, %v2358
      %v2360 = vpop.f32.mrb[0].mxu0
      %v2361 = vpop.f32.mrb[0].mxu0
      %v2362 = vadd.f32 %v2081, %v2361
      %v2363 = vpop.f32.mrb[0].mxu0
      %2364 = vmatprep.mubr.bf16.mxu0 %v1946
      %2365 = vmatmul.mubr.bf16.gmra.mrb[0].mxu0 %v1945
      %v2366 = vpop.f32.mrb[0].mxu0
      %v2367 = vadd.f32 %v2082, %v2366
      %v2368 = vpop.f32.mrb[0].mxu0
      %v2369 = vpop.f32.mrb[0].mxu0
      %v2370 = vadd.f32 %v2083, %v2369
      %v2371 = vpop.f32.mrb[0].mxu0
      %2372 = vmatprep.mubr.bf16.mxu0 %v1949
      %2373 = vmatmul.mubr.bf16.gmra.mrb[0].mxu0 %v1948
      %v2374 = vpop.f32.mrb[0].mxu0
      %v2375 = vadd.f32 %v2084, %v2374
      %v2376 = vpop.f32.mrb[0].mxu0
      %v2377 = vpop.f32.mrb[0].mxu0
      %v2378 = vadd.f32 %v2085, %v2377
      %v2379 = vpop.f32.mrb[0].mxu0
      %2380 = vmatprep.mubr.bf16.mxu0 %v1952
      %2381 = vmatmul.mubr.bf16.gmra.mrb[0].mxu0 %v1951
      %v2382 = vpop.f32.mrb[0].mxu0
      %v2383 = vadd.f32 %v2086, %v2382
      %v2384 = vpop.f32.mrb[0].mxu0
      %v2385 = vpop.f32.mrb[0].mxu0
      %v2386 = vadd.f32 %v2087, %v2385
      %v2387 = vpop.f32.mrb[0].mxu0
      %2388 = vmatprep.mubr.bf16.mxu0 %v1955
      %2389 = vmatmul.mubr.bf16.gmra.mrb[0].mxu0 %v1954
      %v2390 = vpop.f32.mrb[0].mxu0
      %v2391 = vadd.f32 %v2088, %v2390
      %v2392 = vpop.f32.mrb[0].mxu0
      %v2393 = vpop.f32.mrb[0].mxu0
      %v2394 = vadd.f32 %v2089, %v2393
      %v2395 = vpop.f32.mrb[0].mxu0
      %2396 = vmatprep.mubr.bf16.mxu0 %v1958
      %2397 = vmatmul.mubr.bf16.gmra.mrb[0].mxu0 %v1957
      %v2398 = vpop.f32.mrb[0].mxu0
      %v2399 = vadd.f32 %v2090, %v2398
      %v2400 = vpop.f32.mrb[0].mxu0
      %v2401 = vpop.f32.mrb[0].mxu0
      %v2402 = vadd.f32 %v2091, %v2401
      %v2403 = vpop.f32.mrb[0].mxu0
      %2404 = vmatprep.mubr.bf16.mxu0 %v1961
      %2405 = vmatmul.mubr.bf16.gmra.mrb[0].mxu0 %v1960
      %v2406 = vpop.f32.mrb[0].mxu0
      %v2407 = vadd.f32 %v2092, %v2406
      %v2408 = vpop.f32.mrb[0].mxu0
      %v2409 = vpop.f32.mrb[0].mxu0
      %v2410 = vadd.f32 %v2093, %v2409
      %v2411 = vpop.f32.mrb[0].mxu0
      %2412 = vmatprep.mubr.bf16.mxu0 %v1964
      %2413 = vmatmul.mubr.bf16.gmra.mrb[0].mxu0 %v1963
      %v2414 = vpop.f32.mrb[0].mxu0
      %v2415 = vadd.f32 %v2094, %v2414
      %v2416 = vpop.f32.mrb[0].mxu0
      %v2417 = vpop.f32.mrb[0].mxu0
      %v2418 = vadd.f32 %v2095, %v2417
      %v2419 = vpop.f32.mrb[0].mxu0
      %2420 = vmatprep.mubr.bf16.mxu0 %v1967
      %2421 = vmatmul.mubr.bf16.gmra.mrb[0].mxu0 %v1966
      %v2422 = vpop.f32.mrb[0].mxu0
      %v2423 = vadd.f32 %v2096, %v2422
      %v2424 = vpop.f32.mrb[0].mxu0
      %v2425 = vpop.f32.mrb[0].mxu0
      %v2426 = vadd.f32 %v2097, %v2425
      %v2427 = vpop.f32.mrb[0].mxu0
      %2428 = vmatprep.mubr.bf16.mxu0 %v1970
      %2429 = vmatmul.mubr.bf16.gmra.mrb[0].mxu0 %v1969
      %v2430 = vpop.f32.mrb[0].mxu0
      %v2431 = vadd.f32 %v2098, %v2430
      %v2432 = vpop.f32.mrb[0].mxu0
      %v2433 = vpop.f32.mrb[0].mxu0
      %v2434 = vadd.f32 %v2099, %v2433
      %v2435 = vpop.f32.mrb[0].mxu0
      %2436 = vmatprep.mubr.bf16.mxu0 %v1973
      %2437 = vmatmul.mubr.bf16.gmra.mrb[0].mxu0 %v1972
      %v2438 = vpop.f32.mrb[0].mxu0
      %v2439 = vadd.f32 %v2100, %v2438
      %v2440 = vpop.f32.mrb[0].mxu0
      %v2441 = vpop.f32.mrb[0].mxu0
      %v2442 = vadd.f32 %v2101, %v2441
      %v2443 = vpop.f32.mrb[0].mxu0
      %2444 = vmatprep.mubr.bf16.mxu0 %v1976
      %2445 = vmatmul.mubr.bf16.gmra.mrb[0].mxu0 %v1975
      %v2446 = vpop.f32.mrb[0].mxu0
      %v2447 = vadd.f32 %v2102, %v2446
      %v2448 = vpop.f32.mrb[0].mxu0
      %v2449 = vpop.f32.mrb[0].mxu0
      %v2450 = vadd.f32 %v2103, %v2449
      %v2451 = vpop.f32.mrb[0].mxu0
      %2452 = vmatprep.mubr.bf16.mxu0 %v1979
      %2453 = vmatmul.mubr.bf16.gmra.mrb[0].mxu0 %v1978
      %v2454 = vpop.f32.mrb[0].mxu0
      %v2455 = vadd.f32 %v2104, %v2454
      %v2456 = vpop.f32.mrb[0].mxu0
      %v2457 = vpop.f32.mrb[0].mxu0
      %v2458 = vadd.f32 %v2105, %v2457
      %v2459 = vpop.f32.mrb[0].mxu0
      %2460 = vmatprep.mubr.bf16.mxu0 %v1982
      %2461 = vmatmul.mubr.bf16.gmra.mrb[0].mxu0 %v1981
      %v2462 = vpop.f32.mrb[0].mxu0
      %v2463 = vadd.f32 %v2106, %v2462
      %v2464 = vpop.f32.mrb[0].mxu0
      %v2465 = vpop.f32.mrb[0].mxu0
      %v2466 = vadd.f32 %v2107, %v2465
      %v2467 = vpop.f32.mrb[0].mxu0
      %2468 = vmatprep.mubr.bf16.mxu0 %v1985
      %2469 = vmatmul.mubr.bf16.gmra.mrb[0].mxu0 %v1984
      %v2470 = vpop.f32.mrb[0].mxu0
      %v2471 = vadd.f32 %v2108, %v2470
      %v2472 = vpop.f32.mrb[0].mxu0
      %v2473 = vpop.f32.mrb[0].mxu0
      %v2474 = vadd.f32 %v2109, %v2473
      %v2475 = vpop.f32.mrb[0].mxu0
      %2476 = vmatprep.mubr.bf16.mxu0 %v1988
      %2477 = vmatmul.mubr.bf16.gmra.mrb[0].mxu0 %v1987
      %v2478 = vpop.f32.mrb[0].mxu0
      %v2479 = vadd.f32 %v2110, %v2478
      %v2480 = vpop.f32.mrb[0].mxu0
      %v2481 = vpop.f32.mrb[0].mxu0
      %v2482 = vadd.f32 %v2111, %v2481
      %v2483 = vpop.f32.mrb[0].mxu0
      %2484 = vmatprep.mubr.bf16.mxu0 %v1991
      %2485 = vmatmul.mubr.bf16.gmra.mrb[0].mxu0 %v1990
      %v2486 = vpop.f32.mrb[0].mxu0
      %v2487 = vadd.f32 %v2112, %v2486
      %v2488 = vpop.f32.mrb[0].mxu0
      %v2489 = vpop.f32.mrb[0].mxu0
      %v2490 = vadd.f32 %v2113, %v2489
      %v2491 = vpop.f32.mrb[0].mxu0
      %2492 = vmatprep.mubr.bf16.mxu0 %v1994
      %2493 = vmatmul.mubr.bf16.gmra.mrb[0].mxu0 %v1993
      %v2494 = vpop.f32.mrb[0].mxu0
      %v2495 = vadd.f32 %v2114, %v2494
      %v2496 = vpop.f32.mrb[0].mxu0
      %v2497 = vpop.f32.mrb[0].mxu0
      %v2498 = vadd.f32 %v2115, %v2497
      %v2499 = vpop.f32.mrb[0].mxu0
      %2500 = vmatprep.mubr.bf16.mxu0 %v1997
      %2501 = vmatmul.mubr.bf16.gmra.mrb[0].mxu0 %v1996
      %v2502 = vpop.f32.mrb[0].mxu0
      %v2503 = vadd.f32 %v2116, %v2502
      %v2504 = vpop.f32.mrb[0].mxu0
      %v2505 = vpop.f32.mrb[0].mxu0
      %v2506 = vadd.f32 %v2117, %v2505
      %v2507 = vpop.f32.mrb[0].mxu0
      %2508 = vmatprep.mubr.bf16.mxu0 %v2000
      %2509 = vmatmul.mubr.bf16.gmra.mrb[0].mxu0 %v1999
      %v2510 = vpop.f32.mrb[0].mxu0
      %v2511 = vadd.f32 %v2118, %v2510
      %v2512 = vpop.f32.mrb[0].mxu0
      %v2513 = vpop.f32.mrb[0].mxu0
      %v2514 = vadd.f32 %v2119, %v2513
      %v2515 = vpop.f32.mrb[0].mxu0
      %2516 = vmatprep.mubr.bf16.mxu0 %v2003
      %2517 = vmatmul.mubr.bf16.gmra.mrb[0].mxu0 %v2002
      %v2518 = vpop.f32.mrb[0].mxu0
      %v2519 = vadd.f32 %v2120, %v2518
      %v2520 = vpop.f32.mrb[0].mxu0
      %v2521 = vpop.f32.mrb[0].mxu0
      %v2522 = vadd.f32 %v2121, %v2521
      %v2523 = vpop.f32.mrb[0].mxu0
      %2524 = vmatprep.mubr.bf16.mxu0 %v2006
      %2525 = vmatmul.mubr.bf16.gmra.mrb[0].mxu0 %v2005
      %v2526 = vpop.f32.mrb[0].mxu0
      %v2527 = vadd.f32 %v2122, %v2526
      %v2528 = vpop.f32.mrb[0].mxu0
      %v2529 = vpop.f32.mrb[0].mxu0
      %v2530 = vadd.f32 %v2123, %v2529
      %v2531 = vpop.f32.mrb[0].mxu0
      %2532 = vmatprep.mubr.bf16.mxu0 %v2009
      %2533 = vmatmul.mubr.bf16.gmra.mrb[0].mxu0 %v2008
      %v2534 = vpop.f32.mrb[0].mxu0
      %v2535 = vadd.f32 %v2124, %v2534
      %v2536 = vpop.f32.mrb[0].mxu0
      %v2537 = vpop.f32.mrb[0].mxu0
      %v2538 = vadd.f32 %v2125, %v2537
      %v2539 = vpop.f32.mrb[0].mxu0
      %2540 = vmatprep.mubr.bf16.mxu0 %v2012
      %2541 = vmatmul.mubr.bf16.gmra.mrb[0].mxu0 %v2011
      %v2542 = vpop.f32.mrb[0].mxu0
      %v2543 = vadd.f32 %v2126, %v2542
      %v2544 = vpop.f32.mrb[0].mxu0
      %v2545 = vpop.f32.mrb[0].mxu0
      %v2546 = vadd.f32 %v2127, %v2545
      %v2547 = vpop.f32.mrb[0].mxu0
      %2548 = vmatprep.mubr.bf16.mxu0 %v2015
      %2549 = vmatmul.mubr.bf16.gmra.mrb[0].mxu0 %v2014
      %v2550 = vpop.f32.mrb[0].mxu0
      %v2551 = vadd.f32 %v2128, %v2550
      %v2552 = vpop.f32.mrb[0].mxu0
      %v2553 = vpop.f32.mrb[0].mxu0
      %v2554 = vadd.f32 %v2129, %v2553
      %v2555 = vpop.f32.mrb[0].mxu0
      %2556 = vmatprep.mubr.bf16.mxu0 %v2018
      %2557 = vmatmul.mubr.bf16.gmra.mrb[0].mxu0 %v2017
      %v2558 = vpop.f32.mrb[0].mxu0
      %v2559 = vadd.f32 %v2130, %v2558
      %v2560 = vpop.f32.mrb[0].mxu0
      %v2561 = vpop.f32.mrb[0].mxu0
      %v2562 = vadd.f32 %v2131, %v2561
      %v2563 = vpop.f32.mrb[0].mxu0
      %2564 = vdwg.mxu0
      %2565 = vmatprep.subr.bf16.mxu0 0
      %2566 = vmatpush1.bf16.msra.mxu0 %v2244
      %2567 = vmatprep.subr.bf16.mxu0 0
      %2568 = vmatpush1.bf16.msra.mxu0 %v2245
      %2569 = vmatprep.subr.bf16.mxu0 0
      %2570 = vmatpush1.bf16.msra.mxu0 %v2246
      %2571 = vmatprep.subr.bf16.mxu0 0
      %2572 = vmatpush1.bf16.msra.mxu0 %v2247
      %2573 = vmatprep.subr.bf16.mxu0 0
      %2574 = vmatpush1.bf16.msra.mxu0 %v2248
      %2575 = vmatprep.subr.bf16.mxu0 0
      %2576 = vmatpush1.bf16.msra.mxu0 %v2249
      %2577 = vmatprep.subr.bf16.mxu0 0
      %2578 = vmatpush1.bf16.msra.mxu0 %v2250
      %2579 = vmatprep.subr.bf16.mxu0 0
      %2580 = vmatpush1.bf16.msra.mxu0 %v2251
      %2581 = vmatprep.subr.bf16.mxu0 0
      %2582 = vmatpush1.bf16.msra.mxu0 0
      %2583 = vmatprep.subr.bf16.mxu0 0
      %2584 = vmatpush1.bf16.msra.mxu0 0
      %2585 = vmatprep.subr.bf16.mxu0 0
      %2586 = vmatpush1.bf16.msra.mxu0 0
      %2587 = vmatprep.subr.bf16.mxu0 0
      %2588 = vmatpush1.bf16.msra.mxu0 0
      %2589 = vmatprep.subr.bf16.mxu0 0
      %2590 = vmatpush1.bf16.msra.mxu0 0
      %2591 = vmatprep.subr.bf16.mxu0 0
      %2592 = vmatpush1.bf16.msra.mxu0 0
      %2593 = vmatprep.subr.bf16.mxu0 0
      %2594 = vmatpush1.bf16.msra.mxu0 0
      %2595 = vmatprep.subr.bf16.mxu0 0
      %2596 = vmatpush1.bf16.msra.mxu0 0
      %2597 = vmatprep.mubr.bf16.mxu0 0
      %2598 = vmatmul.mubr.bf16.gmra.mrb[0].mxu0 %v1926
      %v2599 = vpop.f32.mrb[0].mxu0
      %v2600 = vadd.f32 %v2311, %v2599
      %v2601 = vpop.f32.mrb[0].mxu0
      %v2602 = vpop.f32.mrb[0].mxu0
      %v2603 = vadd.f32 %v2314, %v2602
      %v2604 = vpop.f32.mrb[0].mxu0
      %2605 = vmatprep.mubr.bf16.mxu0 0
      %2606 = vmatmul.mubr.bf16.gmra.mrb[0].mxu0 %v1929
      %v2607 = vpop.f32.mrb[0].mxu0
      %v2608 = vadd.f32 %v2319, %v2607
      %v2609 = vpop.f32.mrb[0].mxu0
      %v2610 = vpop.f32.mrb[0].mxu0
      %v2611 = vadd.f32 %v2322, %v2610
      %v2612 = vpop.f32.mrb[0].mxu0
      %2613 = vmatprep.mubr.bf16.mxu0 0
      %2614 = vmatmul.mubr.bf16.gmra.mrb[0].mxu0 %v1932
      %v2615 = vpop.f32.mrb[0].mxu0
      %v2616 = vadd.f32 %v2327, %v2615
      %v2617 = vpop.f32.mrb[0].mxu0
      %v2618 = vpop.f32.mrb[0].mxu0
      %v2619 = vadd.f32 %v2330, %v2618
      %v2620 = vpop.f32.mrb[0].mxu0
      %2621 = vmatprep.mubr.bf16.mxu0 0
      %2622 = vmatmul.mubr.bf16.gmra.mrb[0].mxu0 %v1935
      %v2623 = vpop.f32.mrb[0].mxu0
      %v2624 = vadd.f32 %v2335, %v2623
      %v2625 = vpop.f32.mrb[0].mxu0
      %v2626 = vpop.f32.mrb[0].mxu0
      %v2627 = vadd.f32 %v2338, %v2626
      %v2628 = vpop.f32.mrb[0].mxu0
      %2629 = vmatprep.mubr.bf16.mxu0 0
      %2630 = vmatmul.mubr.bf16.gmra.mrb[0].mxu0 %v1938
      %v2631 = vpop.f32.mrb[0].mxu0
      %v2632 = vadd.f32 %v2343, %v2631
      %v2633 = vpop.f32.mrb[0].mxu0
      %v2634 = vpop.f32.mrb[0].mxu0
      %v2635 = vadd.f32 %v2346, %v2634
      %v2636 = vpop.f32.mrb[0].mxu0
      %2637 = vmatprep.mubr.bf16.mxu0 0
      %2638 = vmatmul.mubr.bf16.gmra.mrb[0].mxu0 %v1941
      %v2639 = vpop.f32.mrb[0].mxu0
      %v2640 = vadd.f32 %v2351, %v2639
      %v2641 = vpop.f32.mrb[0].mxu0
      %v2642 = vpop.f32.mrb[0].mxu0
      %v2643 = vadd.f32 %v2354, %v2642
      %v2644 = vpop.f32.mrb[0].mxu0
      %2645 = vmatprep.mubr.bf16.mxu0 0
      %2646 = vmatmul.mubr.bf16.gmra.mrb[0].mxu0 %v1944
      %v2647 = vpop.f32.mrb[0].mxu0
      %v2648 = vadd.f32 %v2359, %v2647
      %v2649 = vpop.f32.mrb[0].mxu0
      %v2650 = vpop.f32.mrb[0].mxu0
      %v2651 = vadd.f32 %v2362, %v2650
      %v2652 = vpop.f32.mrb[0].mxu0
      %2653 = vmatprep.mubr.bf16.mxu0 0
      %2654 = vmatmul.mubr.bf16.gmra.mrb[0].mxu0 %v1947
      %v2655 = vpop.f32.mrb[0].mxu0
      %v2656 = vadd.f32 %v2367, %v2655
      %v2657 = vpop.f32.mrb[0].mxu0
      %v2658 = vpop.f32.mrb[0].mxu0
      %v2659 = vadd.f32 %v2370, %v2658
      %v2660 = vpop.f32.mrb[0].mxu0
      %2661 = vmatprep.mubr.bf16.mxu0 0
      %2662 = vmatmul.mubr.bf16.gmra.mrb[0].mxu0 %v1950
      %v2663 = vpop.f32.mrb[0].mxu0
      %v2664 = vadd.f32 %v2375, %v2663
      %v2665 = vpop.f32.mrb[0].mxu0
      %v2666 = vpop.f32.mrb[0].mxu0
      %v2667 = vadd.f32 %v2378, %v2666
      %v2668 = vpop.f32.mrb[0].mxu0
      %2669 = vmatprep.mubr.bf16.mxu0 0
      %2670 = vmatmul.mubr.bf16.gmra.mrb[0].mxu0 %v1953
      %v2671 = vpop.f32.mrb[0].mxu0
      %v2672 = vadd.f32 %v2383, %v2671
      %v2673 = vpop.f32.mrb[0].mxu0
      %v2674 = vpop.f32.mrb[0].mxu0
      %v2675 = vadd.f32 %v2386, %v2674
      %v2676 = vpop.f32.mrb[0].mxu0
      %2677 = vmatprep.mubr.bf16.mxu0 0
      %2678 = vmatmul.mubr.bf16.gmra.mrb[0].mxu0 %v1956
      %v2679 = vpop.f32.mrb[0].mxu0
      %v2680 = vadd.f32 %v2391, %v2679
      %v2681 = vpop.f32.mrb[0].mxu0
      %v2682 = vpop.f32.mrb[0].mxu0
      %v2683 = vadd.f32 %v2394, %v2682
      %v2684 = vpop.f32.mrb[0].mxu0
      %2685 = vmatprep.mubr.bf16.mxu0 0
      %2686 = vmatmul.mubr.bf16.gmra.mrb[0].mxu0 %v1959
      %v2687 = vpop.f32.mrb[0].mxu0
      %v2688 = vadd.f32 %v2399, %v2687
      %v2689 = vpop.f32.mrb[0].mxu0
      %v2690 = vpop.f32.mrb[0].mxu0
      %v2691 = vadd.f32 %v2402, %v2690
      %v2692 = vpop.f32.mrb[0].mxu0
      %2693 = vmatprep.mubr.bf16.mxu0 0
      %2694 = vmatmul.mubr.bf16.gmra.mrb[0].mxu0 %v1962
      %v2695 = vpop.f32.mrb[0].mxu0
      %v2696 = vadd.f32 %v2407, %v2695
      %v2697 = vpop.f32.mrb[0].mxu0
      %v2698 = vpop.f32.mrb[0].mxu0
      %v2699 = vadd.f32 %v2410, %v2698
      %v2700 = vpop.f32.mrb[0].mxu0
      %2701 = vmatprep.mubr.bf16.mxu0 0
      %2702 = vmatmul.mubr.bf16.gmra.mrb[0].mxu0 %v1965
      %v2703 = vpop.f32.mrb[0].mxu0
      %v2704 = vadd.f32 %v2415, %v2703
      %v2705 = vpop.f32.mrb[0].mxu0
      %v2706 = vpop.f32.mrb[0].mxu0
      %v2707 = vadd.f32 %v2418, %v2706
      %v2708 = vpop.f32.mrb[0].mxu0
      %2709 = vmatprep.mubr.bf16.mxu0 0
      %2710 = vmatmul.mubr.bf16.gmra.mrb[0].mxu0 %v1968
      %v2711 = vpop.f32.mrb[0].mxu0
      %v2712 = vadd.f32 %v2423, %v2711
      %v2713 = vpop.f32.mrb[0].mxu0
      %v2714 = vpop.f32.mrb[0].mxu0
      %v2715 = vadd.f32 %v2426, %v2714
      %v2716 = vpop.f32.mrb[0].mxu0
      %2717 = vmatprep.mubr.bf16.mxu0 0
      %2718 = vmatmul.mubr.bf16.gmra.mrb[0].mxu0 %v1971
      %v2719 = vpop.f32.mrb[0].mxu0
      %v2720 = vadd.f32 %v2431, %v2719
      %v2721 = vpop.f32.mrb[0].mxu0
      %v2722 = vpop.f32.mrb[0].mxu0
      %v2723 = vadd.f32 %v2434, %v2722
      %v2724 = vpop.f32.mrb[0].mxu0
      %2725 = vmatprep.mubr.bf16.mxu0 0
      %2726 = vmatmul.mubr.bf16.gmra.mrb[0].mxu0 %v1974
      %v2727 = vpop.f32.mrb[0].mxu0
      %v2728 = vadd.f32 %v2439, %v2727
      %v2729 = vpop.f32.mrb[0].mxu0
      %v2730 = vpop.f32.mrb[0].mxu0
      %v2731 = vadd.f32 %v2442, %v2730
      %v2732 = vpop.f32.mrb[0].mxu0
      %2733 = vmatprep.mubr.bf16.mxu0 0
      %2734 = vmatmul.mubr.bf16.gmra.mrb[0].mxu0 %v1977
      %v2735 = vpop.f32.mrb[0].mxu0
      %v2736 = vadd.f32 %v2447, %v2735
      %v2737 = vpop.f32.mrb[0].mxu0
      %v2738 = vpop.f32.mrb[0].mxu0
      %v2739 = vadd.f32 %v2450, %v2738
      %v2740 = vpop.f32.mrb[0].mxu0
      %2741 = vmatprep.mubr.bf16.mxu0 0
      %2742 = vmatmul.mubr.bf16.gmra.mrb[0].mxu0 %v1980
      %v2743 = vpop.f32.mrb[0].mxu0
      %v2744 = vadd.f32 %v2455, %v2743
      %v2745 = vpop.f32.mrb[0].mxu0
      %v2746 = vpop.f32.mrb[0].mxu0
      %v2747 = vadd.f32 %v2458, %v2746
      %v2748 = vpop.f32.mrb[0].mxu0
      %2749 = vmatprep.mubr.bf16.mxu0 0
      %2750 = vmatmul.mubr.bf16.gmra.mrb[0].mxu0 %v1983
      %v2751 = vpop.f32.mrb[0].mxu0
      %v2752 = vadd.f32 %v2463, %v2751
      %v2753 = vpop.f32.mrb[0].mxu0
      %v2754 = vpop.f32.mrb[0].mxu0
      %v2755 = vadd.f32 %v2466, %v2754
      %v2756 = vpop.f32.mrb[0].mxu0
      %2757 = vmatprep.mubr.bf16.mxu0 0
      %2758 = vmatmul.mubr.bf16.gmra.mrb[0].mxu0 %v1986
      %v2759 = vpop.f32.mrb[0].mxu0
      %v2760 = vadd.f32 %v2471, %v2759
      %v2761 = vpop.f32.mrb[0].mxu0
      %v2762 = vpop.f32.mrb[0].mxu0
      %v2763 = vadd.f32 %v2474, %v2762
      %v2764 = vpop.f32.mrb[0].mxu0
      %2765 = vmatprep.mubr.bf16.mxu0 0
      %2766 = vmatmul.mubr.bf16.gmra.mrb[0].mxu0 %v1989
      %v2767 = vpop.f32.mrb[0].mxu0
      %v2768 = vadd.f32 %v2479, %v2767
      %v2769 = vpop.f32.mrb[0].mxu0
      %v2770 = vpop.f32.mrb[0].mxu0
      %v2771 = vadd.f32 %v2482, %v2770
      %v2772 = vpop.f32.mrb[0].mxu0
      %2773 = vmatprep.mubr.bf16.mxu0 0
      %2774 = vmatmul.mubr.bf16.gmra.mrb[0].mxu0 %v1992
      %v2775 = vpop.f32.mrb[0].mxu0
      %v2776 = vadd.f32 %v2487, %v2775
      %v2777 = vpop.f32.mrb[0].mxu0
      %v2778 = vpop.f32.mrb[0].mxu0
      %v2779 = vadd.f32 %v2490, %v2778
      %v2780 = vpop.f32.mrb[0].mxu0
      %2781 = vmatprep.mubr.bf16.mxu0 0
      %2782 = vmatmul.mubr.bf16.gmra.mrb[0].mxu0 %v1995
      %v2783 = vpop.f32.mrb[0].mxu0
      %v2784 = vadd.f32 %v2495, %v2783
      %v2785 = vpop.f32.mrb[0].mxu0
      %v2786 = vpop.f32.mrb[0].mxu0
      %v2787 = vadd.f32 %v2498, %v2786
      %v2788 = vpop.f32.mrb[0].mxu0
      %2789 = vmatprep.mubr.bf16.mxu0 0
      %2790 = vmatmul.mubr.bf16.gmra.mrb[0].mxu0 %v1998
      %v2791 = vpop.f32.mrb[0].mxu0
      %v2792 = vadd.f32 %v2503, %v2791
      %v2793 = vpop.f32.mrb[0].mxu0
      %v2794 = vpop.f32.mrb[0].mxu0
      %v2795 = vadd.f32 %v2506, %v2794
      %v2796 = vpop.f32.mrb[0].mxu0
      %2797 = vmatprep.mubr.bf16.mxu0 0
      %2798 = vmatmul.mubr.bf16.gmra.mrb[0].mxu0 %v2001
      %v2799 = vpop.f32.mrb[0].mxu0
      %v2800 = vadd.f32 %v2511, %v2799
      %v2801 = vpop.f32.mrb[0].mxu0
      %v2802 = vpop.f32.mrb[0].mxu0
      %v2803 = vadd.f32 %v2514, %v2802
      %v2804 = vpop.f32.mrb[0].mxu0
      %2805 = vmatprep.mubr.bf16.mxu0 0
      %2806 = vmatmul.mubr.bf16.gmra.mrb[0].mxu0 %v2004
      %v2807 = vpop.f32.mrb[0].mxu0
      %v2808 = vadd.f32 %v2519, %v2807
      %v2809 = vpop.f32.mrb[0].mxu0
      %v2810 = vpop.f32.mrb[0].mxu0
      %v2811 = vadd.f32 %v2522, %v2810
      %v2812 = vpop.f32.mrb[0].mxu0
      %2813 = vmatprep.mubr.bf16.mxu0 0
      %2814 = vmatmul.mubr.bf16.gmra.mrb[0].mxu0 %v2007
      %v2815 = vpop.f32.mrb[0].mxu0
      %v2816 = vadd.f32 %v2527, %v2815
      %v2817 = vpop.f32.mrb[0].mxu0
      %v2818 = vpop.f32.mrb[0].mxu0
      %v2819 = vadd.f32 %v2530, %v2818
      %v2820 = vpop.f32.mrb[0].mxu0
      %2821 = vmatprep.mubr.bf16.mxu0 0
      %2822 = vmatmul.mubr.bf16.gmra.mrb[0].mxu0 %v2010
      %v2823 = vpop.f32.mrb[0].mxu0
      %v2824 = vadd.f32 %v2535, %v2823
      %v2825 = vpop.f32.mrb[0].mxu0
      %v2826 = vpop.f32.mrb[0].mxu0
      %v2827 = vadd.f32 %v2538, %v2826
      %v2828 = vpop.f32.mrb[0].mxu0
      %2829 = vmatprep.mubr.bf16.mxu0 0
      %2830 = vmatmul.mubr.bf16.gmra.mrb[0].mxu0 %v2013
      %v2831 = vpop.f32.mrb[0].mxu0
      %v2832 = vadd.f32 %v2543, %v2831
      %v2833 = vpop.f32.mrb[0].mxu0
      %v2834 = vpop.f32.mrb[0].mxu0
      %v2835 = vadd.f32 %v2546, %v2834
      %v2836 = vpop.f32.mrb[0].mxu0
      %2837 = vmatprep.mubr.bf16.mxu0 0
      %2838 = vmatmul.mubr.bf16.gmra.mrb[0].mxu0 %v2016
      %v2839 = vpop.f32.mrb[0].mxu0
      %v2840 = vadd.f32 %v2551, %v2839
      %v2841 = vpop.f32.mrb[0].mxu0
      %v2842 = vpop.f32.mrb[0].mxu0
      %v2843 = vadd.f32 %v2554, %v2842
      %v2844 = vpop.f32.mrb[0].mxu0
      %2845 = vmatprep.mubr.bf16.mxu0 0
      %2846 = vmatmul.mubr.bf16.gmra.mrb[0].mxu0 %v2019
      %v2847 = vpop.f32.mrb[0].mxu0
      %v2848 = vadd.f32 %v2559, %v2847
      %v2849 = vpop.f32.mrb[0].mxu0
      %v2850 = vpop.f32.mrb[0].mxu0
      %v2851 = vadd.f32 %v2562, %v2850
      %v2852 = vpop.f32.mrb[0].mxu0
      %2853 = vdwg.mxu0
      %v2854 = vmax.f32 %v2600, 0.0
      %v2855 = vmax.f32 %v2603, 0.0
      %v2856 = vmax.f32 %v2608, 0.0
      %v2857 = vmax.f32 %v2611, 0.0
      %v2858 = vmax.f32 %v2616, 0.0
      %v2859 = vmax.f32 %v2619, 0.0
      %v2860 = vmax.f32 %v2624, 0.0
      %v2861 = vmax.f32 %v2627, 0.0
      %v2862 = vmax.f32 %v2632, 0.0
      %v2863 = vmax.f32 %v2635, 0.0
      %v2864 = vmax.f32 %v2640, 0.0
      %v2865 = vmax.f32 %v2643, 0.0
      %v2866 = vmax.f32 %v2648, 0.0
      %v2867 = vmax.f32 %v2651, 0.0
      %v2868 = vmax.f32 %v2656, 0.0
      %v2869 = vmax.f32 %v2659, 0.0
      %v2870 = vmax.f32 %v2664, 0.0
      %v2871 = vmax.f32 %v2667, 0.0
      %v2872 = vmax.f32 %v2672, 0.0
      %v2873 = vmax.f32 %v2675, 0.0
      %v2874 = vmax.f32 %v2680, 0.0
      %v2875 = vmax.f32 %v2683, 0.0
      %v2876 = vmax.f32 %v2688, 0.0
      %v2877 = vmax.f32 %v2691, 0.0
      %v2878 = vmax.f32 %v2696, 0.0
      %v2879 = vmax.f32 %v2699, 0.0
      %v2880 = vmax.f32 %v2704, 0.0
      %v2881 = vmax.f32 %v2707, 0.0
      %v2882 = vmax.f32 %v2712, 0.0
      %v2883 = vmax.f32 %v2715, 0.0
      %v2884 = vmax.f32 %v2720, 0.0
      %v2885 = vmax.f32 %v2723, 0.0
      %v2886 = vmax.f32 %v2728, 0.0
      %v2887 = vmax.f32 %v2731, 0.0
      %v2888 = vmax.f32 %v2736, 0.0
      %v2889 = vmax.f32 %v2739, 0.0
      %v2890 = vmax.f32 %v2744, 0.0
      %v2891 = vmax.f32 %v2747, 0.0
      %v2892 = vmax.f32 %v2752, 0.0
      %v2893 = vmax.f32 %v2755, 0.0
      %v2894 = vmax.f32 %v2760, 0.0
      %v2895 = vmax.f32 %v2763, 0.0
      %v2896 = vmax.f32 %v2768, 0.0
      %v2897 = vmax.f32 %v2771, 0.0
      %v2898 = vmax.f32 %v2776, 0.0
      %v2899 = vmax.f32 %v2779, 0.0
      %v2900 = vmax.f32 %v2784, 0.0
      %v2901 = vmax.f32 %v2787, 0.0
      %v2902 = vmax.f32 %v2792, 0.0
      %v2903 = vmax.f32 %v2795, 0.0
      %v2904 = vmax.f32 %v2800, 0.0
      %v2905 = vmax.f32 %v2803, 0.0
      %v2906 = vmax.f32 %v2808, 0.0
      %v2907 = vmax.f32 %v2811, 0.0
      %v2908 = vmax.f32 %v2816, 0.0
      %v2909 = vmax.f32 %v2819, 0.0
      %v2910 = vmax.f32 %v2824, 0.0
      %v2911 = vmax.f32 %v2827, 0.0
      %v2912 = vmax.f32 %v2832, 0.0
      %v2913 = vmax.f32 %v2835, 0.0
      %v2914 = vmax.f32 %v2840, 0.0
      %v2915 = vmax.f32 %v2843, 0.0
      %v2916 = vmax.f32 %v2848, 0.0
      %v2917 = vmax.f32 %v2851, 0.0
      %v2918 = vpack.c.bf16 %v2855, %v2854
      %v2919 = vpack.c.bf16 %v2857, %v2856
      %v2920 = vpack.c.bf16 %v2859, %v2858
      %v2921 = vpack.c.bf16 %v2861, %v2860
      %v2922 = vpack.c.bf16 %v2863, %v2862
      %v2923 = vpack.c.bf16 %v2865, %v2864
      %v2924 = vpack.c.bf16 %v2867, %v2866
      %v2925 = vpack.c.bf16 %v2869, %v2868
      %v2926 = vpack.c.bf16 %v2871, %v2870
      %v2927 = vpack.c.bf16 %v2873, %v2872
      %v2928 = vpack.c.bf16 %v2875, %v2874
      %v2929 = vpack.c.bf16 %v2877, %v2876
      %v2930 = vpack.c.bf16 %v2879, %v2878
      %v2931 = vpack.c.bf16 %v2881, %v2880
      %v2932 = vpack.c.bf16 %v2883, %v2882
      %v2933 = vpack.c.bf16 %v2885, %v2884
      %v2934 = vpack.c.bf16 %v2887, %v2886
      %v2935 = vpack.c.bf16 %v2889, %v2888
      %v2936 = vpack.c.bf16 %v2891, %v2890
      %v2937 = vpack.c.bf16 %v2893, %v2892
      %v2938 = vpack.c.bf16 %v2895, %v2894
      %v2939 = vpack.c.bf16 %v2897, %v2896
      %v2940 = vpack.c.bf16 %v2899, %v2898
      %v2941 = vpack.c.bf16 %v2901, %v2900
      %v2942 = vpack.c.bf16 %v2903, %v2902
      %v2943 = vpack.c.bf16 %v2905, %v2904
      %v2944 = vpack.c.bf16 %v2907, %v2906
      %v2945 = vpack.c.bf16 %v2909, %v2908
      %v2946 = vpack.c.bf16 %v2911, %v2910
      %v2947 = vpack.c.bf16 %v2913, %v2912
      %v2948 = vpack.c.bf16 %v2915, %v2914
      %v2949 = vpack.c.bf16 %v2917, %v2916
      %v2950 = vld [vmem:[%s359] sm:$0xf]
      %v2951 = vld [vmem:[#allocation4] sm:$0xff]
      %v2952 = vld [vmem:[#allocation4 + $0x8] sm:$0xff]
      %v2953 = vld [vmem:[#allocation4 + $0x10] sm:$0xff]
      %v2954 = vld [vmem:[#allocation4 + $0x18] sm:$0xff]
      %v2955 = vld [vmem:[#allocation4 + $0x20] sm:$0xff]
      %v2956 = vld [vmem:[#allocation4 + $0x28] sm:$0xff]
      %v2957 = vld [vmem:[#allocation4 + $0x30] sm:$0xff]
      %v2958 = vld [vmem:[#allocation4 + $0x38] sm:$0xff]
      %v2959 = vld [vmem:[#allocation4 + $0x40] sm:$0xff]
      %v2960 = vld [vmem:[#allocation4 + $0x48] sm:$0xff]
      %v2961 = vld [vmem:[#allocation4 + $0x50] sm:$0xff]
      %v2962 = vld [vmem:[#allocation4 + $0x58] sm:$0xff]
      %v2963 = vld [vmem:[#allocation4 + $0x60] sm:$0xff]
      %v2964 = vld [vmem:[#allocation4 + $0x68] sm:$0xff]
      %v2965 = vld [vmem:[#allocation4 + $0x70] sm:$0xff]
      %v2966 = vld [vmem:[#allocation4 + $0x78] sm:$0xff]
      %v2967 = vld [vmem:[#allocation4 + $0x80] sm:$0xff]
      %v2968 = vld [vmem:[#allocation4 + $0x88] sm:$0xff]
      %v2969 = vld [vmem:[#allocation4 + $0x90] sm:$0xff]
      %v2970 = vld [vmem:[#allocation4 + $0x98] sm:$0xff]
      %v2971 = vld [vmem:[#allocation4 + $0xa0] sm:$0xff]
      %v2972 = vld [vmem:[#allocation4 + $0xa8] sm:$0xff]
      %v2973 = vld [vmem:[#allocation4 + $0xb0] sm:$0xff]
      %v2974 = vld [vmem:[#allocation4 + $0xb8] sm:$0xff]
      %v2975 = vld [vmem:[#allocation4 + $0xc0] sm:$0xff]
      %v2976 = vld [vmem:[#allocation4 + $0xc8] sm:$0xff]
      %v2977 = vld [vmem:[#allocation4 + $0xd0] sm:$0xff]
      %v2978 = vld [vmem:[#allocation4 + $0xd8] sm:$0xff]
      %v2979 = vld [vmem:[#allocation4 + $0xe0] sm:$0xff]
      %v2980 = vld [vmem:[#allocation4 + $0xe8] sm:$0xff]
      %v2981 = vld [vmem:[#allocation4 + $0xf0] sm:$0xff]
      %v2982 = vld [vmem:[#allocation4 + $0xf8] sm:$0xff]
      %v2983 = vld [vmem:[#allocation4 + $0x100] sm:$0xff]
      %v2984 = vld [vmem:[#allocation4 + $0x108] sm:$0xff]
      %v2985 = vld [vmem:[#allocation4 + $0x110] sm:$0xff]
      %v2986 = vld [vmem:[#allocation4 + $0x118] sm:$0xff]
      %v2987 = vld [vmem:[#allocation4 + $0x120] sm:$0xff]
      %v2988 = vld [vmem:[#allocation4 + $0x128] sm:$0xff]
      %v2989 = vld [vmem:[#allocation4 + $0x130] sm:$0xff]
      %v2990 = vld [vmem:[#allocation4 + $0x138] sm:$0xff]
      %v2991 = vld [vmem:[#allocation4 + $0x140] sm:$0xff]
      %v2992 = vld [vmem:[#allocation4 + $0x148] sm:$0xff]
      %v2993 = vld [vmem:[#allocation4 + $0x150] sm:$0xff]
      %v2994 = vld [vmem:[#allocation4 + $0x158] sm:$0xff]
      %v2995 = vld [vmem:[#allocation4 + $0x160] sm:$0xff]
      %v2996 = vld [vmem:[#allocation4 + $0x168] sm:$0xff]
      %v2997 = vld [vmem:[#allocation4 + $0x170] sm:$0xff]
      %v2998 = vld [vmem:[#allocation4 + $0x178] sm:$0xff]
      %v2999 = vld [vmem:[#allocation4 + $0x180] sm:$0xff]
      %v3000 = vld [vmem:[#allocation4 + $0x188] sm:$0xff]
      %v3001 = vld [vmem:[#allocation4 + $0x190] sm:$0xff]
      %v3002 = vld [vmem:[#allocation4 + $0x198] sm:$0xff]
      %v3003 = vld [vmem:[#allocation4 + $0x1a0] sm:$0xff]
      %v3004 = vld [vmem:[#allocation4 + $0x1a8] sm:$0xff]
      %v3005 = vld [vmem:[#allocation4 + $0x1b0] sm:$0xff]
      %v3006 = vld [vmem:[#allocation4 + $0x1b8] sm:$0xff]
      %v3007 = vld [vmem:[#allocation4 + $0x1c0] sm:$0xff]
      %v3008 = vld [vmem:[#allocation4 + $0x1c8] sm:$0xff]
      %v3009 = vld [vmem:[#allocation4 + $0x1d0] sm:$0xff]
      %v3010 = vld [vmem:[#allocation4 + $0x1d8] sm:$0xff]
      %v3011 = vld [vmem:[#allocation4 + $0x1e0] sm:$0xff]
      %v3012 = vld [vmem:[#allocation4 + $0x1e8] sm:$0xff]
      %v3013 = vld [vmem:[#allocation4 + $0x1f0] sm:$0xff]
      %v3014 = vld [vmem:[#allocation4 + $0x1f8] sm:$0xff]
      %v3015 = vld [vmem:[#allocation4 + $0x200] sm:$0xff]
      %v3016 = vld [vmem:[#allocation4 + $0x208] sm:$0xff]
      %v3017 = vld [vmem:[#allocation4 + $0x210] sm:$0xff]
      %v3018 = vld [vmem:[#allocation4 + $0x218] sm:$0xff]
      %v3019 = vld [vmem:[#allocation4 + $0x220] sm:$0xff]
      %v3020 = vld [vmem:[#allocation4 + $0x228] sm:$0xff]
      %v3021 = vld [vmem:[#allocation4 + $0x230] sm:$0xff]
      %v3022 = vld [vmem:[#allocation4 + $0x238] sm:$0xff]
      %v3023 = vld [vmem:[#allocation4 + $0x240] sm:$0xff]
      %v3024 = vld [vmem:[#allocation4 + $0x248] sm:$0xff]
      %v3025 = vld [vmem:[#allocation4 + $0x250] sm:$0xff]
      %v3026 = vld [vmem:[#allocation4 + $0x258] sm:$0xff]
      %v3027 = vld [vmem:[#allocation4 + $0x260] sm:$0xff]
      %v3028 = vld [vmem:[#allocation4 + $0x268] sm:$0xff]
      %v3029 = vld [vmem:[#allocation4 + $0x270] sm:$0xff]
      %v3030 = vld [vmem:[#allocation4 + $0x278] sm:$0xff]
      %v3031 = vld [vmem:[#allocation4 + $0x280] sm:$0xff]
      %v3032 = vld [vmem:[#allocation4 + $0x288] sm:$0xff]
      %v3033 = vld [vmem:[#allocation4 + $0x290] sm:$0xff]
      %v3034 = vld [vmem:[#allocation4 + $0x298] sm:$0xff]
      %v3035 = vld [vmem:[#allocation4 + $0x2a0] sm:$0xff]
      %v3036 = vld [vmem:[#allocation4 + $0x2a8] sm:$0xff]
      %v3037 = vld [vmem:[#allocation4 + $0x2b0] sm:$0xff]
      %v3038 = vld [vmem:[#allocation4 + $0x2b8] sm:$0xff]
      %v3039 = vld [vmem:[#allocation4 + $0x2c0] sm:$0xff]
      %v3040 = vld [vmem:[#allocation4 + $0x2c8] sm:$0xff]
      %v3041 = vld [vmem:[#allocation4 + $0x2d0] sm:$0xff]
      %v3042 = vld [vmem:[#allocation4 + $0x2d8] sm:$0xff]
      %v3043 = vld [vmem:[#allocation4 + $0x2e0] sm:$0xff]
      %v3044 = vld [vmem:[#allocation4 + $0x2e8] sm:$0xff]
      %v3045 = vld [vmem:[#allocation4 + $0x2f0] sm:$0xff]
      %v3046 = vld [vmem:[#allocation4 + $0x2f8] sm:$0xff]
      %v3047 = vld [vmem:[#allocation4 + $0x300] sm:$0xff]
      %v3048 = vld [vmem:[#allocation4 + $0x308] sm:$0xff]
      %v3049 = vld [vmem:[#allocation4 + $0x310] sm:$0xff]
      %v3050 = vld [vmem:[#allocation4 + $0x318] sm:$0xff]
      %v3051 = vld [vmem:[#allocation4 + $0x320] sm:$0xff]
      %v3052 = vld [vmem:[#allocation4 + $0x328] sm:$0xff]
      %v3053 = vld [vmem:[#allocation4 + $0x330] sm:$0xff]
      %v3054 = vld [vmem:[#allocation4 + $0x338] sm:$0xff]
      %v3055 = vld [vmem:[#allocation4 + $0x340] sm:$0xff]
      %v3056 = vld [vmem:[#allocation4 + $0x348] sm:$0xff]
      %v3057 = vld [vmem:[#allocation4 + $0x350] sm:$0xff]
      %v3058 = vld [vmem:[#allocation4 + $0x358] sm:$0xff]
      %v3059 = vld [vmem:[#allocation4 + $0x360] sm:$0xff]
      %v3060 = vld [vmem:[#allocation4 + $0x368] sm:$0xff]
      %v3061 = vld [vmem:[#allocation4 + $0x370] sm:$0xff]
      %v3062 = vld [vmem:[#allocation4 + $0x378] sm:$0xff]
      %v3063 = vld [vmem:[#allocation4 + $0x380] sm:$0xff]
      %v3064 = vld [vmem:[#allocation4 + $0x388] sm:$0xff]
      %v3065 = vld [vmem:[#allocation4 + $0x390] sm:$0xff]
      %v3066 = vld [vmem:[#allocation4 + $0x398] sm:$0xff]
      %v3067 = vld [vmem:[#allocation4 + $0x3a0] sm:$0xff]
      %v3068 = vld [vmem:[#allocation4 + $0x3a8] sm:$0xff]
      %v3069 = vld [vmem:[#allocation4 + $0x3b0] sm:$0xff]
      %v3070 = vld [vmem:[#allocation4 + $0x3b8] sm:$0xff]
      %v3071 = vld [vmem:[#allocation4 + $0x3c0] sm:$0xff]
      %v3072 = vld [vmem:[#allocation4 + $0x3c8] sm:$0xff]
      %v3073 = vld [vmem:[#allocation4 + $0x3d0] sm:$0xff]
      %v3074 = vld [vmem:[#allocation4 + $0x3d8] sm:$0xff]
      %v3075 = vld [vmem:[#allocation4 + $0x3e0] sm:$0xff]
      %v3076 = vld [vmem:[#allocation4 + $0x3e8] sm:$0xff]
      %v3077 = vld [vmem:[#allocation4 + $0x3f0] sm:$0xff]
      %v3078 = vld [vmem:[#allocation4 + $0x3f8] sm:$0xff]
      %v3079 = vld [vmem:[#allocation4 + $0x400] sm:$0xff]
      %v3080 = vld [vmem:[#allocation4 + $0x408] sm:$0xff]
      %v3081 = vld [vmem:[#allocation4 + $0x410] sm:$0xff]
      %v3082 = vld [vmem:[#allocation4 + $0x418] sm:$0xff]
      %v3083 = vld [vmem:[#allocation4 + $0x420] sm:$0xff]
      %v3084 = vld [vmem:[#allocation4 + $0x428] sm:$0xff]
      %v3085 = vld [vmem:[#allocation4 + $0x430] sm:$0xff]
      %v3086 = vld [vmem:[#allocation4 + $0x438] sm:$0xff]
      %v3087 = vld [vmem:[#allocation4 + $0x440] sm:$0xff]
      %v3088 = vld [vmem:[#allocation4 + $0x448] sm:$0xff]
      %v3089 = vld [vmem:[#allocation4 + $0x450] sm:$0xff]
      %v3090 = vld [vmem:[#allocation4 + $0x458] sm:$0xff]
      %v3091 = vld [vmem:[#allocation4 + $0x460] sm:$0xff]
      %v3092 = vld [vmem:[#allocation4 + $0x468] sm:$0xff]
      %v3093 = vld [vmem:[#allocation4 + $0x470] sm:$0xff]
      %v3094 = vld [vmem:[#allocation4 + $0x478] sm:$0xff]
      %v3095 = vld [vmem:[#allocation4 + $0x480] sm:$0xff]
      %v3096 = vld [vmem:[#allocation4 + $0x488] sm:$0xff]
      %v3097 = vld [vmem:[#allocation4 + $0x490] sm:$0xff]
      %v3098 = vld [vmem:[#allocation4 + $0x498] sm:$0xff]
      %v3099 = vld [vmem:[#allocation4 + $0x4a0] sm:$0xff]
      %v3100 = vld [vmem:[#allocation4 + $0x4a8] sm:$0xff]
      %v3101 = vld [vmem:[#allocation4 + $0x4b0] sm:$0xff]
      %v3102 = vld [vmem:[#allocation4 + $0x4b8] sm:$0xff]
      %v3103 = vld [vmem:[#allocation4 + $0x4c0] sm:$0xff]
      %v3104 = vld [vmem:[#allocation4 + $0x4c8] sm:$0xff]
      %v3105 = vld [vmem:[#allocation4 + $0x4d0] sm:$0xff]
      %v3106 = vld [vmem:[#allocation4 + $0x4d8] sm:$0xff]
      %v3107 = vld [vmem:[#allocation4 + $0x4e0] sm:$0xff]
      %v3108 = vld [vmem:[#allocation4 + $0x4e8] sm:$0xff]
      %v3109 = vld [vmem:[#allocation4 + $0x4f0] sm:$0xff]
      %v3110 = vld [vmem:[#allocation4 + $0x4f8] sm:$0xff]
      %v3111 = vld [vmem:[#allocation4 + $0x500] sm:$0xff]
      %v3112 = vld [vmem:[#allocation4 + $0x508] sm:$0xff]
      %v3113 = vld [vmem:[#allocation4 + $0x510] sm:$0xff]
      %v3114 = vld [vmem:[#allocation4 + $0x518] sm:$0xff]
      %v3115 = vld [vmem:[#allocation4 + $0x520] sm:$0xff]
      %v3116 = vld [vmem:[#allocation4 + $0x528] sm:$0xff]
      %v3117 = vld [vmem:[#allocation4 + $0x530] sm:$0xff]
      %v3118 = vld [vmem:[#allocation4 + $0x538] sm:$0xff]
      %v3119 = vld [vmem:[#allocation4 + $0x540] sm:$0xff]
      %v3120 = vld [vmem:[#allocation4 + $0x548] sm:$0xff]
      %v3121 = vld [vmem:[#allocation4 + $0x550] sm:$0xff]
      %v3122 = vld [vmem:[#allocation4 + $0x558] sm:$0xff]
      %v3123 = vld [vmem:[#allocation4 + $0x560] sm:$0xff]
      %v3124 = vld [vmem:[#allocation4 + $0x568] sm:$0xff]
      %v3125 = vld [vmem:[#allocation4 + $0x570] sm:$0xff]
      %v3126 = vld [vmem:[#allocation4 + $0x578] sm:$0xff]
      %v3127 = vld [vmem:[#allocation4 + $0x580] sm:$0xff]
      %v3128 = vld [vmem:[#allocation4 + $0x588] sm:$0xff]
      %v3129 = vld [vmem:[#allocation4 + $0x590] sm:$0xff]
      %v3130 = vld [vmem:[#allocation4 + $0x598] sm:$0xff]
      %v3131 = vld [vmem:[#allocation4 + $0x5a0] sm:$0xff]
      %v3132 = vld [vmem:[#allocation4 + $0x5a8] sm:$0xff]
      %v3133 = vld [vmem:[#allocation4 + $0x5b0] sm:$0xff]
      %v3134 = vld [vmem:[#allocation4 + $0x5b8] sm:$0xff]
      %v3135 = vld [vmem:[#allocation4 + $0x5c0] sm:$0xff]
      %v3136 = vld [vmem:[#allocation4 + $0x5c8] sm:$0xff]
      %v3137 = vld [vmem:[#allocation4 + $0x5d0] sm:$0xff]
      %v3138 = vld [vmem:[#allocation4 + $0x5d8] sm:$0xff]
      %v3139 = vld [vmem:[#allocation4 + $0x5e0] sm:$0xff]
      %v3140 = vld [vmem:[#allocation4 + $0x5e8] sm:$0xff]
      %v3141 = vld [vmem:[#allocation4 + $0x5f0] sm:$0xff]
      %v3142 = vld [vmem:[#allocation4 + $0x5f8] sm:$0xff]
      %v3143 = vlaneseq
      %v3144 = vshrl.u32 %v3143, 7
      %v3145 = vsub.s32 0, %v3144
      %v3146 = vrot.slane %v2950, %v3145
      %v3147 = vlaneseq
      %v3148 = vshrl.u32 %v3147, 7
      %v3149 = vsub.s32 1, %v3148
      %v3150 = vrot.slane %v2950, %v3149
      %v3151 = vlaneseq
      %v3152 = vshrl.u32 %v3151, 7
      %v3153 = vsub.s32 2, %v3152
      %v3154 = vrot.slane %v2950, %v3153
      %v3155 = vlaneseq
      %v3156 = vshrl.u32 %v3155, 7
      %v3157 = vsub.s32 3, %v3156
      %v3158 = vrot.slane %v2950, %v3157
      %vm3159 = vcmp.eq.s32.totalorder %v2951, %v3146
      %vm3160 = vcmp.eq.s32.totalorder %v2952, %v3150
      %vm3161 = vcmp.eq.s32.totalorder %v2953, %v3154
      %vm3162 = vcmp.eq.s32.totalorder %v2954, %v3158
      %vm3163 = vcmp.eq.s32.totalorder %v2955, %v3146
      %vm3164 = vcmp.eq.s32.totalorder %v2956, %v3150
      %vm3165 = vcmp.eq.s32.totalorder %v2957, %v3154
      %vm3166 = vcmp.eq.s32.totalorder %v2958, %v3158
      %vm3167 = vcmp.eq.s32.totalorder %v2959, %v3146
      %vm3168 = vcmp.eq.s32.totalorder %v2960, %v3150
      %vm3169 = vcmp.eq.s32.totalorder %v2961, %v3154
      %vm3170 = vcmp.eq.s32.totalorder %v2962, %v3158
      %vm3171 = vcmp.eq.s32.totalorder %v2963, %v3146
      %vm3172 = vcmp.eq.s32.totalorder %v2964, %v3150
      %vm3173 = vcmp.eq.s32.totalorder %v2965, %v3154
      %vm3174 = vcmp.eq.s32.totalorder %v2966, %v3158
      %vm3175 = vcmp.eq.s32.totalorder %v2967, %v3146
      %vm3176 = vcmp.eq.s32.totalorder %v2968, %v3150
      %vm3177 = vcmp.eq.s32.totalorder %v2969, %v3154
      %vm3178 = vcmp.eq.s32.totalorder %v2970, %v3158
      %vm3179 = vcmp.eq.s32.totalorder %v2971, %v3146
      %vm3180 = vcmp.eq.s32.totalorder %v2972, %v3150
      %vm3181 = vcmp.eq.s32.totalorder %v2973, %v3154
      %vm3182 = vcmp.eq.s32.totalorder %v2974, %v3158
      %vm3183 = vcmp.eq.s32.totalorder %v2975, %v3146
      %vm3184 = vcmp.eq.s32.totalorder %v2976, %v3150
      %vm3185 = vcmp.eq.s32.totalorder %v2977, %v3154
      %vm3186 = vcmp.eq.s32.totalorder %v2978, %v3158
      %vm3187 = vcmp.eq.s32.totalorder %v2979, %v3146
      %vm3188 = vcmp.eq.s32.totalorder %v2980, %v3150
      %vm3189 = vcmp.eq.s32.totalorder %v2981, %v3154
      %vm3190 = vcmp.eq.s32.totalorder %v2982, %v3158
      %vm3191 = vcmp.eq.s32.totalorder %v2983, %v3146
      %vm3192 = vcmp.eq.s32.totalorder %v2984, %v3150
      %vm3193 = vcmp.eq.s32.totalorder %v2985, %v3154
      %vm3194 = vcmp.eq.s32.totalorder %v2986, %v3158
      %vm3195 = vcmp.eq.s32.totalorder %v2987, %v3146
      %vm3196 = vcmp.eq.s32.totalorder %v2988, %v3150
      %vm3197 = vcmp.eq.s32.totalorder %v2989, %v3154
      %vm3198 = vcmp.eq.s32.totalorder %v2990, %v3158
      %vm3199 = vcmp.eq.s32.totalorder %v2991, %v3146
      %vm3200 = vcmp.eq.s32.totalorder %v2992, %v3150
      %vm3201 = vcmp.eq.s32.totalorder %v2993, %v3154
      %vm3202 = vcmp.eq.s32.totalorder %v2994, %v3158
      %vm3203 = vcmp.eq.s32.totalorder %v2995, %v3146
      %vm3204 = vcmp.eq.s32.totalorder %v2996, %v3150
      %vm3205 = vcmp.eq.s32.totalorder %v2997, %v3154
      %vm3206 = vcmp.eq.s32.totalorder %v2998, %v3158
      %vm3207 = vcmp.eq.s32.totalorder %v2999, %v3146
      %vm3208 = vcmp.eq.s32.totalorder %v3000, %v3150
      %vm3209 = vcmp.eq.s32.totalorder %v3001, %v3154
      %vm3210 = vcmp.eq.s32.totalorder %v3002, %v3158
      %vm3211 = vcmp.eq.s32.totalorder %v3003, %v3146
      %vm3212 = vcmp.eq.s32.totalorder %v3004, %v3150
      %vm3213 = vcmp.eq.s32.totalorder %v3005, %v3154
      %vm3214 = vcmp.eq.s32.totalorder %v3006, %v3158
      %vm3215 = vcmp.eq.s32.totalorder %v3007, %v3146
      %vm3216 = vcmp.eq.s32.totalorder %v3008, %v3150
      %vm3217 = vcmp.eq.s32.totalorder %v3009, %v3154
      %vm3218 = vcmp.eq.s32.totalorder %v3010, %v3158
      %vm3219 = vcmp.eq.s32.totalorder %v3011, %v3146
      %vm3220 = vcmp.eq.s32.totalorder %v3012, %v3150
      %vm3221 = vcmp.eq.s32.totalorder %v3013, %v3154
      %vm3222 = vcmp.eq.s32.totalorder %v3014, %v3158
      %vm3223 = vcmp.eq.s32.totalorder %v3015, %v3146
      %vm3224 = vcmp.eq.s32.totalorder %v3016, %v3150
      %vm3225 = vcmp.eq.s32.totalorder %v3017, %v3154
      %vm3226 = vcmp.eq.s32.totalorder %v3018, %v3158
      %vm3227 = vcmp.eq.s32.totalorder %v3019, %v3146
      %vm3228 = vcmp.eq.s32.totalorder %v3020, %v3150
      %vm3229 = vcmp.eq.s32.totalorder %v3021, %v3154
      %vm3230 = vcmp.eq.s32.totalorder %v3022, %v3158
      %vm3231 = vcmp.eq.s32.totalorder %v3023, %v3146
      %vm3232 = vcmp.eq.s32.totalorder %v3024, %v3150
      %vm3233 = vcmp.eq.s32.totalorder %v3025, %v3154
      %vm3234 = vcmp.eq.s32.totalorder %v3026, %v3158
      %vm3235 = vcmp.eq.s32.totalorder %v3027, %v3146
      %vm3236 = vcmp.eq.s32.totalorder %v3028, %v3150
      %vm3237 = vcmp.eq.s32.totalorder %v3029, %v3154
      %vm3238 = vcmp.eq.s32.totalorder %v3030, %v3158
      %vm3239 = vcmp.eq.s32.totalorder %v3031, %v3146
      %vm3240 = vcmp.eq.s32.totalorder %v3032, %v3150
      %vm3241 = vcmp.eq.s32.totalorder %v3033, %v3154
      %vm3242 = vcmp.eq.s32.totalorder %v3034, %v3158
      %vm3243 = vcmp.eq.s32.totalorder %v3035, %v3146
      %vm3244 = vcmp.eq.s32.totalorder %v3036, %v3150
      %vm3245 = vcmp.eq.s32.totalorder %v3037, %v3154
      %vm3246 = vcmp.eq.s32.totalorder %v3038, %v3158
      %vm3247 = vcmp.eq.s32.totalorder %v3039, %v3146
      %vm3248 = vcmp.eq.s32.totalorder %v3040, %v3150
      %vm3249 = vcmp.eq.s32.totalorder %v3041, %v3154
      %vm3250 = vcmp.eq.s32.totalorder %v3042, %v3158
      %vm3251 = vcmp.eq.s32.totalorder %v3043, %v3146
      %vm3252 = vcmp.eq.s32.totalorder %v3044, %v3150
      %vm3253 = vcmp.eq.s32.totalorder %v3045, %v3154
      %vm3254 = vcmp.eq.s32.totalorder %v3046, %v3158
      %vm3255 = vcmp.eq.s32.totalorder %v3047, %v3146
      %vm3256 = vcmp.eq.s32.totalorder %v3048, %v3150
      %vm3257 = vcmp.eq.s32.totalorder %v3049, %v3154
      %vm3258 = vcmp.eq.s32.totalorder %v3050, %v3158
      %vm3259 = vcmp.eq.s32.totalorder %v3051, %v3146
      %vm3260 = vcmp.eq.s32.totalorder %v3052, %v3150
      %vm3261 = vcmp.eq.s32.totalorder %v3053, %v3154
      %vm3262 = vcmp.eq.s32.totalorder %v3054, %v3158
      %vm3263 = vcmp.eq.s32.totalorder %v3055, %v3146
      %vm3264 = vcmp.eq.s32.totalorder %v3056, %v3150
      %vm3265 = vcmp.eq.s32.totalorder %v3057, %v3154
      %vm3266 = vcmp.eq.s32.totalorder %v3058, %v3158
      %vm3267 = vcmp.eq.s32.totalorder %v3059, %v3146
      %vm3268 = vcmp.eq.s32.totalorder %v3060, %v3150
      %vm3269 = vcmp.eq.s32.totalorder %v3061, %v3154
      %vm3270 = vcmp.eq.s32.totalorder %v3062, %v3158
      %vm3271 = vcmp.eq.s32.totalorder %v3063, %v3146
      %vm3272 = vcmp.eq.s32.totalorder %v3064, %v3150
      %vm3273 = vcmp.eq.s32.totalorder %v3065, %v3154
      %vm3274 = vcmp.eq.s32.totalorder %v3066, %v3158
      %vm3275 = vcmp.eq.s32.totalorder %v3067, %v3146
      %vm3276 = vcmp.eq.s32.totalorder %v3068, %v3150
      %vm3277 = vcmp.eq.s32.totalorder %v3069, %v3154
      %vm3278 = vcmp.eq.s32.totalorder %v3070, %v3158
      %vm3279 = vcmp.eq.s32.totalorder %v3071, %v3146
      %vm3280 = vcmp.eq.s32.totalorder %v3072, %v3150
      %vm3281 = vcmp.eq.s32.totalorder %v3073, %v3154
      %vm3282 = vcmp.eq.s32.totalorder %v3074, %v3158
      %vm3283 = vcmp.eq.s32.totalorder %v3075, %v3146
      %vm3284 = vcmp.eq.s32.totalorder %v3076, %v3150
      %vm3285 = vcmp.eq.s32.totalorder %v3077, %v3154
      %vm3286 = vcmp.eq.s32.totalorder %v3078, %v3158
      %vm3287 = vcmp.eq.s32.totalorder %v3079, %v3146
      %vm3288 = vcmp.eq.s32.totalorder %v3080, %v3150
      %vm3289 = vcmp.eq.s32.totalorder %v3081, %v3154
      %vm3290 = vcmp.eq.s32.totalorder %v3082, %v3158
      %vm3291 = vcmp.eq.s32.totalorder %v3083, %v3146
      %vm3292 = vcmp.eq.s32.totalorder %v3084, %v3150
      %vm3293 = vcmp.eq.s32.totalorder %v3085, %v3154
      %vm3294 = vcmp.eq.s32.totalorder %v3086, %v3158
      %vm3295 = vcmp.eq.s32.totalorder %v3087, %v3146
      %vm3296 = vcmp.eq.s32.totalorder %v3088, %v3150
      %vm3297 = vcmp.eq.s32.totalorder %v3089, %v3154
      %vm3298 = vcmp.eq.s32.totalorder %v3090, %v3158
      %vm3299 = vcmp.eq.s32.totalorder %v3091, %v3146
      %vm3300 = vcmp.eq.s32.totalorder %v3092, %v3150
      %vm3301 = vcmp.eq.s32.totalorder %v3093, %v3154
      %vm3302 = vcmp.eq.s32.totalorder %v3094, %v3158
      %vm3303 = vcmp.eq.s32.totalorder %v3095, %v3146
      %vm3304 = vcmp.eq.s32.totalorder %v3096, %v3150
      %vm3305 = vcmp.eq.s32.totalorder %v3097, %v3154
      %vm3306 = vcmp.eq.s32.totalorder %v3098, %v3158
      %vm3307 = vcmp.eq.s32.totalorder %v3099, %v3146
      %vm3308 = vcmp.eq.s32.totalorder %v3100, %v3150
      %vm3309 = vcmp.eq.s32.totalorder %v3101, %v3154
      %vm3310 = vcmp.eq.s32.totalorder %v3102, %v3158
      %vm3311 = vcmp.eq.s32.totalorder %v3103, %v3146
      %vm3312 = vcmp.eq.s32.totalorder %v3104, %v3150
      %vm3313 = vcmp.eq.s32.totalorder %v3105, %v3154
      %vm3314 = vcmp.eq.s32.totalorder %v3106, %v3158
      %vm3315 = vcmp.eq.s32.totalorder %v3107, %v3146
      %vm3316 = vcmp.eq.s32.totalorder %v3108, %v3150
      %vm3317 = vcmp.eq.s32.totalorder %v3109, %v3154
      %vm3318 = vcmp.eq.s32.totalorder %v3110, %v3158
      %vm3319 = vcmp.eq.s32.totalorder %v3111, %v3146
      %vm3320 = vcmp.eq.s32.totalorder %v3112, %v3150
      %vm3321 = vcmp.eq.s32.totalorder %v3113, %v3154
      %vm3322 = vcmp.eq.s32.totalorder %v3114, %v3158
      %vm3323 = vcmp.eq.s32.totalorder %v3115, %v3146
      %vm3324 = vcmp.eq.s32.totalorder %v3116, %v3150
      %vm3325 = vcmp.eq.s32.totalorder %v3117, %v3154
      %vm3326 = vcmp.eq.s32.totalorder %v3118, %v3158
      %vm3327 = vcmp.eq.s32.totalorder %v3119, %v3146
      %vm3328 = vcmp.eq.s32.totalorder %v3120, %v3150
      %vm3329 = vcmp.eq.s32.totalorder %v3121, %v3154
      %vm3330 = vcmp.eq.s32.totalorder %v3122, %v3158
      %vm3331 = vcmp.eq.s32.totalorder %v3123, %v3146
      %vm3332 = vcmp.eq.s32.totalorder %v3124, %v3150
      %vm3333 = vcmp.eq.s32.totalorder %v3125, %v3154
      %vm3334 = vcmp.eq.s32.totalorder %v3126, %v3158
      %vm3335 = vcmp.eq.s32.totalorder %v3127, %v3146
      %vm3336 = vcmp.eq.s32.totalorder %v3128, %v3150
      %vm3337 = vcmp.eq.s32.totalorder %v3129, %v3154
      %vm3338 = vcmp.eq.s32.totalorder %v3130, %v3158
      %vm3339 = vcmp.eq.s32.totalorder %v3131, %v3146
      %vm3340 = vcmp.eq.s32.totalorder %v3132, %v3150
      %vm3341 = vcmp.eq.s32.totalorder %v3133, %v3154
      %vm3342 = vcmp.eq.s32.totalorder %v3134, %v3158
      %vm3343 = vcmp.eq.s32.totalorder %v3135, %v3146
      %vm3344 = vcmp.eq.s32.totalorder %v3136, %v3150
      %vm3345 = vcmp.eq.s32.totalorder %v3137, %v3154
      %vm3346 = vcmp.eq.s32.totalorder %v3138, %v3158
      %vm3347 = vcmp.eq.s32.totalorder %v3139, %v3146
      %vm3348 = vcmp.eq.s32.totalorder %v3140, %v3150
      %vm3349 = vcmp.eq.s32.totalorder %v3141, %v3154
      %vm3350 = vcmp.eq.s32.totalorder %v3142, %v3158
      %v3351 = vsel %vm3159, 1, 0
      %v3352 = vsel %vm3160, 1, 0
      %v3353 = vsel %vm3161, 1, 0
      %v3354 = vsel %vm3162, 1, 0
      %v3355 = vsel %vm3163, 1, 0
      %v3356 = vsel %vm3164, 1, 0
      %v3357 = vsel %vm3165, 1, 0
      %v3358 = vsel %vm3166, 1, 0
      %v3359 = vsel %vm3167, 1, 0
      %v3360 = vsel %vm3168, 1, 0
      %v3361 = vsel %vm3169, 1, 0
      %v3362 = vsel %vm3170, 1, 0
      %v3363 = vsel %vm3171, 1, 0
      %v3364 = vsel %vm3172, 1, 0
      %v3365 = vsel %vm3173, 1, 0
      %v3366 = vsel %vm3174, 1, 0
      %v3367 = vsel %vm3175, 1, 0
      %v3368 = vsel %vm3176, 1, 0
      %v3369 = vsel %vm3177, 1, 0
      %v3370 = vsel %vm3178, 1, 0
      %v3371 = vsel %vm3179, 1, 0
      %v3372 = vsel %vm3180, 1, 0
      %v3373 = vsel %vm3181, 1, 0
      %v3374 = vsel %vm3182, 1, 0
      %v3375 = vsel %vm3183, 1, 0
      %v3376 = vsel %vm3184, 1, 0
      %v3377 = vsel %vm3185, 1, 0
      %v3378 = vsel %vm3186, 1, 0
      %v3379 = vsel %vm3187, 1, 0
      %v3380 = vsel %vm3188, 1, 0
      %v3381 = vsel %vm3189, 1, 0
      %v3382 = vsel %vm3190, 1, 0
      %v3383 = vsel %vm3191, 1, 0
      %v3384 = vsel %vm3192, 1, 0
      %v3385 = vsel %vm3193, 1, 0
      %v3386 = vsel %vm3194, 1, 0
      %v3387 = vsel %vm3195, 1, 0
      %v3388 = vsel %vm3196, 1, 0
      %v3389 = vsel %vm3197, 1, 0
      %v3390 = vsel %vm3198, 1, 0
      %v3391 = vsel %vm3199, 1, 0
      %v3392 = vsel %vm3200, 1, 0
      %v3393 = vsel %vm3201, 1, 0
      %v3394 = vsel %vm3202, 1, 0
      %v3395 = vsel %vm3203, 1, 0
      %v3396 = vsel %vm3204, 1, 0
      %v3397 = vsel %vm3205, 1, 0
      %v3398 = vsel %vm3206, 1, 0
      %v3399 = vsel %vm3207, 1, 0
      %v3400 = vsel %vm3208, 1, 0
      %v3401 = vsel %vm3209, 1, 0
      %v3402 = vsel %vm3210, 1, 0
      %v3403 = vsel %vm3211, 1, 0
      %v3404 = vsel %vm3212, 1, 0
      %v3405 = vsel %vm3213, 1, 0
      %v3406 = vsel %vm3214, 1, 0
      %v3407 = vsel %vm3215, 1, 0
      %v3408 = vsel %vm3216, 1, 0
      %v3409 = vsel %vm3217, 1, 0
      %v3410 = vsel %vm3218, 1, 0
      %v3411 = vsel %vm3219, 1, 0
      %v3412 = vsel %vm3220, 1, 0
      %v3413 = vsel %vm3221, 1, 0
      %v3414 = vsel %vm3222, 1, 0
      %v3415 = vsel %vm3223, 1, 0
      %v3416 = vsel %vm3224, 1, 0
      %v3417 = vsel %vm3225, 1, 0
      %v3418 = vsel %vm3226, 1, 0
      %v3419 = vsel %vm3227, 1, 0
      %v3420 = vsel %vm3228, 1, 0
      %v3421 = vsel %vm3229, 1, 0
      %v3422 = vsel %vm3230, 1, 0
      %v3423 = vsel %vm3231, 1, 0
      %v3424 = vsel %vm3232, 1, 0
      %v3425 = vsel %vm3233, 1, 0
      %v3426 = vsel %vm3234, 1, 0
      %v3427 = vsel %vm3235, 1, 0
      %v3428 = vsel %vm3236, 1, 0
      %v3429 = vsel %vm3237, 1, 0
      %v3430 = vsel %vm3238, 1, 0
      %v3431 = vsel %vm3239, 1, 0
      %v3432 = vsel %vm3240, 1, 0
      %v3433 = vsel %vm3241, 1, 0
      %v3434 = vsel %vm3242, 1, 0
      %v3435 = vsel %vm3243, 1, 0
      %v3436 = vsel %vm3244, 1, 0
      %v3437 = vsel %vm3245, 1, 0
      %v3438 = vsel %vm3246, 1, 0
      %v3439 = vsel %vm3247, 1, 0
      %v3440 = vsel %vm3248, 1, 0
      %v3441 = vsel %vm3249, 1, 0
      %v3442 = vsel %vm3250, 1, 0
      %v3443 = vsel %vm3251, 1, 0
      %v3444 = vsel %vm3252, 1, 0
      %v3445 = vsel %vm3253, 1, 0
      %v3446 = vsel %vm3254, 1, 0
      %v3447 = vsel %vm3255, 1, 0
      %v3448 = vsel %vm3256, 1, 0
      %v3449 = vsel %vm3257, 1, 0
      %v3450 = vsel %vm3258, 1, 0
      %v3451 = vsel %vm3259, 1, 0
      %v3452 = vsel %vm3260, 1, 0
      %v3453 = vsel %vm3261, 1, 0
      %v3454 = vsel %vm3262, 1, 0
      %v3455 = vsel %vm3263, 1, 0
      %v3456 = vsel %vm3264, 1, 0
      %v3457 = vsel %vm3265, 1, 0
      %v3458 = vsel %vm3266, 1, 0
      %v3459 = vsel %vm3267, 1, 0
      %v3460 = vsel %vm3268, 1, 0
      %v3461 = vsel %vm3269, 1, 0
      %v3462 = vsel %vm3270, 1, 0
      %v3463 = vsel %vm3271, 1, 0
      %v3464 = vsel %vm3272, 1, 0
      %v3465 = vsel %vm3273, 1, 0
      %v3466 = vsel %vm3274, 1, 0
      %v3467 = vsel %vm3275, 1, 0
      %v3468 = vsel %vm3276, 1, 0
      %v3469 = vsel %vm3277, 1, 0
      %v3470 = vsel %vm3278, 1, 0
      %v3471 = vsel %vm3279, 1, 0
      %v3472 = vsel %vm3280, 1, 0
      %v3473 = vsel %vm3281, 1, 0
      %v3474 = vsel %vm3282, 1, 0
      %v3475 = vsel %vm3283, 1, 0
      %v3476 = vsel %vm3284, 1, 0
      %v3477 = vsel %vm3285, 1, 0
      %v3478 = vsel %vm3286, 1, 0
      %v3479 = vsel %vm3287, 1, 0
      %v3480 = vsel %vm3288, 1, 0
      %v3481 = vsel %vm3289, 1, 0
      %v3482 = vsel %vm3290, 1, 0
      %v3483 = vsel %vm3291, 1, 0
      %v3484 = vsel %vm3292, 1, 0
      %v3485 = vsel %vm3293, 1, 0
      %v3486 = vsel %vm3294, 1, 0
      %v3487 = vsel %vm3295, 1, 0
      %v3488 = vsel %vm3296, 1, 0
      %v3489 = vsel %vm3297, 1, 0
      %v3490 = vsel %vm3298, 1, 0
      %v3491 = vsel %vm3299, 1, 0
      %v3492 = vsel %vm3300, 1, 0
      %v3493 = vsel %vm3301, 1, 0
      %v3494 = vsel %vm3302, 1, 0
      %v3495 = vsel %vm3303, 1, 0
      %v3496 = vsel %vm3304, 1, 0
      %v3497 = vsel %vm3305, 1, 0
      %v3498 = vsel %vm3306, 1, 0
      %v3499 = vsel %vm3307, 1, 0
      %v3500 = vsel %vm3308, 1, 0
      %v3501 = vsel %vm3309, 1, 0
      %v3502 = vsel %vm3310, 1, 0
      %v3503 = vsel %vm3311, 1, 0
      %v3504 = vsel %vm3312, 1, 0
      %v3505 = vsel %vm3313, 1, 0
      %v3506 = vsel %vm3314, 1, 0
      %v3507 = vsel %vm3315, 1, 0
      %v3508 = vsel %vm3316, 1, 0
      %v3509 = vsel %vm3317, 1, 0
      %v3510 = vsel %vm3318, 1, 0
      %v3511 = vsel %vm3319, 1, 0
      %v3512 = vsel %vm3320, 1, 0
      %v3513 = vsel %vm3321, 1, 0
      %v3514 = vsel %vm3322, 1, 0
      %v3515 = vsel %vm3323, 1, 0
      %v3516 = vsel %vm3324, 1, 0
      %v3517 = vsel %vm3325, 1, 0
      %v3518 = vsel %vm3326, 1, 0
      %v3519 = vsel %vm3327, 1, 0
      %v3520 = vsel %vm3328, 1, 0
      %v3521 = vsel %vm3329, 1, 0
      %v3522 = vsel %vm3330, 1, 0
      %v3523 = vsel %vm3331, 1, 0
      %v3524 = vsel %vm3332, 1, 0
      %v3525 = vsel %vm3333, 1, 0
      %v3526 = vsel %vm3334, 1, 0
      %v3527 = vsel %vm3335, 1, 0
      %v3528 = vsel %vm3336, 1, 0
      %v3529 = vsel %vm3337, 1, 0
      %v3530 = vsel %vm3338, 1, 0
      %v3531 = vsel %vm3339, 1, 0
      %v3532 = vsel %vm3340, 1, 0
      %v3533 = vsel %vm3341, 1, 0
      %v3534 = vsel %vm3342, 1, 0
      %v3535 = vsel %vm3343, 1, 0
      %v3536 = vsel %vm3344, 1, 0
      %v3537 = vsel %vm3345, 1, 0
      %v3538 = vsel %vm3346, 1, 0
      %v3539 = vsel %vm3347, 1, 0
      %v3540 = vsel %vm3348, 1, 0
      %v3541 = vsel %vm3349, 1, 0
      %v3542 = vsel %vm3350, 1, 0
      %v3543 = vcvt.s32.f32 %v3351
      %v3544 = vcvt.s32.f32 %v3352
      %v3545 = vcvt.s32.f32 %v3353
      %v3546 = vcvt.s32.f32 %v3354
      %v3547 = vcvt.s32.f32 %v3355
      %v3548 = vcvt.s32.f32 %v3356
      %v3549 = vcvt.s32.f32 %v3357
      %v3550 = vcvt.s32.f32 %v3358
      %v3551 = vcvt.s32.f32 %v3359
      %v3552 = vcvt.s32.f32 %v3360
      %v3553 = vcvt.s32.f32 %v3361
      %v3554 = vcvt.s32.f32 %v3362
      %v3555 = vcvt.s32.f32 %v3363
      %v3556 = vcvt.s32.f32 %v3364
      %v3557 = vcvt.s32.f32 %v3365
      %v3558 = vcvt.s32.f32 %v3366
      %v3559 = vcvt.s32.f32 %v3367
      %v3560 = vcvt.s32.f32 %v3368
      %v3561 = vcvt.s32.f32 %v3369
      %v3562 = vcvt.s32.f32 %v3370
      %v3563 = vcvt.s32.f32 %v3371
      %v3564 = vcvt.s32.f32 %v3372
      %v3565 = vcvt.s32.f32 %v3373
      %v3566 = vcvt.s32.f32 %v3374
      %v3567 = vcvt.s32.f32 %v3375
      %v3568 = vcvt.s32.f32 %v3376
      %v3569 = vcvt.s32.f32 %v3377
      %v3570 = vcvt.s32.f32 %v3378
      %v3571 = vcvt.s32.f32 %v3379
      %v3572 = vcvt.s32.f32 %v3380
      %v3573 = vcvt.s32.f32 %v3381
      %v3574 = vcvt.s32.f32 %v3382
      %v3575 = vcvt.s32.f32 %v3383
      %v3576 = vcvt.s32.f32 %v3384
      %v3577 = vcvt.s32.f32 %v3385
      %v3578 = vcvt.s32.f32 %v3386
      %v3579 = vcvt.s32.f32 %v3387
      %v3580 = vcvt.s32.f32 %v3388
      %v3581 = vcvt.s32.f32 %v3389
      %v3582 = vcvt.s32.f32 %v3390
      %v3583 = vcvt.s32.f32 %v3391
      %v3584 = vcvt.s32.f32 %v3392
      %v3585 = vcvt.s32.f32 %v3393
      %v3586 = vcvt.s32.f32 %v3394
      %v3587 = vcvt.s32.f32 %v3395
      %v3588 = vcvt.s32.f32 %v3396
      %v3589 = vcvt.s32.f32 %v3397
      %v3590 = vcvt.s32.f32 %v3398
      %v3591 = vcvt.s32.f32 %v3399
      %v3592 = vcvt.s32.f32 %v3400
      %v3593 = vcvt.s32.f32 %v3401
      %v3594 = vcvt.s32.f32 %v3402
      %v3595 = vcvt.s32.f32 %v3403
      %v3596 = vcvt.s32.f32 %v3404
      %v3597 = vcvt.s32.f32 %v3405
      %v3598 = vcvt.s32.f32 %v3406
      %v3599 = vcvt.s32.f32 %v3407
      %v3600 = vcvt.s32.f32 %v3408
      %v3601 = vcvt.s32.f32 %v3409
      %v3602 = vcvt.s32.f32 %v3410
      %v3603 = vcvt.s32.f32 %v3411
      %v3604 = vcvt.s32.f32 %v3412
      %v3605 = vcvt.s32.f32 %v3413
      %v3606 = vcvt.s32.f32 %v3414
      %v3607 = vcvt.s32.f32 %v3415
      %v3608 = vcvt.s32.f32 %v3416
      %v3609 = vcvt.s32.f32 %v3417
      %v3610 = vcvt.s32.f32 %v3418
      %v3611 = vcvt.s32.f32 %v3419
      %v3612 = vcvt.s32.f32 %v3420
      %v3613 = vcvt.s32.f32 %v3421
      %v3614 = vcvt.s32.f32 %v3422
      %v3615 = vcvt.s32.f32 %v3423
      %v3616 = vcvt.s32.f32 %v3424
      %v3617 = vcvt.s32.f32 %v3425
      %v3618 = vcvt.s32.f32 %v3426
      %v3619 = vcvt.s32.f32 %v3427
      %v3620 = vcvt.s32.f32 %v3428
      %v3621 = vcvt.s32.f32 %v3429
      %v3622 = vcvt.s32.f32 %v3430
      %v3623 = vcvt.s32.f32 %v3431
      %v3624 = vcvt.s32.f32 %v3432
      %v3625 = vcvt.s32.f32 %v3433
      %v3626 = vcvt.s32.f32 %v3434
      %v3627 = vcvt.s32.f32 %v3435
      %v3628 = vcvt.s32.f32 %v3436
      %v3629 = vcvt.s32.f32 %v3437
      %v3630 = vcvt.s32.f32 %v3438
      %v3631 = vcvt.s32.f32 %v3439
      %v3632 = vcvt.s32.f32 %v3440
      %v3633 = vcvt.s32.f32 %v3441
      %v3634 = vcvt.s32.f32 %v3442
      %v3635 = vcvt.s32.f32 %v3443
      %v3636 = vcvt.s32.f32 %v3444
      %v3637 = vcvt.s32.f32 %v3445
      %v3638 = vcvt.s32.f32 %v3446
      %v3639 = vcvt.s32.f32 %v3447
      %v3640 = vcvt.s32.f32 %v3448
      %v3641 = vcvt.s32.f32 %v3449
      %v3642 = vcvt.s32.f32 %v3450
      %v3643 = vcvt.s32.f32 %v3451
      %v3644 = vcvt.s32.f32 %v3452
      %v3645 = vcvt.s32.f32 %v3453
      %v3646 = vcvt.s32.f32 %v3454
      %v3647 = vcvt.s32.f32 %v3455
      %v3648 = vcvt.s32.f32 %v3456
      %v3649 = vcvt.s32.f32 %v3457
      %v3650 = vcvt.s32.f32 %v3458
      %v3651 = vcvt.s32.f32 %v3459
      %v3652 = vcvt.s32.f32 %v3460
      %v3653 = vcvt.s32.f32 %v3461
      %v3654 = vcvt.s32.f32 %v3462
      %v3655 = vcvt.s32.f32 %v3463
      %v3656 = vcvt.s32.f32 %v3464
      %v3657 = vcvt.s32.f32 %v3465
      %v3658 = vcvt.s32.f32 %v3466
      %v3659 = vcvt.s32.f32 %v3467
      %v3660 = vcvt.s32.f32 %v3468
      %v3661 = vcvt.s32.f32 %v3469
      %v3662 = vcvt.s32.f32 %v3470
      %v3663 = vcvt.s32.f32 %v3471
      %v3664 = vcvt.s32.f32 %v3472
      %v3665 = vcvt.s32.f32 %v3473
      %v3666 = vcvt.s32.f32 %v3474
      %v3667 = vcvt.s32.f32 %v3475
      %v3668 = vcvt.s32.f32 %v3476
      %v3669 = vcvt.s32.f32 %v3477
      %v3670 = vcvt.s32.f32 %v3478
      %v3671 = vcvt.s32.f32 %v3479
      %v3672 = vcvt.s32.f32 %v3480
      %v3673 = vcvt.s32.f32 %v3481
      %v3674 = vcvt.s32.f32 %v3482
      %v3675 = vcvt.s32.f32 %v3483
      %v3676 = vcvt.s32.f32 %v3484
      %v3677 = vcvt.s32.f32 %v3485
      %v3678 = vcvt.s32.f32 %v3486
      %v3679 = vcvt.s32.f32 %v3487
      %v3680 = vcvt.s32.f32 %v3488
      %v3681 = vcvt.s32.f32 %v3489
      %v3682 = vcvt.s32.f32 %v3490
      %v3683 = vcvt.s32.f32 %v3491
      %v3684 = vcvt.s32.f32 %v3492
      %v3685 = vcvt.s32.f32 %v3493
      %v3686 = vcvt.s32.f32 %v3494
      %v3687 = vcvt.s32.f32 %v3495
      %v3688 = vcvt.s32.f32 %v3496
      %v3689 = vcvt.s32.f32 %v3497
      %v3690 = vcvt.s32.f32 %v3498
      %v3691 = vcvt.s32.f32 %v3499
      %v3692 = vcvt.s32.f32 %v3500
      %v3693 = vcvt.s32.f32 %v3501
      %v3694 = vcvt.s32.f32 %v3502
      %v3695 = vcvt.s32.f32 %v3503
      %v3696 = vcvt.s32.f32 %v3504
      %v3697 = vcvt.s32.f32 %v3505
      %v3698 = vcvt.s32.f32 %v3506
      %v3699 = vcvt.s32.f32 %v3507
      %v3700 = vcvt.s32.f32 %v3508
      %v3701 = vcvt.s32.f32 %v3509
      %v3702 = vcvt.s32.f32 %v3510
      %v3703 = vcvt.s32.f32 %v3511
      %v3704 = vcvt.s32.f32 %v3512
      %v3705 = vcvt.s32.f32 %v3513
      %v3706 = vcvt.s32.f32 %v3514
      %v3707 = vcvt.s32.f32 %v3515
      %v3708 = vcvt.s32.f32 %v3516
      %v3709 = vcvt.s32.f32 %v3517
      %v3710 = vcvt.s32.f32 %v3518
      %v3711 = vcvt.s32.f32 %v3519
      %v3712 = vcvt.s32.f32 %v3520
      %v3713 = vcvt.s32.f32 %v3521
      %v3714 = vcvt.s32.f32 %v3522
      %v3715 = vcvt.s32.f32 %v3523
      %v3716 = vcvt.s32.f32 %v3524
      %v3717 = vcvt.s32.f32 %v3525
      %v3718 = vcvt.s32.f32 %v3526
      %v3719 = vcvt.s32.f32 %v3527
      %v3720 = vcvt.s32.f32 %v3528
      %v3721 = vcvt.s32.f32 %v3529
      %v3722 = vcvt.s32.f32 %v3530
      %v3723 = vcvt.s32.f32 %v3531
      %v3724 = vcvt.s32.f32 %v3532
      %v3725 = vcvt.s32.f32 %v3533
      %v3726 = vcvt.s32.f32 %v3534
      %v3727 = vcvt.s32.f32 %v3535
      %v3728 = vcvt.s32.f32 %v3536
      %v3729 = vcvt.s32.f32 %v3537
      %v3730 = vcvt.s32.f32 %v3538
      %v3731 = vcvt.s32.f32 %v3539
      %v3732 = vcvt.s32.f32 %v3540
      %v3733 = vcvt.s32.f32 %v3541
      %v3734 = vcvt.s32.f32 %v3542
      %v3735 = vpack.c.bf16 %v3547, %v3543
      %v3736 = vpack.c.bf16 %v3548, %v3544
      %v3737 = vpack.c.bf16 %v3549, %v3545
      %v3738 = vpack.c.bf16 %v3550, %v3546
      %v3739 = vpack.c.bf16 %v3555, %v3551
      %v3740 = vpack.c.bf16 %v3556, %v3552
      %v3741 = vpack.c.bf16 %v3557, %v3553
      %v3742 = vpack.c.bf16 %v3558, %v3554
      %v3743 = vpack.c.bf16 %v3563, %v3559
      %v3744 = vpack.c.bf16 %v3564, %v3560
      %v3745 = vpack.c.bf16 %v3565, %v3561
      %v3746 = vpack.c.bf16 %v3566, %v3562
      %v3747 = vpack.c.bf16 %v3571, %v3567
      %v3748 = vpack.c.bf16 %v3572, %v3568
      %v3749 = vpack.c.bf16 %v3573, %v3569
      %v3750 = vpack.c.bf16 %v3574, %v3570
      %v3751 = vpack.c.bf16 %v3579, %v3575
      %v3752 = vpack.c.bf16 %v3580, %v3576
      %v3753 = vpack.c.bf16 %v3581, %v3577
      %v3754 = vpack.c.bf16 %v3582, %v3578
      %v3755 = vpack.c.bf16 %v3587, %v3583
      %v3756 = vpack.c.bf16 %v3588, %v3584
      %v3757 = vpack.c.bf16 %v3589, %v3585
      %v3758 = vpack.c.bf16 %v3590, %v3586
      %v3759 = vpack.c.bf16 %v3595, %v3591
      %v3760 = vpack.c.bf16 %v3596, %v3592
      %v3761 = vpack.c.bf16 %v3597, %v3593
      %v3762 = vpack.c.bf16 %v3598, %v3594
      %v3763 = vpack.c.bf16 %v3603, %v3599
      %v3764 = vpack.c.bf16 %v3604, %v3600
      %v3765 = vpack.c.bf16 %v3605, %v3601
      %v3766 = vpack.c.bf16 %v3606, %v3602
      %v3767 = vpack.c.bf16 %v3611, %v3607
      %v3768 = vpack.c.bf16 %v3612, %v3608
      %v3769 = vpack.c.bf16 %v3613, %v3609
      %v3770 = vpack.c.bf16 %v3614, %v3610
      %v3771 = vpack.c.bf16 %v3619, %v3615
      %v3772 = vpack.c.bf16 %v3620, %v3616
      %v3773 = vpack.c.bf16 %v3621, %v3617
      %v3774 = vpack.c.bf16 %v3622, %v3618
      %v3775 = vpack.c.bf16 %v3627, %v3623
      %v3776 = vpack.c.bf16 %v3628, %v3624
      %v3777 = vpack.c.bf16 %v3629, %v3625
      %v3778 = vpack.c.bf16 %v3630, %v3626
      %v3779 = vpack.c.bf16 %v3635, %v3631
      %v3780 = vpack.c.bf16 %v3636, %v3632
      %v3781 = vpack.c.bf16 %v3637, %v3633
      %v3782 = vpack.c.bf16 %v3638, %v3634
      %v3783 = vpack.c.bf16 %v3643, %v3639
      %v3784 = vpack.c.bf16 %v3644, %v3640
      %v3785 = vpack.c.bf16 %v3645, %v3641
      %v3786 = vpack.c.bf16 %v3646, %v3642
      %v3787 = vpack.c.bf16 %v3651, %v3647
      %v3788 = vpack.c.bf16 %v3652, %v3648
      %v3789 = vpack.c.bf16 %v3653, %v3649
      %v3790 = vpack.c.bf16 %v3654, %v3650
      %v3791 = vpack.c.bf16 %v3659, %v3655
      %v3792 = vpack.c.bf16 %v3660, %v3656
      %v3793 = vpack.c.bf16 %v3661, %v3657
      %v3794 = vpack.c.bf16 %v3662, %v3658
      %v3795 = vpack.c.bf16 %v3667, %v3663
      %v3796 = vpack.c.bf16 %v3668, %v3664
      %v3797 = vpack.c.bf16 %v3669, %v3665
      %v3798 = vpack.c.bf16 %v3670, %v3666
      %v3799 = vpack.c.bf16 %v3675, %v3671
      %v3800 = vpack.c.bf16 %v3676, %v3672
      %v3801 = vpack.c.bf16 %v3677, %v3673
      %v3802 = vpack.c.bf16 %v3678, %v3674
      %v3803 = vpack.c.bf16 %v3683, %v3679
      %v3804 = vpack.c.bf16 %v3684, %v3680
      %v3805 = vpack.c.bf16 %v3685, %v3681
      %v3806 = vpack.c.bf16 %v3686, %v3682
      %v3807 = vpack.c.bf16 %v3691, %v3687
      %v3808 = vpack.c.bf16 %v3692, %v3688
      %v3809 = vpack.c.bf16 %v3693, %v3689
      %v3810 = vpack.c.bf16 %v3694, %v3690
      %v3811 = vpack.c.bf16 %v3699, %v3695
      %v3812 = vpack.c.bf16 %v3700, %v3696
      %v3813 = vpack.c.bf16 %v3701, %v3697
      %v3814 = vpack.c.bf16 %v3702, %v3698
      %v3815 = vpack.c.bf16 %v3707, %v3703
      %v3816 = vpack.c.bf16 %v3708, %v3704
      %v3817 = vpack.c.bf16 %v3709, %v3705
      %v3818 = vpack.c.bf16 %v3710, %v3706
      %v3819 = vpack.c.bf16 %v3715, %v3711
      %v3820 = vpack.c.bf16 %v3716, %v3712
      %v3821 = vpack.c.bf16 %v3717, %v3713
      %v3822 = vpack.c.bf16 %v3718, %v3714
      %v3823 = vpack.c.bf16 %v3723, %v3719
      %v3824 = vpack.c.bf16 %v3724, %v3720
      %v3825 = vpack.c.bf16 %v3725, %v3721
      %v3826 = vpack.c.bf16 %v3726, %v3722
      %v3827 = vpack.c.bf16 %v3731, %v3727
      %v3828 = vpack.c.bf16 %v3732, %v3728
      %v3829 = vpack.c.bf16 %v3733, %v3729
      %v3830 = vpack.c.bf16 %v3734, %v3730
      %v3831 = vld [vmem:[#allocation2] sm:$0xff]
      %v3832 = vld [vmem:[#allocation2 + $0x8] sm:$0xff]
      %v3833 = vld [vmem:[#allocation2 + $0x10] sm:$0xff]
      %v3834 = vld [vmem:[#allocation2 + $0x18] sm:$0xff]
      %v3835 = vld [vmem:[#allocation2 + $0x20] sm:$0xff]
      %v3836 = vld [vmem:[#allocation2 + $0x28] sm:$0xff]
      %v3837 = vld [vmem:[#allocation2 + $0x30] sm:$0xff]
      %v3838 = vld [vmem:[#allocation2 + $0x38] sm:$0xff]
      %v3839 = vld [vmem:[#allocation2 + $0x40] sm:$0xff]
      %v3840 = vld [vmem:[#allocation2 + $0x48] sm:$0xff]
      %v3841 = vld [vmem:[#allocation2 + $0x50] sm:$0xff]
      %v3842 = vld [vmem:[#allocation2 + $0x58] sm:$0xff]
      %v3843 = vld [vmem:[#allocation2 + $0x60] sm:$0xff]
      %v3844 = vld [vmem:[#allocation2 + $0x68] sm:$0xff]
      %v3845 = vld [vmem:[#allocation2 + $0x70] sm:$0xff]
      %v3846 = vld [vmem:[#allocation2 + $0x78] sm:$0xff]
      %v3847 = vld [vmem:[#allocation2 + $0x80] sm:$0xff]
      %v3848 = vld [vmem:[#allocation2 + $0x88] sm:$0xff]
      %v3849 = vld [vmem:[#allocation2 + $0x90] sm:$0xff]
      %v3850 = vld [vmem:[#allocation2 + $0x98] sm:$0xff]
      %v3851 = vld [vmem:[#allocation2 + $0xa0] sm:$0xff]
      %v3852 = vld [vmem:[#allocation2 + $0xa8] sm:$0xff]
      %v3853 = vld [vmem:[#allocation2 + $0xb0] sm:$0xff]
      %v3854 = vld [vmem:[#allocation2 + $0xb8] sm:$0xff]
      %v3855 = vld [vmem:[#allocation2 + $0xc0] sm:$0xff]
      %v3856 = vld [vmem:[#allocation2 + $0xc8] sm:$0xff]
      %v3857 = vld [vmem:[#allocation2 + $0xd0] sm:$0xff]
      %v3858 = vld [vmem:[#allocation2 + $0xd8] sm:$0xff]
      %v3859 = vld [vmem:[#allocation2 + $0xe0] sm:$0xff]
      %v3860 = vld [vmem:[#allocation2 + $0xe8] sm:$0xff]
      %v3861 = vld [vmem:[#allocation2 + $0xf0] sm:$0xff]
      %v3862 = vld [vmem:[#allocation2 + $0xf8] sm:$0xff]
      %v3863 = vld [vmem:[#allocation2 + $0x100] sm:$0xff]
      %v3864 = vld [vmem:[#allocation2 + $0x108] sm:$0xff]
      %v3865 = vld [vmem:[#allocation2 + $0x110] sm:$0xff]
      %v3866 = vld [vmem:[#allocation2 + $0x118] sm:$0xff]
      %v3867 = vld [vmem:[#allocation2 + $0x120] sm:$0xff]
      %v3868 = vld [vmem:[#allocation2 + $0x128] sm:$0xff]
      %v3869 = vld [vmem:[#allocation2 + $0x130] sm:$0xff]
      %v3870 = vld [vmem:[#allocation2 + $0x138] sm:$0xff]
      %v3871 = vld [vmem:[#allocation2 + $0x140] sm:$0xff]
      %v3872 = vld [vmem:[#allocation2 + $0x148] sm:$0xff]
      %v3873 = vld [vmem:[#allocation2 + $0x150] sm:$0xff]
      %v3874 = vld [vmem:[#allocation2 + $0x158] sm:$0xff]
      %v3875 = vld [vmem:[#allocation2 + $0x160] sm:$0xff]
      %v3876 = vld [vmem:[#allocation2 + $0x168] sm:$0xff]
      %v3877 = vld [vmem:[#allocation2 + $0x170] sm:$0xff]
      %v3878 = vld [vmem:[#allocation2 + $0x178] sm:$0xff]
      %3879 = vmatprep.subr.bf16.mxu0 0
      %3880 = vmatpush1.bf16.msra.mxu0 %v2918
      %3881 = vmatprep.subr.bf16.mxu0 0
      %3882 = vmatpush1.bf16.msra.mxu0 %v2919
      %3883 = vmatprep.subr.bf16.mxu0 0
      %3884 = vmatpush1.bf16.msra.mxu0 %v2920
      %3885 = vmatprep.subr.bf16.mxu0 0
      %3886 = vmatpush1.bf16.msra.mxu0 %v2921
      %3887 = vmatprep.subr.bf16.mxu0 0
      %3888 = vmatpush1.bf16.msra.mxu0 %v2922
      %3889 = vmatprep.subr.bf16.mxu0 0
      %3890 = vmatpush1.bf16.msra.mxu0 %v2923
      %3891 = vmatprep.subr.bf16.mxu0 0
      %3892 = vmatpush1.bf16.msra.mxu0 %v2924
      %3893 = vmatprep.subr.bf16.mxu0 0
      %3894 = vmatpush1.bf16.msra.mxu0 %v2925
      %3895 = vmatprep.subr.bf16.mxu0 0
      %3896 = vmatpush1.bf16.msra.mxu0 %v2926
      %3897 = vmatprep.subr.bf16.mxu0 0
      %3898 = vmatpush1.bf16.msra.mxu0 %v2927
      %3899 = vmatprep.subr.bf16.mxu0 0
      %3900 = vmatpush1.bf16.msra.mxu0 %v2928
      %3901 = vmatprep.subr.bf16.mxu0 0
      %3902 = vmatpush1.bf16.msra.mxu0 %v2929
      %3903 = vmatprep.subr.bf16.mxu0 0
      %3904 = vmatpush1.bf16.msra.mxu0 %v2930
      %3905 = vmatprep.subr.bf16.mxu0 0
      %3906 = vmatpush1.bf16.msra.mxu0 %v2931
      %3907 = vmatprep.subr.bf16.mxu0 0
      %3908 = vmatpush1.bf16.msra.mxu0 %v2932
      %3909 = vmatprep.subr.bf16.mxu0 0
      %3910 = vmatpush1.bf16.msra.mxu0 %v2933
      %3911 = vmatprep.mubr.bf16.mxu0 %v3736
      %3912 = vmatmul.mubr.bf16.gmra.mrb[0].mxu0 %v3735
      %v3913 = vpop.f32.mrb[0].mxu0
      %v3914 = vadd.f32 0.0, %v3913
      %v3915 = vpop.f32.mrb[0].mxu0
      %v3916 = vpop.f32.mrb[0].mxu0
      %v3917 = vadd.f32 0.0, %v3916
      %v3918 = vpop.f32.mrb[0].mxu0
      %3919 = vmatprep.mubr.bf16.mxu0 %v3740
      %3920 = vmatmul.mubr.bf16.gmra.mrb[0].mxu0 %v3739
      %v3921 = vpop.f32.mrb[0].mxu0
      %v3922 = vadd.f32 0.0, %v3921
      %v3923 = vpop.f32.mrb[0].mxu0
      %v3924 = vpop.f32.mrb[0].mxu0
      %v3925 = vadd.f32 0.0, %v3924
      %v3926 = vpop.f32.mrb[0].mxu0
      %3927 = vmatprep.mubr.bf16.mxu0 %v3744
      %3928 = vmatmul.mubr.bf16.gmra.mrb[0].mxu0 %v3743
      %v3929 = vpop.f32.mrb[0].mxu0
      %v3930 = vadd.f32 0.0, %v3929
      %v3931 = vpop.f32.mrb[0].mxu0
      %v3932 = vpop.f32.mrb[0].mxu0
      %v3933 = vadd.f32 0.0, %v3932
      %v3934 = vpop.f32.mrb[0].mxu0
      %3935 = vmatprep.mubr.bf16.mxu0 %v3748
      %3936 = vmatmul.mubr.bf16.gmra.mrb[0].mxu0 %v3747
      %v3937 = vpop.f32.mrb[0].mxu0
      %v3938 = vadd.f32 0.0, %v3937
      %v3939 = vpop.f32.mrb[0].mxu0
      %v3940 = vpop.f32.mrb[0].mxu0
      %v3941 = vadd.f32 0.0, %v3940
      %v3942 = vpop.f32.mrb[0].mxu0
      %3943 = vmatprep.mubr.bf16.mxu0 %v3752
      %3944 = vmatmul.mubr.bf16.gmra.mrb[0].mxu0 %v3751
      %v3945 = vpop.f32.mrb[0].mxu0
      %v3946 = vadd.f32 0.0, %v3945
      %v3947 = vpop.f32.mrb[0].mxu0
      %v3948 = vpop.f32.mrb[0].mxu0
      %v3949 = vadd.f32 0.0, %v3948
      %v3950 = vpop.f32.mrb[0].mxu0
      %3951 = vmatprep.mubr.bf16.mxu0 %v3756
      %3952 = vmatmul.mubr.bf16.gmra.mrb[0].mxu0 %v3755
      %v3953 = vpop.f32.mrb[0].mxu0
      %v3954 = vadd.f32 0.0, %v3953
      %v3955 = vpop.f32.mrb[0].mxu0
      %v3956 = vpop.f32.mrb[0].mxu0
      %v3957 = vadd.f32 0.0, %v3956
      %v3958 = vpop.f32.mrb[0].mxu0
      %3959 = vmatprep.mubr.bf16.mxu0 %v3760
      %3960 = vmatmul.mubr.bf16.gmra.mrb[0].mxu0 %v3759
      %v3961 = vpop.f32.mrb[0].mxu0
      %v3962 = vadd.f32 0.0, %v3961
      %v3963 = vpop.f32.mrb[0].mxu0
      %v3964 = vpop.f32.mrb[0].mxu0
      %v3965 = vadd.f32 0.0, %v3964
      %v3966 = vpop.f32.mrb[0].mxu0
      %3967 = vmatprep.mubr.bf16.mxu0 %v3764
      %3968 = vmatmul.mubr.bf16.gmra.mrb[0].mxu0 %v3763
      %v3969 = vpop.f32.mrb[0].mxu0
      %v3970 = vadd.f32 0.0, %v3969
      %v3971 = vpop.f32.mrb[0].mxu0
      %v3972 = vpop.f32.mrb[0].mxu0
      %v3973 = vadd.f32 0.0, %v3972
      %v3974 = vpop.f32.mrb[0].mxu0
      %3975 = vmatprep.mubr.bf16.mxu0 %v3768
      %3976 = vmatmul.mubr.bf16.gmra.mrb[0].mxu0 %v3767
      %v3977 = vpop.f32.mrb[0].mxu0
      %v3978 = vadd.f32 0.0, %v3977
      %v3979 = vpop.f32.mrb[0].mxu0
      %v3980 = vpop.f32.mrb[0].mxu0
      %v3981 = vadd.f32 0.0, %v3980
      %v3982 = vpop.f32.mrb[0].mxu0
      %3983 = vmatprep.mubr.bf16.mxu0 %v3772
      %3984 = vmatmul.mubr.bf16.gmra.mrb[0].mxu0 %v3771
      %v3985 = vpop.f32.mrb[0].mxu0
      %v3986 = vadd.f32 0.0, %v3985
      %v3987 = vpop.f32.mrb[0].mxu0
      %v3988 = vpop.f32.mrb[0].mxu0
      %v3989 = vadd.f32 0.0, %v3988
      %v3990 = vpop.f32.mrb[0].mxu0
      %3991 = vmatprep.mubr.bf16.mxu0 %v3776
      %3992 = vmatmul.mubr.bf16.gmra.mrb[0].mxu0 %v3775
      %v3993 = vpop.f32.mrb[0].mxu0
      %v3994 = vadd.f32 0.0, %v3993
      %v3995 = vpop.f32.mrb[0].mxu0
      %v3996 = vpop.f32.mrb[0].mxu0
      %v3997 = vadd.f32 0.0, %v3996
      %v3998 = vpop.f32.mrb[0].mxu0
      %3999 = vmatprep.mubr.bf16.mxu0 %v3780
      %4000 = vmatmul.mubr.bf16.gmra.mrb[0].mxu0 %v3779
      %v4001 = vpop.f32.mrb[0].mxu0
      %v4002 = vadd.f32 0.0, %v4001
      %v4003 = vpop.f32.mrb[0].mxu0
      %v4004 = vpop.f32.mrb[0].mxu0
      %v4005 = vadd.f32 0.0, %v4004
      %v4006 = vpop.f32.mrb[0].mxu0
      %4007 = vmatprep.mubr.bf16.mxu0 %v3784
      %4008 = vmatmul.mubr.bf16.gmra.mrb[0].mxu0 %v3783
      %v4009 = vpop.f32.mrb[0].mxu0
      %v4010 = vadd.f32 0.0, %v4009
      %v4011 = vpop.f32.mrb[0].mxu0
      %v4012 = vpop.f32.mrb[0].mxu0
      %v4013 = vadd.f32 0.0, %v4012
      %v4014 = vpop.f32.mrb[0].mxu0
      %4015 = vmatprep.mubr.bf16.mxu0 %v3788
      %4016 = vmatmul.mubr.bf16.gmra.mrb[0].mxu0 %v3787
      %v4017 = vpop.f32.mrb[0].mxu0
      %v4018 = vadd.f32 0.0, %v4017
      %v4019 = vpop.f32.mrb[0].mxu0
      %v4020 = vpop.f32.mrb[0].mxu0
      %v4021 = vadd.f32 0.0, %v4020
      %v4022 = vpop.f32.mrb[0].mxu0
      %4023 = vmatprep.mubr.bf16.mxu0 %v3792
      %4024 = vmatmul.mubr.bf16.gmra.mrb[0].mxu0 %v3791
      %v4025 = vpop.f32.mrb[0].mxu0
      %v4026 = vadd.f32 0.0, %v4025
      %v4027 = vpop.f32.mrb[0].mxu0
      %v4028 = vpop.f32.mrb[0].mxu0
      %v4029 = vadd.f32 0.0, %v4028
      %v4030 = vpop.f32.mrb[0].mxu0
      %4031 = vmatprep.mubr.bf16.mxu0 %v3796
      %4032 = vmatmul.mubr.bf16.gmra.mrb[0].mxu0 %v3795
      %v4033 = vpop.f32.mrb[0].mxu0
      %v4034 = vadd.f32 0.0, %v4033
      %v4035 = vpop.f32.mrb[0].mxu0
      %v4036 = vpop.f32.mrb[0].mxu0
      %v4037 = vadd.f32 0.0, %v4036
      %v4038 = vpop.f32.mrb[0].mxu0
      %4039 = vmatprep.mubr.bf16.mxu0 %v3800
      %4040 = vmatmul.mubr.bf16.gmra.mrb[0].mxu0 %v3799
      %v4041 = vpop.f32.mrb[0].mxu0
      %v4042 = vadd.f32 0.0, %v4041
      %v4043 = vpop.f32.mrb[0].mxu0
      %v4044 = vpop.f32.mrb[0].mxu0
      %v4045 = vadd.f32 0.0, %v4044
      %v4046 = vpop.f32.mrb[0].mxu0
      %4047 = vmatprep.mubr.bf16.mxu0 %v3804
      %4048 = vmatmul.mubr.bf16.gmra.mrb[0].mxu0 %v3803
      %v4049 = vpop.f32.mrb[0].mxu0
      %v4050 = vadd.f32 0.0, %v4049
      %v4051 = vpop.f32.mrb[0].mxu0
      %v4052 = vpop.f32.mrb[0].mxu0
      %v4053 = vadd.f32 0.0, %v4052
      %v4054 = vpop.f32.mrb[0].mxu0
      %4055 = vmatprep.mubr.bf16.mxu0 %v3808
      %4056 = vmatmul.mubr.bf16.gmra.mrb[0].mxu0 %v3807
      %v4057 = vpop.f32.mrb[0].mxu0
      %v4058 = vadd.f32 0.0, %v4057
      %v4059 = vpop.f32.mrb[0].mxu0
      %v4060 = vpop.f32.mrb[0].mxu0
      %v4061 = vadd.f32 0.0, %v4060
      %v4062 = vpop.f32.mrb[0].mxu0
      %4063 = vmatprep.mubr.bf16.mxu0 %v3812
      %4064 = vmatmul.mubr.bf16.gmra.mrb[0].mxu0 %v3811
      %v4065 = vpop.f32.mrb[0].mxu0
      %v4066 = vadd.f32 0.0, %v4065
      %v4067 = vpop.f32.mrb[0].mxu0
      %v4068 = vpop.f32.mrb[0].mxu0
      %v4069 = vadd.f32 0.0, %v4068
      %v4070 = vpop.f32.mrb[0].mxu0
      %4071 = vmatprep.mubr.bf16.mxu0 %v3816
      %4072 = vmatmul.mubr.bf16.gmra.mrb[0].mxu0 %v3815
      %v4073 = vpop.f32.mrb[0].mxu0
      %v4074 = vadd.f32 0.0, %v4073
      %v4075 = vpop.f32.mrb[0].mxu0
      %v4076 = vpop.f32.mrb[0].mxu0
      %v4077 = vadd.f32 0.0, %v4076
      %v4078 = vpop.f32.mrb[0].mxu0
      %4079 = vmatprep.mubr.bf16.mxu0 %v3820
      %4080 = vmatmul.mubr.bf16.gmra.mrb[0].mxu0 %v3819
      %v4081 = vpop.f32.mrb[0].mxu0
      %v4082 = vadd.f32 0.0, %v4081
      %v4083 = vpop.f32.mrb[0].mxu0
      %v4084 = vpop.f32.mrb[0].mxu0
      %v4085 = vadd.f32 0.0, %v4084
      %v4086 = vpop.f32.mrb[0].mxu0
      %4087 = vmatprep.mubr.bf16.mxu0 %v3824
      %4088 = vmatmul.mubr.bf16.gmra.mrb[0].mxu0 %v3823
      %v4089 = vpop.f32.mrb[0].mxu0
      %v4090 = vadd.f32 0.0, %v4089
      %v4091 = vpop.f32.mrb[0].mxu0
      %v4092 = vpop.f32.mrb[0].mxu0
      %v4093 = vadd.f32 0.0, %v4092
      %v4094 = vpop.f32.mrb[0].mxu0
      %4095 = vmatprep.mubr.bf16.mxu0 %v3828
      %4096 = vmatmul.mubr.bf16.gmra.mrb[0].mxu0 %v3827
      %v4097 = vpop.f32.mrb[0].mxu0
      %v4098 = vadd.f32 0.0, %v4097
      %v4099 = vpop.f32.mrb[0].mxu0
      %v4100 = vpop.f32.mrb[0].mxu0
      %v4101 = vadd.f32 0.0, %v4100
      %v4102 = vpop.f32.mrb[0].mxu0
      %4103 = vdwg.mxu0
      %4104 = vmatprep.subr.bf16.mxu0 0
      %4105 = vmatpush1.bf16.msra.mxu0 %v2934
      %4106 = vmatprep.subr.bf16.mxu0 0
      %4107 = vmatpush1.bf16.msra.mxu0 %v2935
      %4108 = vmatprep.subr.bf16.mxu0 0
      %4109 = vmatpush1.bf16.msra.mxu0 %v2936
      %4110 = vmatprep.subr.bf16.mxu0 0
      %4111 = vmatpush1.bf16.msra.mxu0 %v2937
      %4112 = vmatprep.subr.bf16.mxu0 0
      %4113 = vmatpush1.bf16.msra.mxu0 %v2938
      %4114 = vmatprep.subr.bf16.mxu0 0
      %4115 = vmatpush1.bf16.msra.mxu0 %v2939
      %4116 = vmatprep.subr.bf16.mxu0 0
      %4117 = vmatpush1.bf16.msra.mxu0 %v2940
      %4118 = vmatprep.subr.bf16.mxu0 0
      %4119 = vmatpush1.bf16.msra.mxu0 %v2941
      %4120 = vmatprep.subr.bf16.mxu0 0
      %4121 = vmatpush1.bf16.msra.mxu0 %v2942
      %4122 = vmatprep.subr.bf16.mxu0 0
      %4123 = vmatpush1.bf16.msra.mxu0 %v2943
      %4124 = vmatprep.subr.bf16.mxu0 0
      %4125 = vmatpush1.bf16.msra.mxu0 %v2944
      %4126 = vmatprep.subr.bf16.mxu0 0
      %4127 = vmatpush1.bf16.msra.mxu0 %v2945
      %4128 = vmatprep.subr.bf16.mxu0 0
      %4129 = vmatpush1.bf16.msra.mxu0 %v2946
      %4130 = vmatprep.subr.bf16.mxu0 0
      %4131 = vmatpush1.bf16.msra.mxu0 %v2947
      %4132 = vmatprep.subr.bf16.mxu0 0
      %4133 = vmatpush1.bf16.msra.mxu0 %v2948
      %4134 = vmatprep.subr.bf16.mxu0 0
      %4135 = vmatpush1.bf16.msra.mxu0 %v2949
      %4136 = vmatprep.mubr.bf16.mxu0 %v3738
      %4137 = vmatmul.mubr.bf16.gmra.mrb[0].mxu0 %v3737
      %v4138 = vpop.f32.mrb[0].mxu0
      %v4139 = vadd.f32 %v3914, %v4138
      %v4140 = vpop.f32.mrb[0].mxu0
      %v4141 = vpop.f32.mrb[0].mxu0
      %v4142 = vadd.f32 %v3917, %v4141
      %v4143 = vpop.f32.mrb[0].mxu0
      %4144 = vmatprep.mubr.bf16.mxu0 %v3742
      %4145 = vmatmul.mubr.bf16.gmra.mrb[0].mxu0 %v3741
      %v4146 = vpop.f32.mrb[0].mxu0
      %v4147 = vadd.f32 %v3922, %v4146
      %v4148 = vpop.f32.mrb[0].mxu0
      %v4149 = vpop.f32.mrb[0].mxu0
      %v4150 = vadd.f32 %v3925, %v4149
      %v4151 = vpop.f32.mrb[0].mxu0
      %4152 = vmatprep.mubr.bf16.mxu0 %v3746
      %4153 = vmatmul.mubr.bf16.gmra.mrb[0].mxu0 %v3745
      %v4154 = vpop.f32.mrb[0].mxu0
      %v4155 = vadd.f32 %v3930, %v4154
      %v4156 = vpop.f32.mrb[0].mxu0
      %v4157 = vpop.f32.mrb[0].mxu0
      %v4158 = vadd.f32 %v3933, %v4157
      %v4159 = vpop.f32.mrb[0].mxu0
      %4160 = vmatprep.mubr.bf16.mxu0 %v3750
      %4161 = vmatmul.mubr.bf16.gmra.mrb[0].mxu0 %v3749
      %v4162 = vpop.f32.mrb[0].mxu0
      %v4163 = vadd.f32 %v3938, %v4162
      %v4164 = vpop.f32.mrb[0].mxu0
      %v4165 = vpop.f32.mrb[0].mxu0
      %v4166 = vadd.f32 %v3941, %v4165
      %v4167 = vpop.f32.mrb[0].mxu0
      %4168 = vmatprep.mubr.bf16.mxu0 %v3754
      %4169 = vmatmul.mubr.bf16.gmra.mrb[0].mxu0 %v3753
      %v4170 = vpop.f32.mrb[0].mxu0
      %v4171 = vadd.f32 %v3946, %v4170
      %v4172 = vpop.f32.mrb[0].mxu0
      %v4173 = vpop.f32.mrb[0].mxu0
      %v4174 = vadd.f32 %v3949, %v4173
      %v4175 = vpop.f32.mrb[0].mxu0
      %4176 = vmatprep.mubr.bf16.mxu0 %v3758
      %4177 = vmatmul.mubr.bf16.gmra.mrb[0].mxu0 %v3757
      %v4178 = vpop.f32.mrb[0].mxu0
      %v4179 = vadd.f32 %v3954, %v4178
      %v4180 = vpop.f32.mrb[0].mxu0
      %v4181 = vpop.f32.mrb[0].mxu0
      %v4182 = vadd.f32 %v3957, %v4181
      %v4183 = vpop.f32.mrb[0].mxu0
      %4184 = vmatprep.mubr.bf16.mxu0 %v3762
      %4185 = vmatmul.mubr.bf16.gmra.mrb[0].mxu0 %v3761
      %v4186 = vpop.f32.mrb[0].mxu0
      %v4187 = vadd.f32 %v3962, %v4186
      %v4188 = vpop.f32.mrb[0].mxu0
      %v4189 = vpop.f32.mrb[0].mxu0
      %v4190 = vadd.f32 %v3965, %v4189
      %v4191 = vpop.f32.mrb[0].mxu0
      %4192 = vmatprep.mubr.bf16.mxu0 %v3766
      %4193 = vmatmul.mubr.bf16.gmra.mrb[0].mxu0 %v3765
      %v4194 = vpop.f32.mrb[0].mxu0
      %v4195 = vadd.f32 %v3970, %v4194
      %v4196 = vpop.f32.mrb[0].mxu0
      %v4197 = vpop.f32.mrb[0].mxu0
      %v4198 = vadd.f32 %v3973, %v4197
      %v4199 = vpop.f32.mrb[0].mxu0
      %4200 = vmatprep.mubr.bf16.mxu0 %v3770
      %4201 = vmatmul.mubr.bf16.gmra.mrb[0].mxu0 %v3769
      %v4202 = vpop.f32.mrb[0].mxu0
      %v4203 = vadd.f32 %v3978, %v4202
      %v4204 = vpop.f32.mrb[0].mxu0
      %v4205 = vpop.f32.mrb[0].mxu0
      %v4206 = vadd.f32 %v3981, %v4205
      %v4207 = vpop.f32.mrb[0].mxu0
      %4208 = vmatprep.mubr.bf16.mxu0 %v3774
      %4209 = vmatmul.mubr.bf16.gmra.mrb[0].mxu0 %v3773
      %v4210 = vpop.f32.mrb[0].mxu0
      %v4211 = vadd.f32 %v3986, %v4210
      %v4212 = vpop.f32.mrb[0].mxu0
      %v4213 = vpop.f32.mrb[0].mxu0
      %v4214 = vadd.f32 %v3989, %v4213
      %v4215 = vpop.f32.mrb[0].mxu0
      %4216 = vmatprep.mubr.bf16.mxu0 %v3778
      %4217 = vmatmul.mubr.bf16.gmra.mrb[0].mxu0 %v3777
      %v4218 = vpop.f32.mrb[0].mxu0
      %v4219 = vadd.f32 %v3994, %v4218
      %v4220 = vpop.f32.mrb[0].mxu0
      %v4221 = vpop.f32.mrb[0].mxu0
      %v4222 = vadd.f32 %v3997, %v4221
      %v4223 = vpop.f32.mrb[0].mxu0
      %4224 = vmatprep.mubr.bf16.mxu0 %v3782
      %4225 = vmatmul.mubr.bf16.gmra.mrb[0].mxu0 %v3781
      %v4226 = vpop.f32.mrb[0].mxu0
      %v4227 = vadd.f32 %v4002, %v4226
      %v4228 = vpop.f32.mrb[0].mxu0
      %v4229 = vpop.f32.mrb[0].mxu0
      %v4230 = vadd.f32 %v4005, %v4229
      %v4231 = vpop.f32.mrb[0].mxu0
      %4232 = vmatprep.mubr.bf16.mxu0 %v3786
      %4233 = vmatmul.mubr.bf16.gmra.mrb[0].mxu0 %v3785
      %v4234 = vpop.f32.mrb[0].mxu0
      %v4235 = vadd.f32 %v4010, %v4234
      %v4236 = vpop.f32.mrb[0].mxu0
      %v4237 = vpop.f32.mrb[0].mxu0
      %v4238 = vadd.f32 %v4013, %v4237
      %v4239 = vpop.f32.mrb[0].mxu0
      %4240 = vmatprep.mubr.bf16.mxu0 %v3790
      %4241 = vmatmul.mubr.bf16.gmra.mrb[0].mxu0 %v3789
      %v4242 = vpop.f32.mrb[0].mxu0
      %v4243 = vadd.f32 %v4018, %v4242
      %v4244 = vpop.f32.mrb[0].mxu0
      %v4245 = vpop.f32.mrb[0].mxu0
      %v4246 = vadd.f32 %v4021, %v4245
      %v4247 = vpop.f32.mrb[0].mxu0
      %4248 = vmatprep.mubr.bf16.mxu0 %v3794
      %4249 = vmatmul.mubr.bf16.gmra.mrb[0].mxu0 %v3793
      %v4250 = vpop.f32.mrb[0].mxu0
      %v4251 = vadd.f32 %v4026, %v4250
      %v4252 = vpop.f32.mrb[0].mxu0
      %v4253 = vpop.f32.mrb[0].mxu0
      %v4254 = vadd.f32 %v4029, %v4253
      %v4255 = vpop.f32.mrb[0].mxu0
      %4256 = vmatprep.mubr.bf16.mxu0 %v3798
      %4257 = vmatmul.mubr.bf16.gmra.mrb[0].mxu0 %v3797
      %v4258 = vpop.f32.mrb[0].mxu0
      %v4259 = vadd.f32 %v4034, %v4258
      %v4260 = vpop.f32.mrb[0].mxu0
      %v4261 = vpop.f32.mrb[0].mxu0
      %v4262 = vadd.f32 %v4037, %v4261
      %v4263 = vpop.f32.mrb[0].mxu0
      %4264 = vmatprep.mubr.bf16.mxu0 %v3802
      %4265 = vmatmul.mubr.bf16.gmra.mrb[0].mxu0 %v3801
      %v4266 = vpop.f32.mrb[0].mxu0
      %v4267 = vadd.f32 %v4042, %v4266
      %v4268 = vpop.f32.mrb[0].mxu0
      %v4269 = vpop.f32.mrb[0].mxu0
      %v4270 = vadd.f32 %v4045, %v4269
      %v4271 = vpop.f32.mrb[0].mxu0
      %4272 = vmatprep.mubr.bf16.mxu0 %v3806
      %4273 = vmatmul.mubr.bf16.gmra.mrb[0].mxu0 %v3805
      %v4274 = vpop.f32.mrb[0].mxu0
      %v4275 = vadd.f32 %v4050, %v4274
      %v4276 = vpop.f32.mrb[0].mxu0
      %v4277 = vpop.f32.mrb[0].mxu0
      %v4278 = vadd.f32 %v4053, %v4277
      %v4279 = vpop.f32.mrb[0].mxu0
      %4280 = vmatprep.mubr.bf16.mxu0 %v3810
      %4281 = vmatmul.mubr.bf16.gmra.mrb[0].mxu0 %v3809
      %v4282 = vpop.f32.mrb[0].mxu0
      %v4283 = vadd.f32 %v4058, %v4282
      %v4284 = vpop.f32.mrb[0].mxu0
      %v4285 = vpop.f32.mrb[0].mxu0
      %v4286 = vadd.f32 %v4061, %v4285
      %v4287 = vpop.f32.mrb[0].mxu0
      %4288 = vmatprep.mubr.bf16.mxu0 %v3814
      %4289 = vmatmul.mubr.bf16.gmra.mrb[0].mxu0 %v3813
      %v4290 = vpop.f32.mrb[0].mxu0
      %v4291 = vadd.f32 %v4066, %v4290
      %v4292 = vpop.f32.mrb[0].mxu0
      %v4293 = vpop.f32.mrb[0].mxu0
      %v4294 = vadd.f32 %v4069, %v4293
      %v4295 = vpop.f32.mrb[0].mxu0
      %4296 = vmatprep.mubr.bf16.mxu0 %v3818
      %4297 = vmatmul.mubr.bf16.gmra.mrb[0].mxu0 %v3817
      %v4298 = vpop.f32.mrb[0].mxu0
      %v4299 = vadd.f32 %v4074, %v4298
      %v4300 = vpop.f32.mrb[0].mxu0
      %v4301 = vpop.f32.mrb[0].mxu0
      %v4302 = vadd.f32 %v4077, %v4301
      %v4303 = vpop.f32.mrb[0].mxu0
      %4304 = vmatprep.mubr.bf16.mxu0 %v3822
      %4305 = vmatmul.mubr.bf16.gmra.mrb[0].mxu0 %v3821
      %v4306 = vpop.f32.mrb[0].mxu0
      %v4307 = vadd.f32 %v4082, %v4306
      %v4308 = vpop.f32.mrb[0].mxu0
      %v4309 = vpop.f32.mrb[0].mxu0
      %v4310 = vadd.f32 %v4085, %v4309
      %v4311 = vpop.f32.mrb[0].mxu0
      %4312 = vmatprep.mubr.bf16.mxu0 %v3826
      %4313 = vmatmul.mubr.bf16.gmra.mrb[0].mxu0 %v3825
      %v4314 = vpop.f32.mrb[0].mxu0
      %v4315 = vadd.f32 %v4090, %v4314
      %v4316 = vpop.f32.mrb[0].mxu0
      %v4317 = vpop.f32.mrb[0].mxu0
      %v4318 = vadd.f32 %v4093, %v4317
      %v4319 = vpop.f32.mrb[0].mxu0
      %4320 = vmatprep.mubr.bf16.mxu0 %v3830
      %4321 = vmatmul.mubr.bf16.gmra.mrb[0].mxu0 %v3829
      %v4322 = vpop.f32.mrb[0].mxu0
      %v4323 = vadd.f32 %v4098, %v4322
      %v4324 = vpop.f32.mrb[0].mxu0
      %v4325 = vpop.f32.mrb[0].mxu0
      %v4326 = vadd.f32 %v4101, %v4325
      %v4327 = vpop.f32.mrb[0].mxu0
      %4328 = vdwg.mxu0
      %v4329 = vadd.f32 %v3831, %v4139
      %v4330 = vadd.f32 %v3832, %v4142
      %v4331 = vadd.f32 %v3833, %v4147
      %v4332 = vadd.f32 %v3834, %v4150
      %v4333 = vadd.f32 %v3835, %v4155
      %v4334 = vadd.f32 %v3836, %v4158
      %v4335 = vadd.f32 %v3837, %v4163
      %v4336 = vadd.f32 %v3838, %v4166
      %v4337 = vadd.f32 %v3839, %v4171
      %v4338 = vadd.f32 %v3840, %v4174
      %v4339 = vadd.f32 %v3841, %v4179
      %v4340 = vadd.f32 %v3842, %v4182
      %v4341 = vadd.f32 %v3843, %v4187
      %v4342 = vadd.f32 %v3844, %v4190
      %v4343 = vadd.f32 %v3845, %v4195
      %v4344 = vadd.f32 %v3846, %v4198
      %v4345 = vadd.f32 %v3847, %v4203
      %v4346 = vadd.f32 %v3848, %v4206
      %v4347 = vadd.f32 %v3849, %v4211
      %v4348 = vadd.f32 %v3850, %v4214
      %v4349 = vadd.f32 %v3851, %v4219
      %v4350 = vadd.f32 %v3852, %v4222
      %v4351 = vadd.f32 %v3853, %v4227
      %v4352 = vadd.f32 %v3854, %v4230
      %v4353 = vadd.f32 %v3855, %v4235
      %v4354 = vadd.f32 %v3856, %v4238
      %v4355 = vadd.f32 %v3857, %v4243
      %v4356 = vadd.f32 %v3858, %v4246
      %v4357 = vadd.f32 %v3859, %v4251
      %v4358 = vadd.f32 %v3860, %v4254
      %v4359 = vadd.f32 %v3861, %v4259
      %v4360 = vadd.f32 %v3862, %v4262
      %v4361 = vadd.f32 %v3863, %v4267
      %v4362 = vadd.f32 %v3864, %v4270
      %v4363 = vadd.f32 %v3865, %v4275
      %v4364 = vadd.f32 %v3866, %v4278
      %v4365 = vadd.f32 %v3867, %v4283
      %v4366 = vadd.f32 %v3868, %v4286
      %v4367 = vadd.f32 %v3869, %v4291
      %v4368 = vadd.f32 %v3870, %v4294
      %v4369 = vadd.f32 %v3871, %v4299
      %v4370 = vadd.f32 %v3872, %v4302
      %v4371 = vadd.f32 %v3873, %v4307
      %v4372 = vadd.f32 %v3874, %v4310
      %v4373 = vadd.f32 %v3875, %v4315
      %v4374 = vadd.f32 %v3876, %v4318
      %v4375 = vadd.f32 %v3877, %v4323
      %v4376 = vadd.f32 %v3878, %v4326
      %vm4377 = vcmask 261120
      %4378 = vst.msk [vmem:[#allocation2] sm:$0xff] %vm4377, %v4329
      %4379 = vst.msk [vmem:[#allocation2 + $0x8] sm:$0xff] %vm4377, %v4330
      %4380 = vst.msk [vmem:[#allocation2 + $0x10] sm:$0xff] %vm4377, %v4331
      %4381 = vst.msk [vmem:[#allocation2 + $0x18] sm:$0xff] %vm4377, %v4332
      %4382 = vst.msk [vmem:[#allocation2 + $0x20] sm:$0xff] %vm4377, %v4333
      %4383 = vst.msk [vmem:[#allocation2 + $0x28] sm:$0xff] %vm4377, %v4334
      %4384 = vst.msk [vmem:[#allocation2 + $0x30] sm:$0xff] %vm4377, %v4335
      %4385 = vst.msk [vmem:[#allocation2 + $0x38] sm:$0xff] %vm4377, %v4336
      %4386 = vst.msk [vmem:[#allocation2 + $0x40] sm:$0xff] %vm4377, %v4337
      %4387 = vst.msk [vmem:[#allocation2 + $0x48] sm:$0xff] %vm4377, %v4338
      %4388 = vst.msk [vmem:[#allocation2 + $0x50] sm:$0xff] %vm4377, %v4339
      %4389 = vst.msk [vmem:[#allocation2 + $0x58] sm:$0xff] %vm4377, %v4340
      %4390 = vst.msk [vmem:[#allocation2 + $0x60] sm:$0xff] %vm4377, %v4341
      %4391 = vst.msk [vmem:[#allocation2 + $0x68] sm:$0xff] %vm4377, %v4342
      %4392 = vst.msk [vmem:[#allocation2 + $0x70] sm:$0xff] %vm4377, %v4343
      %4393 = vst.msk [vmem:[#allocation2 + $0x78] sm:$0xff] %vm4377, %v4344
      %4394 = vst.msk [vmem:[#allocation2 + $0x80] sm:$0xff] %vm4377, %v4345
      %4395 = vst.msk [vmem:[#allocation2 + $0x88] sm:$0xff] %vm4377, %v4346
      %4396 = vst.msk [vmem:[#allocation2 + $0x90] sm:$0xff] %vm4377, %v4347
      %4397 = vst.msk [vmem:[#allocation2 + $0x98] sm:$0xff] %vm4377, %v4348
      %4398 = vst.msk [vmem:[#allocation2 + $0xa0] sm:$0xff] %vm4377, %v4349
      %4399 = vst.msk [vmem:[#allocation2 + $0xa8] sm:$0xff] %vm4377, %v4350
      %4400 = vst.msk [vmem:[#allocation2 + $0xb0] sm:$0xff] %vm4377, %v4351
      %4401 = vst.msk [vmem:[#allocation2 + $0xb8] sm:$0xff] %vm4377, %v4352
      %4402 = vst.msk [vmem:[#allocation2 + $0xc0] sm:$0xff] %vm4377, %v4353
      %4403 = vst.msk [vmem:[#allocation2 + $0xc8] sm:$0xff] %vm4377, %v4354
      %4404 = vst.msk [vmem:[#allocation2 + $0xd0] sm:$0xff] %vm4377, %v4355
      %4405 = vst.msk [vmem:[#allocation2 + $0xd8] sm:$0xff] %vm4377, %v4356
      %4406 = vst.msk [vmem:[#allocation2 + $0xe0] sm:$0xff] %vm4377, %v4357
      %4407 = vst.msk [vmem:[#allocation2 + $0xe8] sm:$0xff] %vm4377, %v4358
      %4408 = vst.msk [vmem:[#allocation2 + $0xf0] sm:$0xff] %vm4377, %v4359
      %4409 = vst.msk [vmem:[#allocation2 + $0xf8] sm:$0xff] %vm4377, %v4360
      %4410 = vst.msk [vmem:[#allocation2 + $0x100] sm:$0xff] %vm4377, %v4361
      %4411 = vst.msk [vmem:[#allocation2 + $0x108] sm:$0xff] %vm4377, %v4362
      %4412 = vst.msk [vmem:[#allocation2 + $0x110] sm:$0xff] %vm4377, %v4363
      %4413 = vst.msk [vmem:[#allocation2 + $0x118] sm:$0xff] %vm4377, %v4364
      %4414 = vst.msk [vmem:[#allocation2 + $0x120] sm:$0xff] %vm4377, %v4365
      %4415 = vst.msk [vmem:[#allocation2 + $0x128] sm:$0xff] %vm4377, %v4366
      %4416 = vst.msk [vmem:[#allocation2 + $0x130] sm:$0xff] %vm4377, %v4367
      %4417 = vst.msk [vmem:[#allocation2 + $0x138] sm:$0xff] %vm4377, %v4368
      %4418 = vst.msk [vmem:[#allocation2 + $0x140] sm:$0xff] %vm4377, %v4369
      %4419 = vst.msk [vmem:[#allocation2 + $0x148] sm:$0xff] %vm4377, %v4370
      %4420 = vst.msk [vmem:[#allocation2 + $0x150] sm:$0xff] %vm4377, %v4371
      %4421 = vst.msk [vmem:[#allocation2 + $0x158] sm:$0xff] %vm4377, %v4372
      %4422 = vst.msk [vmem:[#allocation2 + $0x160] sm:$0xff] %vm4377, %v4373
      %4423 = vst.msk [vmem:[#allocation2 + $0x168] sm:$0xff] %vm4377, %v4374
      %4424 = vst.msk [vmem:[#allocation2 + $0x170] sm:$0xff] %vm4377, %v4375
      %4425 = vst.msk [vmem:[#allocation2 + $0x178] sm:$0xff] %vm4377, %v4376
      %p4426 = scmp.eq.s32.totalorder %s20, 2
      // Predicated region
      $region61: #{gine_conv_forward.1} parent=55 // pred_check
        %p4427 = pneg %p4426
      $region62: #{gine_conv_forward.1} parent=55 // pred_check_branch
        %4429 = sbr.rel (%p4427) target = $region64
      $region63: #{gine_conv_forward.1} parent=55 // pred_region
        %v4430 = vld [vmem:[#allocation2] sm:$0xff]
        %v4431 = vld [vmem:[#allocation2 + $0x8] sm:$0xff]
        %v4432 = vld [vmem:[#allocation2 + $0x10] sm:$0xff]
        %v4433 = vld [vmem:[#allocation2 + $0x18] sm:$0xff]
        %v4434 = vld [vmem:[#allocation2 + $0x20] sm:$0xff]
        %v4435 = vld [vmem:[#allocation2 + $0x28] sm:$0xff]
        %v4436 = vld [vmem:[#allocation2 + $0x30] sm:$0xff]
        %v4437 = vld [vmem:[#allocation2 + $0x38] sm:$0xff]
        %v4438 = vld [vmem:[#allocation2 + $0x40] sm:$0xff]
        %v4439 = vld [vmem:[#allocation2 + $0x48] sm:$0xff]
        %v4440 = vld [vmem:[#allocation2 + $0x50] sm:$0xff]
        %v4441 = vld [vmem:[#allocation2 + $0x58] sm:$0xff]
        %v4442 = vld [vmem:[#allocation2 + $0x60] sm:$0xff]
        %v4443 = vld [vmem:[#allocation2 + $0x68] sm:$0xff]
        %v4444 = vld [vmem:[#allocation2 + $0x70] sm:$0xff]
        %v4445 = vld [vmem:[#allocation2 + $0x78] sm:$0xff]
        %v4446 = vld [vmem:[#allocation2 + $0x80] sm:$0xff]
        %v4447 = vld [vmem:[#allocation2 + $0x88] sm:$0xff]
        %v4448 = vld [vmem:[#allocation2 + $0x90] sm:$0xff]
        %v4449 = vld [vmem:[#allocation2 + $0x98] sm:$0xff]
        %v4450 = vld [vmem:[#allocation2 + $0xa0] sm:$0xff]
        %v4451 = vld [vmem:[#allocation2 + $0xa8] sm:$0xff]
        %v4452 = vld [vmem:[#allocation2 + $0xb0] sm:$0xff]
        %v4453 = vld [vmem:[#allocation2 + $0xb8] sm:$0xff]
        %v4454 = vld [vmem:[#allocation2 + $0xc0] sm:$0xff]
        %v4455 = vld [vmem:[#allocation2 + $0xc8] sm:$0xff]
        %v4456 = vld [vmem:[#allocation2 + $0xd0] sm:$0xff]
        %v4457 = vld [vmem:[#allocation2 + $0xd8] sm:$0xff]
        %v4458 = vld [vmem:[#allocation2 + $0xe0] sm:$0xff]
        %v4459 = vld [vmem:[#allocation2 + $0xe8] sm:$0xff]
        %v4460 = vld [vmem:[#allocation2 + $0xf0] sm:$0xff]
        %v4461 = vld [vmem:[#allocation2 + $0xf8] sm:$0xff]
        %v4462 = vld [vmem:[#allocation2 + $0x100] sm:$0xff]
        %v4463 = vld [vmem:[#allocation2 + $0x108] sm:$0xff]
        %v4464 = vld [vmem:[#allocation2 + $0x110] sm:$0xff]
        %v4465 = vld [vmem:[#allocation2 + $0x118] sm:$0xff]
        %v4466 = vld [vmem:[#allocation2 + $0x120] sm:$0xff]
        %v4467 = vld [vmem:[#allocation2 + $0x128] sm:$0xff]
        %v4468 = vld [vmem:[#allocation2 + $0x130] sm:$0xff]
        %v4469 = vld [vmem:[#allocation2 + $0x138] sm:$0xff]
        %v4470 = vld [vmem:[#allocation2 + $0x140] sm:$0xff]
        %v4471 = vld [vmem:[#allocation2 + $0x148] sm:$0xff]
        %v4472 = vld [vmem:[#allocation2 + $0x150] sm:$0xff]
        %v4473 = vld [vmem:[#allocation2 + $0x158] sm:$0xff]
        %v4474 = vld [vmem:[#allocation2 + $0x160] sm:$0xff]
        %v4475 = vld [vmem:[#allocation2 + $0x168] sm:$0xff]
        %v4476 = vld [vmem:[#allocation2 + $0x170] sm:$0xff]
        %v4477 = vld [vmem:[#allocation2 + $0x178] sm:$0xff]
        %v4478 = vpack.c.bf16 %v4431, %v4430
        %v4479 = vpack.c.bf16 %v4433, %v4432
        %v4480 = vpack.c.bf16 %v4435, %v4434
        %v4481 = vpack.c.bf16 %v4437, %v4436
        %v4482 = vpack.c.bf16 %v4439, %v4438
        %v4483 = vpack.c.bf16 %v4441, %v4440
        %v4484 = vpack.c.bf16 %v4443, %v4442
        %v4485 = vpack.c.bf16 %v4445, %v4444
        %v4486 = vpack.c.bf16 %v4447, %v4446
        %v4487 = vpack.c.bf16 %v4449, %v4448
        %v4488 = vpack.c.bf16 %v4451, %v4450
        %v4489 = vpack.c.bf16 %v4453, %v4452
        %v4490 = vpack.c.bf16 %v4455, %v4454
        %v4491 = vpack.c.bf16 %v4457, %v4456
        %v4492 = vpack.c.bf16 %v4459, %v4458
        %v4493 = vpack.c.bf16 %v4461, %v4460
        %v4494 = vpack.c.bf16 %v4463, %v4462
        %v4495 = vpack.c.bf16 %v4465, %v4464
        %v4496 = vpack.c.bf16 %v4467, %v4466
        %v4497 = vpack.c.bf16 %v4469, %v4468
        %v4498 = vpack.c.bf16 %v4471, %v4470
        %v4499 = vpack.c.bf16 %v4473, %v4472
        %v4500 = vpack.c.bf16 %v4475, %v4474
        %v4501 = vpack.c.bf16 %v4477, %v4476
        %v4502 = vld [vmem:[%s5] sm:$0xf]
        %v4503 = vld [vmem:[%s5 + $0x4] sm:$0xf]
        %v4504 = vld [vmem:[%s5 + $0x8] sm:$0xf]
        %v4505 = vld [vmem:[%s5 + $0xc] sm:$0xf]
        %v4506 = vld [vmem:[%s6] sm:$0x1]
        %v4508 = vlaneseq
        %v4509 = vshrl.u32 %v4508, 7
        %v4510 = vsub.s32 0, %v4509
        %v4511 = vrot.slane %v4506, %v4510
        %v4517 = vunpack.c.l.b16 %v4502
        %v4518 = vunpack.c.l.b16 %v4503
        %v4519 = vunpack.c.l.b16 %v4504
        %v4520 = vunpack.c.l.b16 %v4505
        %v4521 = vpack.c.b16 %v4518, %v4517
        %v4522 = vpack.c.b16 %v4520, %v4519
        %v4526 = vsel %vm4377, %v4478, 0
        %v4529 = vsel %vm4377, %v4479, 0
        %v4532 = vsel %vm4377, %v4480, 0
        %v4535 = vsel %vm4377, %v4481, 0
        %v4538 = vsel %vm4377, %v4482, 0
        %v4541 = vsel %vm4377, %v4483, 0
        %v4544 = vsel %vm4377, %v4484, 0
        %v4547 = vsel %vm4377, %v4485, 0
        %v4550 = vsel %vm4377, %v4486, 0
        %v4553 = vsel %vm4377, %v4487, 0
        %v4556 = vsel %vm4377, %v4488, 0
        %v4559 = vsel %vm4377, %v4489, 0
        %v4562 = vsel %vm4377, %v4490, 0
        %v4565 = vsel %vm4377, %v4491, 0
        %v4568 = vsel %vm4377, %v4492, 0
        %v4571 = vsel %vm4377, %v4493, 0
        %v4574 = vsel %vm4377, %v4494, 0
        %v4577 = vsel %vm4377, %v4495, 0
        %v4580 = vsel %vm4377, %v4496, 0
        %v4583 = vsel %vm4377, %v4497, 0
        %v4586 = vsel %vm4377, %v4498, 0
        %v4589 = vsel %vm4377, %v4499, 0
        %v4592 = vsel %vm4377, %v4500, 0
        %v4595 = vsel %vm4377, %v4501, 0
        %4597 = vmatprep.subr.bf16.mxu0 0
        %4598 = vmatpush1.bf16.msra.mxu0 %v4521
        %4599 = vmatprep.subr.bf16.mxu0 0
        %4600 = vmatpush1.bf16.msra.mxu0 %v4522
        %4601 = vmatprep.subr.bf16.mxu0 0
        %4602 = vmatpush1.bf16.msra.mxu0 0
        %4603 = vmatprep.subr.bf16.mxu0 0
        %4604 = vmatpush1.bf16.msra.mxu0 0
        %4605 = vmatprep.subr.bf16.mxu0 0
        %4606 = vmatpush1.bf16.msra.mxu0 0
        %4607 = vmatprep.subr.bf16.mxu0 0
        %4608 = vmatpush1.bf16.msra.mxu0 0
        %4609 = vmatprep.subr.bf16.mxu0 0
        %4610 = vmatpush1.bf16.msra.mxu0 0
        %4611 = vmatprep.subr.bf16.mxu0 0
        %4612 = vmatpush1.bf16.msra.mxu0 0
        %4613 = vmatprep.subr.bf16.mxu0 0
        %4614 = vmatpush1.bf16.msra.mxu0 0
        %4615 = vmatprep.subr.bf16.mxu0 0
        %4616 = vmatpush1.bf16.msra.mxu0 0
        %4617 = vmatprep.subr.bf16.mxu0 0
        %4618 = vmatpush1.bf16.msra.mxu0 0
        %4619 = vmatprep.subr.bf16.mxu0 0
        %4620 = vmatpush1.bf16.msra.mxu0 0
        %4621 = vmatprep.subr.bf16.mxu0 0
        %4622 = vmatpush1.bf16.msra.mxu0 0
        %4623 = vmatprep.subr.bf16.mxu0 0
        %4624 = vmatpush1.bf16.msra.mxu0 0
        %4625 = vmatprep.subr.bf16.mxu0 0
        %4626 = vmatpush1.bf16.msra.mxu0 0
        %4627 = vmatprep.subr.bf16.mxu0 0
        %4628 = vmatpush1.bf16.msra.mxu0 0
        %4629 = vmatprep.mubr.bf16.mxu0 0
        %4630 = vmatmul.mubr.bf16.gmra.mrb[0].mxu0 %v4526
        %v4631 = vpop.f32.mrb[0].mxu0
        %v4632 = vadd.f32 %v4511, %v4631
        %v4633 = vpop.f32.mrb[0].mxu0
        %v4634 = vpop.f32.mrb[0].mxu0
        %v4635 = vadd.f32 %v4511, %v4634
        %v4636 = vpop.f32.mrb[0].mxu0
        %4637 = vmatprep.mubr.bf16.mxu0 0
        %4638 = vmatmul.mubr.bf16.gmra.mrb[0].mxu0 %v4529
        %v4639 = vpop.f32.mrb[0].mxu0
        %v4640 = vadd.f32 %v4511, %v4639
        %v4641 = vpop.f32.mrb[0].mxu0
        %v4642 = vpop.f32.mrb[0].mxu0
        %v4643 = vadd.f32 %v4511, %v4642
        %v4644 = vpop.f32.mrb[0].mxu0
        %4645 = vmatprep.mubr.bf16.mxu0 0
        %4646 = vmatmul.mubr.bf16.gmra.mrb[0].mxu0 %v4532
        %v4647 = vpop.f32.mrb[0].mxu0
        %v4648 = vadd.f32 %v4511, %v4647
        %v4649 = vpop.f32.mrb[0].mxu0
        %v4650 = vpop.f32.mrb[0].mxu0
        %v4651 = vadd.f32 %v4511, %v4650
        %v4652 = vpop.f32.mrb[0].mxu0
        %4653 = vmatprep.mubr.bf16.mxu0 0
        %4654 = vmatmul.mubr.bf16.gmra.mrb[0].mxu0 %v4535
        %v4655 = vpop.f32.mrb[0].mxu0
        %v4656 = vadd.f32 %v4511, %v4655
        %v4657 = vpop.f32.mrb[0].mxu0
        %v4658 = vpop.f32.mrb[0].mxu0
        %v4659 = vadd.f32 %v4511, %v4658
        %v4660 = vpop.f32.mrb[0].mxu0
        %4661 = vmatprep.mubr.bf16.mxu0 0
        %4662 = vmatmul.mubr.bf16.gmra.mrb[0].mxu0 %v4538
        %v4663 = vpop.f32.mrb[0].mxu0
        %v4664 = vadd.f32 %v4511, %v4663
        %v4665 = vpop.f32.mrb[0].mxu0
        %v4666 = vpop.f32.mrb[0].mxu0
        %v4667 = vadd.f32 %v4511, %v4666
        %v4668 = vpop.f32.mrb[0].mxu0
        %4669 = vmatprep.mubr.bf16.mxu0 0
        %4670 = vmatmul.mubr.bf16.gmra.mrb[0].mxu0 %v4541
        %v4671 = vpop.f32.mrb[0].mxu0
        %v4672 = vadd.f32 %v4511, %v4671
        %v4673 = vpop.f32.mrb[0].mxu0
        %v4674 = vpop.f32.mrb[0].mxu0
        %v4675 = vadd.f32 %v4511, %v4674
        %v4676 = vpop.f32.mrb[0].mxu0
        %4677 = vmatprep.mubr.bf16.mxu0 0
        %4678 = vmatmul.mubr.bf16.gmra.mrb[0].mxu0 %v4544
        %v4679 = vpop.f32.mrb[0].mxu0
        %v4680 = vadd.f32 %v4511, %v4679
        %v4681 = vpop.f32.mrb[0].mxu0
        %v4682 = vpop.f32.mrb[0].mxu0
        %v4683 = vadd.f32 %v4511, %v4682
        %v4684 = vpop.f32.mrb[0].mxu0
        %4685 = vmatprep.mubr.bf16.mxu0 0
        %4686 = vmatmul.mubr.bf16.gmra.mrb[0].mxu0 %v4547
        %v4687 = vpop.f32.mrb[0].mxu0
        %v4688 = vadd.f32 %v4511, %v4687
        %v4689 = vpop.f32.mrb[0].mxu0
        %v4690 = vpop.f32.mrb[0].mxu0
        %v4691 = vadd.f32 %v4511, %v4690
        %v4692 = vpop.f32.mrb[0].mxu0
        %4693 = vmatprep.mubr.bf16.mxu0 0
        %4694 = vmatmul.mubr.bf16.gmra.mrb[0].mxu0 %v4550
        %v4695 = vpop.f32.mrb[0].mxu0
        %v4696 = vadd.f32 %v4511, %v4695
        %v4697 = vpop.f32.mrb[0].mxu0
        %v4698 = vpop.f32.mrb[0].mxu0
        %v4699 = vadd.f32 %v4511, %v4698
        %v4700 = vpop.f32.mrb[0].mxu0
        %4701 = vmatprep.mubr.bf16.mxu0 0
        %4702 = vmatmul.mubr.bf16.gmra.mrb[0].mxu0 %v4553
        %v4703 = vpop.f32.mrb[0].mxu0
        %v4704 = vadd.f32 %v4511, %v4703
        %v4705 = vpop.f32.mrb[0].mxu0
        %v4706 = vpop.f32.mrb[0].mxu0
        %v4707 = vadd.f32 %v4511, %v4706
        %v4708 = vpop.f32.mrb[0].mxu0
        %4709 = vmatprep.mubr.bf16.mxu0 0
        %4710 = vmatmul.mubr.bf16.gmra.mrb[0].mxu0 %v4556
        %v4711 = vpop.f32.mrb[0].mxu0
        %v4712 = vadd.f32 %v4511, %v4711
        %v4713 = vpop.f32.mrb[0].mxu0
        %v4714 = vpop.f32.mrb[0].mxu0
        %v4715 = vadd.f32 %v4511, %v4714
        %v4716 = vpop.f32.mrb[0].mxu0
        %4717 = vmatprep.mubr.bf16.mxu0 0
        %4718 = vmatmul.mubr.bf16.gmra.mrb[0].mxu0 %v4559
        %v4719 = vpop.f32.mrb[0].mxu0
        %v4720 = vadd.f32 %v4511, %v4719
        %v4721 = vpop.f32.mrb[0].mxu0
        %v4722 = vpop.f32.mrb[0].mxu0
        %v4723 = vadd.f32 %v4511, %v4722
        %v4724 = vpop.f32.mrb[0].mxu0
        %4725 = vmatprep.mubr.bf16.mxu0 0
        %4726 = vmatmul.mubr.bf16.gmra.mrb[0].mxu0 %v4562
        %v4727 = vpop.f32.mrb[0].mxu0
        %v4728 = vadd.f32 %v4511, %v4727
        %v4729 = vpop.f32.mrb[0].mxu0
        %v4730 = vpop.f32.mrb[0].mxu0
        %v4731 = vadd.f32 %v4511, %v4730
        %v4732 = vpop.f32.mrb[0].mxu0
        %4733 = vmatprep.mubr.bf16.mxu0 0
        %4734 = vmatmul.mubr.bf16.gmra.mrb[0].mxu0 %v4565
        %v4735 = vpop.f32.mrb[0].mxu0
        %v4736 = vadd.f32 %v4511, %v4735
        %v4737 = vpop.f32.mrb[0].mxu0
        %v4738 = vpop.f32.mrb[0].mxu0
        %v4739 = vadd.f32 %v4511, %v4738
        %v4740 = vpop.f32.mrb[0].mxu0
        %4741 = vmatprep.mubr.bf16.mxu0 0
        %4742 = vmatmul.mubr.bf16.gmra.mrb[0].mxu0 %v4568
        %v4743 = vpop.f32.mrb[0].mxu0
        %v4744 = vadd.f32 %v4511, %v4743
        %v4745 = vpop.f32.mrb[0].mxu0
        %v4746 = vpop.f32.mrb[0].mxu0
        %v4747 = vadd.f32 %v4511, %v4746
        %v4748 = vpop.f32.mrb[0].mxu0
        %4749 = vmatprep.mubr.bf16.mxu0 0
        %4750 = vmatmul.mubr.bf16.gmra.mrb[0].mxu0 %v4571
        %v4751 = vpop.f32.mrb[0].mxu0
        %v4752 = vadd.f32 %v4511, %v4751
        %v4753 = vpop.f32.mrb[0].mxu0
        %v4754 = vpop.f32.mrb[0].mxu0
        %v4755 = vadd.f32 %v4511, %v4754
        %v4756 = vpop.f32.mrb[0].mxu0
        %4757 = vmatprep.mubr.bf16.mxu0 0
        %4758 = vmatmul.mubr.bf16.gmra.mrb[0].mxu0 %v4574
        %v4759 = vpop.f32.mrb[0].mxu0
        %v4760 = vadd.f32 %v4511, %v4759
        %v4761 = vpop.f32.mrb[0].mxu0
        %v4762 = vpop.f32.mrb[0].mxu0
        %v4763 = vadd.f32 %v4511, %v4762
        %v4764 = vpop.f32.mrb[0].mxu0
        %4765 = vmatprep.mubr.bf16.mxu0 0
        %4766 = vmatmul.mubr.bf16.gmra.mrb[0].mxu0 %v4577
        %v4767 = vpop.f32.mrb[0].mxu0
        %v4768 = vadd.f32 %v4511, %v4767
        %v4769 = vpop.f32.mrb[0].mxu0
        %v4770 = vpop.f32.mrb[0].mxu0
        %v4771 = vadd.f32 %v4511, %v4770
        %v4772 = vpop.f32.mrb[0].mxu0
        %4773 = vmatprep.mubr.bf16.mxu0 0
        %4774 = vmatmul.mubr.bf16.gmra.mrb[0].mxu0 %v4580
        %v4775 = vpop.f32.mrb[0].mxu0
        %v4776 = vadd.f32 %v4511, %v4775
        %v4777 = vpop.f32.mrb[0].mxu0
        %v4778 = vpop.f32.mrb[0].mxu0
        %v4779 = vadd.f32 %v4511, %v4778
        %v4780 = vpop.f32.mrb[0].mxu0
        %4781 = vmatprep.mubr.bf16.mxu0 0
        %4782 = vmatmul.mubr.bf16.gmra.mrb[0].mxu0 %v4583
        %v4783 = vpop.f32.mrb[0].mxu0
        %v4784 = vadd.f32 %v4511, %v4783
        %v4785 = vpop.f32.mrb[0].mxu0
        %v4786 = vpop.f32.mrb[0].mxu0
        %v4787 = vadd.f32 %v4511, %v4786
        %v4788 = vpop.f32.mrb[0].mxu0
        %4789 = vmatprep.mubr.bf16.mxu0 0
        %4790 = vmatmul.mubr.bf16.gmra.mrb[0].mxu0 %v4586
        %v4791 = vpop.f32.mrb[0].mxu0
        %v4792 = vadd.f32 %v4511, %v4791
        %v4793 = vpop.f32.mrb[0].mxu0
        %v4794 = vpop.f32.mrb[0].mxu0
        %v4795 = vadd.f32 %v4511, %v4794
        %v4796 = vpop.f32.mrb[0].mxu0
        %4797 = vmatprep.mubr.bf16.mxu0 0
        %4798 = vmatmul.mubr.bf16.gmra.mrb[0].mxu0 %v4589
        %v4799 = vpop.f32.mrb[0].mxu0
        %v4800 = vadd.f32 %v4511, %v4799
        %v4801 = vpop.f32.mrb[0].mxu0
        %v4802 = vpop.f32.mrb[0].mxu0
        %v4803 = vadd.f32 %v4511, %v4802
        %v4804 = vpop.f32.mrb[0].mxu0
        %4805 = vmatprep.mubr.bf16.mxu0 0
        %4806 = vmatmul.mubr.bf16.gmra.mrb[0].mxu0 %v4592
        %v4807 = vpop.f32.mrb[0].mxu0
        %v4808 = vadd.f32 %v4511, %v4807
        %v4809 = vpop.f32.mrb[0].mxu0
        %v4810 = vpop.f32.mrb[0].mxu0
        %v4811 = vadd.f32 %v4511, %v4810
        %v4812 = vpop.f32.mrb[0].mxu0
        %4813 = vmatprep.mubr.bf16.mxu0 0
        %4814 = vmatmul.mubr.bf16.gmra.mrb[0].mxu0 %v4595
        %v4815 = vpop.f32.mrb[0].mxu0
        %v4816 = vadd.f32 %v4511, %v4815
        %v4817 = vpop.f32.mrb[0].mxu0
        %v4818 = vpop.f32.mrb[0].mxu0
        %v4819 = vadd.f32 %v4511, %v4818
        %v4820 = vpop.f32.mrb[0].mxu0
        %4821 = vdwg.mxu0
        %v4822 = vmax.f32 %v4632, 0.0
        %v4823 = vmax.f32 %v4635, 0.0
        %v4824 = vmax.f32 %v4640, 0.0
        %v4825 = vmax.f32 %v4643, 0.0
        %v4826 = vmax.f32 %v4648, 0.0
        %v4827 = vmax.f32 %v4651, 0.0
        %v4828 = vmax.f32 %v4656, 0.0
        %v4829 = vmax.f32 %v4659, 0.0
        %v4830 = vmax.f32 %v4664, 0.0
        %v4831 = vmax.f32 %v4667, 0.0
        %v4832 = vmax.f32 %v4672, 0.0
        %v4833 = vmax.f32 %v4675, 0.0
        %v4834 = vmax.f32 %v4680, 0.0
        %v4835 = vmax.f32 %v4683, 0.0
        %v4836 = vmax.f32 %v4688, 0.0
        %v4837 = vmax.f32 %v4691, 0.0
        %v4838 = vmax.f32 %v4696, 0.0
        %v4839 = vmax.f32 %v4699, 0.0
        %v4840 = vmax.f32 %v4704, 0.0
        %v4841 = vmax.f32 %v4707, 0.0
        %v4842 = vmax.f32 %v4712, 0.0
        %v4843 = vmax.f32 %v4715, 0.0
        %v4844 = vmax.f32 %v4720, 0.0
        %v4845 = vmax.f32 %v4723, 0.0
        %v4846 = vmax.f32 %v4728, 0.0
        %v4847 = vmax.f32 %v4731, 0.0
        %v4848 = vmax.f32 %v4736, 0.0
        %v4849 = vmax.f32 %v4739, 0.0
        %v4850 = vmax.f32 %v4744, 0.0
        %v4851 = vmax.f32 %v4747, 0.0
        %v4852 = vmax.f32 %v4752, 0.0
        %v4853 = vmax.f32 %v4755, 0.0
        %v4854 = vmax.f32 %v4760, 0.0
        %v4855 = vmax.f32 %v4763, 0.0
        %v4856 = vmax.f32 %v4768, 0.0
        %v4857 = vmax.f32 %v4771, 0.0
        %v4858 = vmax.f32 %v4776, 0.0
        %v4859 = vmax.f32 %v4779, 0.0
        %v4860 = vmax.f32 %v4784, 0.0
        %v4861 = vmax.f32 %v4787, 0.0
        %v4862 = vmax.f32 %v4792, 0.0
        %v4863 = vmax.f32 %v4795, 0.0
        %v4864 = vmax.f32 %v4800, 0.0
        %v4865 = vmax.f32 %v4803, 0.0
        %v4866 = vmax.f32 %v4808, 0.0
        %v4867 = vmax.f32 %v4811, 0.0
        %v4868 = vmax.f32 %v4816, 0.0
        %v4869 = vmax.f32 %v4819, 0.0
        %v4870 = vpack.c.bf16 %v4823, %v4822
        %v4871 = vpack.c.bf16 %v4825, %v4824
        %v4872 = vpack.c.bf16 %v4827, %v4826
        %v4873 = vpack.c.bf16 %v4829, %v4828
        %v4874 = vpack.c.bf16 %v4831, %v4830
        %v4875 = vpack.c.bf16 %v4833, %v4832
        %v4876 = vpack.c.bf16 %v4835, %v4834
        %v4877 = vpack.c.bf16 %v4837, %v4836
        %v4878 = vpack.c.bf16 %v4839, %v4838
        %v4879 = vpack.c.bf16 %v4841, %v4840
        %v4880 = vpack.c.bf16 %v4843, %v4842
        %v4881 = vpack.c.bf16 %v4845, %v4844
        %v4882 = vpack.c.bf16 %v4847, %v4846
        %v4883 = vpack.c.bf16 %v4849, %v4848
        %v4884 = vpack.c.bf16 %v4851, %v4850
        %v4885 = vpack.c.bf16 %v4853, %v4852
        %v4886 = vpack.c.bf16 %v4855, %v4854
        %v4887 = vpack.c.bf16 %v4857, %v4856
        %v4888 = vpack.c.bf16 %v4859, %v4858
        %v4889 = vpack.c.bf16 %v4861, %v4860
        %v4890 = vpack.c.bf16 %v4863, %v4862
        %v4891 = vpack.c.bf16 %v4865, %v4864
        %v4892 = vpack.c.bf16 %v4867, %v4866
        %v4893 = vpack.c.bf16 %v4869, %v4868
        %v4894 = vld [vmem:[%s7] sm:$0xf]
        %v4895 = vld [vmem:[%s7 + $0x4] sm:$0xf]
        %v4896 = vld [vmem:[%s7 + $0x8] sm:$0xf]
        %v4897 = vld [vmem:[%s7 + $0xc] sm:$0xf]
        %v4898 = vld [vmem:[%s8] sm:$0x1]
        %v4900 = vlaneseq
        %v4901 = vshrl.u32 %v4900, 7
        %v4902 = vsub.s32 0, %v4901
        %v4903 = vrot.slane %v4898, %v4902
        %v4909 = vunpack.c.l.b16 %v4894
        %v4910 = vunpack.c.l.b16 %v4895
        %v4911 = vunpack.c.l.b16 %v4896
        %v4912 = vunpack.c.l.b16 %v4897
        %v4913 = vpack.c.b16 %v4910, %v4909
        %v4914 = vpack.c.b16 %v4912, %v4911
        %v4918 = vsel %vm4377, %v4870, 0
        %v4921 = vsel %vm4377, %v4871, 0
        %v4924 = vsel %vm4377, %v4872, 0
        %v4927 = vsel %vm4377, %v4873, 0
        %v4930 = vsel %vm4377, %v4874, 0
        %v4933 = vsel %vm4377, %v4875, 0
        %v4936 = vsel %vm4377, %v4876, 0
        %v4939 = vsel %vm4377, %v4877, 0
        %v4942 = vsel %vm4377, %v4878, 0
        %v4945 = vsel %vm4377, %v4879, 0
        %v4948 = vsel %vm4377, %v4880, 0
        %v4951 = vsel %vm4377, %v4881, 0
        %v4954 = vsel %vm4377, %v4882, 0
        %v4957 = vsel %vm4377, %v4883, 0
        %v4960 = vsel %vm4377, %v4884, 0
        %v4963 = vsel %vm4377, %v4885, 0
        %v4966 = vsel %vm4377, %v4886, 0
        %v4969 = vsel %vm4377, %v4887, 0
        %v4972 = vsel %vm4377, %v4888, 0
        %v4975 = vsel %vm4377, %v4889, 0
        %v4978 = vsel %vm4377, %v4890, 0
        %v4981 = vsel %vm4377, %v4891, 0
        %v4984 = vsel %vm4377, %v4892, 0
        %v4987 = vsel %vm4377, %v4893, 0
        %4989 = vmatprep.subr.bf16.mxu0 0
        %4990 = vmatpush1.bf16.msra.mxu0 %v4913
        %4991 = vmatprep.subr.bf16.mxu0 0
        %4992 = vmatpush1.bf16.msra.mxu0 %v4914
        %4993 = vmatprep.subr.bf16.mxu0 0
        %4994 = vmatpush1.bf16.msra.mxu0 0
        %4995 = vmatprep.subr.bf16.mxu0 0
        %4996 = vmatpush1.bf16.msra.mxu0 0
        %4997 = vmatprep.subr.bf16.mxu0 0
        %4998 = vmatpush1.bf16.msra.mxu0 0
        %4999 = vmatprep.subr.bf16.mxu0 0
        %5000 = vmatpush1.bf16.msra.mxu0 0
        %5001 = vmatprep.subr.bf16.mxu0 0
        %5002 = vmatpush1.bf16.msra.mxu0 0
        %5003 = vmatprep.subr.bf16.mxu0 0
        %5004 = vmatpush1.bf16.msra.mxu0 0
        %5005 = vmatprep.subr.bf16.mxu0 0
        %5006 = vmatpush1.bf16.msra.mxu0 0
        %5007 = vmatprep.subr.bf16.mxu0 0
        %5008 = vmatpush1.bf16.msra.mxu0 0
        %5009 = vmatprep.subr.bf16.mxu0 0
        %5010 = vmatpush1.bf16.msra.mxu0 0
        %5011 = vmatprep.subr.bf16.mxu0 0
        %5012 = vmatpush1.bf16.msra.mxu0 0
        %5013 = vmatprep.subr.bf16.mxu0 0
        %5014 = vmatpush1.bf16.msra.mxu0 0
        %5015 = vmatprep.subr.bf16.mxu0 0
        %5016 = vmatpush1.bf16.msra.mxu0 0
        %5017 = vmatprep.subr.bf16.mxu0 0
        %5018 = vmatpush1.bf16.msra.mxu0 0
        %5019 = vmatprep.subr.bf16.mxu0 0
        %5020 = vmatpush1.bf16.msra.mxu0 0
        %5021 = vmatprep.mubr.bf16.mxu0 0
        %5022 = vmatmul.mubr.bf16.gmra.mrb[0].mxu0 %v4918
        %v5023 = vpop.f32.mrb[0].mxu0
        %v5024 = vadd.f32 %v4903, %v5023
        %v5025 = vpop.f32.mrb[0].mxu0
        %v5026 = vpop.f32.mrb[0].mxu0
        %v5027 = vadd.f32 %v4903, %v5026
        %v5028 = vpop.f32.mrb[0].mxu0
        %5029 = vmatprep.mubr.bf16.mxu0 0
        %5030 = vmatmul.mubr.bf16.gmra.mrb[0].mxu0 %v4921
        %v5031 = vpop.f32.mrb[0].mxu0
        %v5032 = vadd.f32 %v4903, %v5031
        %v5033 = vpop.f32.mrb[0].mxu0
        %v5034 = vpop.f32.mrb[0].mxu0
        %v5035 = vadd.f32 %v4903, %v5034
        %v5036 = vpop.f32.mrb[0].mxu0
        %5037 = vmatprep.mubr.bf16.mxu0 0
        %5038 = vmatmul.mubr.bf16.gmra.mrb[0].mxu0 %v4924
        %v5039 = vpop.f32.mrb[0].mxu0
        %v5040 = vadd.f32 %v4903, %v5039
        %v5041 = vpop.f32.mrb[0].mxu0
        %v5042 = vpop.f32.mrb[0].mxu0
        %v5043 = vadd.f32 %v4903, %v5042
        %v5044 = vpop.f32.mrb[0].mxu0
        %5045 = vmatprep.mubr.bf16.mxu0 0
        %5046 = vmatmul.mubr.bf16.gmra.mrb[0].mxu0 %v4927
        %v5047 = vpop.f32.mrb[0].mxu0
        %v5048 = vadd.f32 %v4903, %v5047
        %v5049 = vpop.f32.mrb[0].mxu0
        %v5050 = vpop.f32.mrb[0].mxu0
        %v5051 = vadd.f32 %v4903, %v5050
        %v5052 = vpop.f32.mrb[0].mxu0
        %5053 = vmatprep.mubr.bf16.mxu0 0
        %5054 = vmatmul.mubr.bf16.gmra.mrb[0].mxu0 %v4930
        %v5055 = vpop.f32.mrb[0].mxu0
        %v5056 = vadd.f32 %v4903, %v5055
        %v5057 = vpop.f32.mrb[0].mxu0
        %v5058 = vpop.f32.mrb[0].mxu0
        %v5059 = vadd.f32 %v4903, %v5058
        %v5060 = vpop.f32.mrb[0].mxu0
        %5061 = vmatprep.mubr.bf16.mxu0 0
        %5062 = vmatmul.mubr.bf16.gmra.mrb[0].mxu0 %v4933
        %v5063 = vpop.f32.mrb[0].mxu0
        %v5064 = vadd.f32 %v4903, %v5063
        %v5065 = vpop.f32.mrb[0].mxu0
        %v5066 = vpop.f32.mrb[0].mxu0
        %v5067 = vadd.f32 %v4903, %v5066
        %v5068 = vpop.f32.mrb[0].mxu0
        %5069 = vmatprep.mubr.bf16.mxu0 0
        %5070 = vmatmul.mubr.bf16.gmra.mrb[0].mxu0 %v4936
        %v5071 = vpop.f32.mrb[0].mxu0
        %v5072 = vadd.f32 %v4903, %v5071
        %v5073 = vpop.f32.mrb[0].mxu0
        %v5074 = vpop.f32.mrb[0].mxu0
        %v5075 = vadd.f32 %v4903, %v5074
        %v5076 = vpop.f32.mrb[0].mxu0
        %5077 = vmatprep.mubr.bf16.mxu0 0
        %5078 = vmatmul.mubr.bf16.gmra.mrb[0].mxu0 %v4939
        %v5079 = vpop.f32.mrb[0].mxu0
        %v5080 = vadd.f32 %v4903, %v5079
        %v5081 = vpop.f32.mrb[0].mxu0
        %v5082 = vpop.f32.mrb[0].mxu0
        %v5083 = vadd.f32 %v4903, %v5082
        %v5084 = vpop.f32.mrb[0].mxu0
        %5085 = vmatprep.mubr.bf16.mxu0 0
        %5086 = vmatmul.mubr.bf16.gmra.mrb[0].mxu0 %v4942
        %v5087 = vpop.f32.mrb[0].mxu0
        %v5088 = vadd.f32 %v4903, %v5087
        %v5089 = vpop.f32.mrb[0].mxu0
        %v5090 = vpop.f32.mrb[0].mxu0
        %v5091 = vadd.f32 %v4903, %v5090
        %v5092 = vpop.f32.mrb[0].mxu0
        %5093 = vmatprep.mubr.bf16.mxu0 0
        %5094 = vmatmul.mubr.bf16.gmra.mrb[0].mxu0 %v4945
        %v5095 = vpop.f32.mrb[0].mxu0
        %v5096 = vadd.f32 %v4903, %v5095
        %v5097 = vpop.f32.mrb[0].mxu0
        %v5098 = vpop.f32.mrb[0].mxu0
        %v5099 = vadd.f32 %v4903, %v5098
        %v5100 = vpop.f32.mrb[0].mxu0
        %5101 = vmatprep.mubr.bf16.mxu0 0
        %5102 = vmatmul.mubr.bf16.gmra.mrb[0].mxu0 %v4948
        %v5103 = vpop.f32.mrb[0].mxu0
        %v5104 = vadd.f32 %v4903, %v5103
        %v5105 = vpop.f32.mrb[0].mxu0
        %v5106 = vpop.f32.mrb[0].mxu0
        %v5107 = vadd.f32 %v4903, %v5106
        %v5108 = vpop.f32.mrb[0].mxu0
        %5109 = vmatprep.mubr.bf16.mxu0 0
        %5110 = vmatmul.mubr.bf16.gmra.mrb[0].mxu0 %v4951
        %v5111 = vpop.f32.mrb[0].mxu0
        %v5112 = vadd.f32 %v4903, %v5111
        %v5113 = vpop.f32.mrb[0].mxu0
        %v5114 = vpop.f32.mrb[0].mxu0
        %v5115 = vadd.f32 %v4903, %v5114
        %v5116 = vpop.f32.mrb[0].mxu0
        %5117 = vmatprep.mubr.bf16.mxu0 0
        %5118 = vmatmul.mubr.bf16.gmra.mrb[0].mxu0 %v4954
        %v5119 = vpop.f32.mrb[0].mxu0
        %v5120 = vadd.f32 %v4903, %v5119
        %v5121 = vpop.f32.mrb[0].mxu0
        %v5122 = vpop.f32.mrb[0].mxu0
        %v5123 = vadd.f32 %v4903, %v5122
        %v5124 = vpop.f32.mrb[0].mxu0
        %5125 = vmatprep.mubr.bf16.mxu0 0
        %5126 = vmatmul.mubr.bf16.gmra.mrb[0].mxu0 %v4957
        %v5127 = vpop.f32.mrb[0].mxu0
        %v5128 = vadd.f32 %v4903, %v5127
        %v5129 = vpop.f32.mrb[0].mxu0
        %v5130 = vpop.f32.mrb[0].mxu0
        %v5131 = vadd.f32 %v4903, %v5130
        %v5132 = vpop.f32.mrb[0].mxu0
        %5133 = vmatprep.mubr.bf16.mxu0 0
        %5134 = vmatmul.mubr.bf16.gmra.mrb[0].mxu0 %v4960
        %v5135 = vpop.f32.mrb[0].mxu0
        %v5136 = vadd.f32 %v4903, %v5135
        %v5137 = vpop.f32.mrb[0].mxu0
        %v5138 = vpop.f32.mrb[0].mxu0
        %v5139 = vadd.f32 %v4903, %v5138
        %v5140 = vpop.f32.mrb[0].mxu0
        %5141 = vmatprep.mubr.bf16.mxu0 0
        %5142 = vmatmul.mubr.bf16.gmra.mrb[0].mxu0 %v4963
        %v5143 = vpop.f32.mrb[0].mxu0
        %v5144 = vadd.f32 %v4903, %v5143
        %v5145 = vpop.f32.mrb[0].mxu0
        %v5146 = vpop.f32.mrb[0].mxu0
        %v5147 = vadd.f32 %v4903, %v5146
        %v5148 = vpop.f32.mrb[0].mxu0
        %5149 = vmatprep.mubr.bf16.mxu0 0
        %5150 = vmatmul.mubr.bf16.gmra.mrb[0].mxu0 %v4966
        %v5151 = vpop.f32.mrb[0].mxu0
        %v5152 = vadd.f32 %v4903, %v5151
        %v5153 = vpop.f32.mrb[0].mxu0
        %v5154 = vpop.f32.mrb[0].mxu0
        %v5155 = vadd.f32 %v4903, %v5154
        %v5156 = vpop.f32.mrb[0].mxu0
        %5157 = vmatprep.mubr.bf16.mxu0 0
        %5158 = vmatmul.mubr.bf16.gmra.mrb[0].mxu0 %v4969
        %v5159 = vpop.f32.mrb[0].mxu0
        %v5160 = vadd.f32 %v4903, %v5159
        %v5161 = vpop.f32.mrb[0].mxu0
        %v5162 = vpop.f32.mrb[0].mxu0
        %v5163 = vadd.f32 %v4903, %v5162
        %v5164 = vpop.f32.mrb[0].mxu0
        %5165 = vmatprep.mubr.bf16.mxu0 0
        %5166 = vmatmul.mubr.bf16.gmra.mrb[0].mxu0 %v4972
        %v5167 = vpop.f32.mrb[0].mxu0
        %v5168 = vadd.f32 %v4903, %v5167
        %v5169 = vpop.f32.mrb[0].mxu0
        %v5170 = vpop.f32.mrb[0].mxu0
        %v5171 = vadd.f32 %v4903, %v5170
        %v5172 = vpop.f32.mrb[0].mxu0
        %5173 = vmatprep.mubr.bf16.mxu0 0
        %5174 = vmatmul.mubr.bf16.gmra.mrb[0].mxu0 %v4975
        %v5175 = vpop.f32.mrb[0].mxu0
        %v5176 = vadd.f32 %v4903, %v5175
        %v5177 = vpop.f32.mrb[0].mxu0
        %v5178 = vpop.f32.mrb[0].mxu0
        %v5179 = vadd.f32 %v4903, %v5178
        %v5180 = vpop.f32.mrb[0].mxu0
        %5181 = vmatprep.mubr.bf16.mxu0 0
        %5182 = vmatmul.mubr.bf16.gmra.mrb[0].mxu0 %v4978
        %v5183 = vpop.f32.mrb[0].mxu0
        %v5184 = vadd.f32 %v4903, %v5183
        %v5185 = vpop.f32.mrb[0].mxu0
        %v5186 = vpop.f32.mrb[0].mxu0
        %v5187 = vadd.f32 %v4903, %v5186
        %v5188 = vpop.f32.mrb[0].mxu0
        %5189 = vmatprep.mubr.bf16.mxu0 0
        %5190 = vmatmul.mubr.bf16.gmra.mrb[0].mxu0 %v4981
        %v5191 = vpop.f32.mrb[0].mxu0
        %v5192 = vadd.f32 %v4903, %v5191
        %v5193 = vpop.f32.mrb[0].mxu0
        %v5194 = vpop.f32.mrb[0].mxu0
        %v5195 = vadd.f32 %v4903, %v5194
        %v5196 = vpop.f32.mrb[0].mxu0
        %5197 = vmatprep.mubr.bf16.mxu0 0
        %5198 = vmatmul.mubr.bf16.gmra.mrb[0].mxu0 %v4984
        %v5199 = vpop.f32.mrb[0].mxu0
        %v5200 = vadd.f32 %v4903, %v5199
        %v5201 = vpop.f32.mrb[0].mxu0
        %v5202 = vpop.f32.mrb[0].mxu0
        %v5203 = vadd.f32 %v4903, %v5202
        %v5204 = vpop.f32.mrb[0].mxu0
        %5205 = vmatprep.mubr.bf16.mxu0 0
        %5206 = vmatmul.mubr.bf16.gmra.mrb[0].mxu0 %v4987
        %v5207 = vpop.f32.mrb[0].mxu0
        %v5208 = vadd.f32 %v4903, %v5207
        %v5209 = vpop.f32.mrb[0].mxu0
        %v5210 = vpop.f32.mrb[0].mxu0
        %v5211 = vadd.f32 %v4903, %v5210
        %v5212 = vpop.f32.mrb[0].mxu0
        %5213 = vdwg.mxu0
        %5214 = vst [vmem:[%s9] sm:$0xff] %v5024
        %5215 = vst [vmem:[%s9 + $0x8] sm:$0xff] %v5027
        %5216 = vst [vmem:[%s9 + $0x10] sm:$0xff] %v5032
        %5217 = vst [vmem:[%s9 + $0x18] sm:$0xff] %v5035
        %5218 = vst [vmem:[%s9 + $0x20] sm:$0xff] %v5040
        %5219 = vst [vmem:[%s9 + $0x28] sm:$0xff] %v5043
        %5220 = vst [vmem:[%s9 + $0x30] sm:$0xff] %v5048
        %5221 = vst [vmem:[%s9 + $0x38] sm:$0xff] %v5051
        %5222 = vst [vmem:[%s9 + $0x40] sm:$0xff] %v5056
        %5223 = vst [vmem:[%s9 + $0x48] sm:$0xff] %v5059
        %5224 = vst [vmem:[%s9 + $0x50] sm:$0xff] %v5064
        %5225 = vst [vmem:[%s9 + $0x58] sm:$0xff] %v5067
        %5226 = vst [vmem:[%s9 + $0x60] sm:$0xff] %v5072
        %5227 = vst [vmem:[%s9 + $0x68] sm:$0xff] %v5075
        %5228 = vst [vmem:[%s9 + $0x70] sm:$0xff] %v5080
        %5229 = vst [vmem:[%s9 + $0x78] sm:$0xff] %v5083
        %5230 = vst [vmem:[%s9 + $0x80] sm:$0xff] %v5088
        %5231 = vst [vmem:[%s9 + $0x88] sm:$0xff] %v5091
        %5232 = vst [vmem:[%s9 + $0x90] sm:$0xff] %v5096
        %5233 = vst [vmem:[%s9 + $0x98] sm:$0xff] %v5099
        %5234 = vst [vmem:[%s9 + $0xa0] sm:$0xff] %v5104
        %5235 = vst [vmem:[%s9 + $0xa8] sm:$0xff] %v5107
        %5236 = vst [vmem:[%s9 + $0xb0] sm:$0xff] %v5112
        %5237 = vst [vmem:[%s9 + $0xb8] sm:$0xff] %v5115
        %5238 = vst [vmem:[%s9 + $0xc0] sm:$0xff] %v5120
        %5239 = vst [vmem:[%s9 + $0xc8] sm:$0xff] %v5123
        %5240 = vst [vmem:[%s9 + $0xd0] sm:$0xff] %v5128
        %5241 = vst [vmem:[%s9 + $0xd8] sm:$0xff] %v5131
        %5242 = vst [vmem:[%s9 + $0xe0] sm:$0xff] %v5136
        %5243 = vst [vmem:[%s9 + $0xe8] sm:$0xff] %v5139
        %5244 = vst [vmem:[%s9 + $0xf0] sm:$0xff] %v5144
        %5245 = vst [vmem:[%s9 + $0xf8] sm:$0xff] %v5147
        %5246 = vst [vmem:[%s9 + $0x100] sm:$0xff] %v5152
        %5247 = vst [vmem:[%s9 + $0x108] sm:$0xff] %v5155
        %5248 = vst [vmem:[%s9 + $0x110] sm:$0xff] %v5160
        %5249 = vst [vmem:[%s9 + $0x118] sm:$0xff] %v5163
        %5250 = vst [vmem:[%s9 + $0x120] sm:$0xff] %v5168
        %5251 = vst [vmem:[%s9 + $0x128] sm:$0xff] %v5171
        %5252 = vst [vmem:[%s9 + $0x130] sm:$0xff] %v5176
        %5253 = vst [vmem:[%s9 + $0x138] sm:$0xff] %v5179
        %5254 = vst [vmem:[%s9 + $0x140] sm:$0xff] %v5184
        %5255 = vst [vmem:[%s9 + $0x148] sm:$0xff] %v5187
        %5256 = vst [vmem:[%s9 + $0x150] sm:$0xff] %v5192
        %5257 = vst [vmem:[%s9 + $0x158] sm:$0xff] %v5195
        %5258 = vst [vmem:[%s9 + $0x160] sm:$0xff] %v5200
        %5259 = vst [vmem:[%s9 + $0x168] sm:$0xff] %v5203
        %5260 = vst [vmem:[%s9 + $0x170] sm:$0xff] %v5208
        %5261 = vst [vmem:[%s9 + $0x178] sm:$0xff] %v5211
      $region64: #{gine_conv_forward.1} parent=55 // pred_fallthru
        _
      // Predicated region
      $region65: #{gine_conv_forward.1} parent=55 // pred_check
        %p5262 = pneg %p237
      $region66: #{gine_conv_forward.1} parent=55 // pred_check_branch
        %5264 = sbr.rel (%p5262) target = $region68
      $region67: #{gine_conv_forward.1} parent=55 // pred_region
        _
      $region68: #{gine_conv_forward.1} parent=55 // pred_fallthru
        _
      // Predicated region
      $region69: #{gine_conv_forward.1} parent=55 // pred_check
        %p5265 = pneg %p237
      $region70: #{gine_conv_forward.1} parent=55 // pred_check_branch
        %5267 = sbr.rel (%p5265) target = $region72
      $region71: #{gine_conv_forward.1} parent=55 // pred_region
        _
      $region72: #{gine_conv_forward.1} parent=55 // pred_fallthru
        _
    $region56: #{gine_conv_forward.1} parent=5 // pred_fallthru
      _
    %p5268 = scmp.le.s32.totalorder 2, %s15
    // Predicated region
    $region73: #{gine_conv_forward.1} parent=5 // pred_check
      %p5269 = pneg %p5268
    $region74: #{gine_conv_forward.1} parent=5 // pred_check_branch
      %5271 = sbr.rel (%p5269) target = $region76
    $region75: #{gine_conv_forward.1} parent=5 // pred_region
      %s5272 = ssub.s32 %s15, 2
    $region76: #{gine_conv_forward.1} parent=5 // pred_fallthru
      _
  $region6: #{gine_conv_forward.1} parent=0 // loop_footer
    %s19 = sadd.s32 1, %s15
  $region7: #{gine_conv_forward.1} parent=0 // loop_footer_branch
    %14 = sbr.rel target = $region3
  $region8: #{gine_conv_forward.1} parent=0 // loop_exit
    _

</llo_original>
